<compile_context>
chip_gen: v7x
topology: tpu7x:2x2x1
jax: 0.10.0
libtpu: 0.0.40
codegen_flags: <defaults>
</compile_context>

<pallas_src>
import numpy as np
import jax
import jax.numpy as jnp
from jax.experimental import pallas as pl
from jax.experimental.pallas import tpu as pltpu

# ----------------------------- static config -----------------------------
N_LAYER = 3
DIM = 8
NUM_SCALES = 2
INPUT_DIM = 4
LRELU_SLOPE = 0.2              # activation='lrelu'
KSIZE, STRIDE, PAD = 4, 2, 1   # ConvBlock2D(4, 2, 1), padding_type='zero'


def _conv_out(n):
    return (n + 2 * PAD - KSIZE) // STRIDE + 1


def _pool_out(n):               # AvgPool2d(3, stride=2, padding=1)
    return (n + 2 - 3) // 2 + 1


# ------------------- host-side constant (layout) builders -------------------
def _row_parity_select(h, ho):
    """(2, ho+1, h) 0/1.  E[p] = un-padded row 2p-1, O[p] = un-padded row 2p
    (rows that fall in the zero padding become all-zero rows)."""
    r = np.zeros((2, ho + 1, h), np.float32)
    for p in range(ho + 1):
        if 0 <= 2 * p - 1 < h:
            r[0, p, 2 * p - 1] = 1.0
        if 0 <= 2 * p < h:
            r[1, p, 2 * p] = 1.0
    return r


def _col_placement(w, wo):
    """(KSIZE, wo, w) 0/1.  P[kw, j, col] = 1 iff col == 2j + kw - 1 (valid);
    columns that fall in the zero padding are simply dropped."""
    p = np.zeros((KSIZE, wo, w), np.float32)
    for kw in range(KSIZE):
        for j in range(wo):
            col = 2 * j + kw - 1
            if 0 <= col < w:
                p[kw, j, col] = 1.0
    return p


def _pool_constants(h, w, c):
    """AvgPool2d(3,2,pad=1,count_include_pad=False) as  (PR @ X @ PC) * INV."""
    h2, w2 = _pool_out(h), _pool_out(w)
    pr = np.zeros((h2, h), np.float32)
    cnt_h = np.zeros(h2, np.float32)
    for i in range(h2):
        for dh in range(3):
            r = 2 * i - 1 + dh
            if 0 <= r < h:
                pr[i, r] = 1.0
                cnt_h[i] += 1.0
    pc = np.zeros((w * c, w2 * c), np.float32)
    cnt_w = np.zeros(w2, np.float32)
    for j in range(w2):
        for dw in range(3):
            col = 2 * j - 1 + dw
            if 0 <= col < w:
                cnt_w[j] += 1.0
                pc[col * c:(col + 1) * c, j * c:(j + 1) * c] = np.eye(c, dtype=np.float32)
    inv = np.zeros((h2, w2 * c), np.float32)
    for i in range(h2):
        for j in range(w2):
            inv[i, j * c:(j + 1) * c] = 1.0 / (cnt_h[i] * cnt_w[j])
    return pr, pc, inv


# ----------------------------- fused forward -----------------------------
def multiscale_discriminator_forward(x_nhwc, params):
    """x_nhwc: (N, H, W, INPUT_DIM) f32.  params[s] = [(w_hwio, b)] for the
    N_LAYER conv blocks + the final 1x1 conv.  Returns one NHWC output per
    scale (== torch NCHW outputs transposed to NHWC)."""
    batch, H, W, cin0 = x_nhwc.shape
    assert cin0 == INPUT_DIM

    # ---- static geometry plan ----
    chans = [INPUT_DIM] + [DIM * (2 ** i) for i in range(N_LAYER)]
    scale_hw, ladders = [], []
    h, w = H, W
    for _ in range(NUM_SCALES):
        scale_hw.append((h, w))
        lad = [(h, w)]
        for _ in range(N_LAYER):
            lad.append((_conv_out(lad[-1][0]), _conv_out(lad[-1][1])))
        ladders.append(lad)
        h, w = _pool_out(h), _pool_out(w)

    # ---- fold every stride/pad/layout concern into host-side constants ----
    consts = []          # consumed by the kernel in exactly this order
    for s in range(NUM_SCALES):
        for l in range(N_LAYER):
            (hh, ww), (ho, wo) = ladders[s][l], ladders[s][l + 1]
            assert hh == 2 * ho and ww == 2 * wo, "even spatial sizes expected"
            ci, co = chans[l], chans[l + 1]
            wgt, b = params[s][l]                      # (4,4,ci,co) HWIO, (co,)
            rsel = jnp.asarray(_row_parity_select(hh, ho), jnp.bfloat16)
            place = jnp.asarray(_col_placement(ww, wo), jnp.float32)
            # WL[kh][col*ci+ch, j*co+cc] = W[kh, kw, ch, cc] with col = 2j+kw-1
            wl = jnp.einsum("qjv,kqcd->kvcjd", place, jnp.asarray(wgt, jnp.float32))
            wl = wl.reshape(KSIZE, ww * ci, wo * co).astype(jnp.bfloat16)
            bias = jnp.tile(jnp.asarray(b, jnp.float32).reshape(1, co), (1, wo))
            consts += [rsel, wl, bias]
        # final nn.Conv2d(c3, 1, 1, 1, 0)  ->  block-diagonal (w3*c3, w3) matmul
        h3, w3 = ladders[s][N_LAYER]
        c3 = chans[N_LAYER]
        wgt, b = params[s][N_LAYER]                    # (1,1,c3,1), (1,)
        wfvec = jnp.asarray(wgt, jnp.float32).reshape(c3)
        wf = jnp.einsum("c,jk->jck", wfvec, jnp.eye(w3, dtype=jnp.float32))
        wf = wf.reshape(w3 * c3, w3).astype(jnp.bfloat16)
        bf = jnp.tile(jnp.asarray(b, jnp.float32).reshape(1, 1), (1, w3))
        consts += [wf, bf]
        if s + 1 < NUM_SCALES:                         # AvgPool feeding next scale
            hh, ww = scale_hw[s]
            pr, pc, inv = _pool_constants(hh, ww, INPUT_DIM)
            consts += [jnp.asarray(pr, jnp.bfloat16),
                       jnp.asarray(pc, jnp.bfloat16),
                       jnp.asarray(inv, jnp.float32)]
    n_consts = len(consts)

    # ---- the kernel: one grid step per image, everything lane-dense ----
    def kernel(*refs):
        x_ref = refs[0]
        cref = refs[1:1 + n_consts]
        out_refs = refs[1 + n_consts:]
        idx = [0]

        def nxt():
            r = cref[idx[0]]
            idx[0] += 1
            return r

        a = x_ref[0]                                   # (H, W*C) bf16, lane-dense
        for s in range(NUM_SCALES):
            cur = a
            for l in range(N_LAYER):
                ho, wo = ladders[s][l + 1]
                rsel = nxt()[...]                      # (2, ho+1, h)      bf16
                wl = nxt()[...]                        # (4, w*ci, wo*co)  bf16
                bias = nxt()[...]                      # (1, wo*co)        f32
                # even / odd padded-row planes (pad rows are zero rows of rsel)
                e = jnp.dot(rsel[0], cur,
                            preferred_element_type=jnp.float32).astype(jnp.bfloat16)
                o = jnp.dot(rsel[1], cur,
                            preferred_element_type=jnp.float32).astype(jnp.bfloat16)
                # 4x4 stride-2 conv == 4 banded matmuls (one per kernel row kh)
                y = (jnp.dot(e[0:ho], wl[0], preferred_element_type=jnp.float32)
                     + jnp.dot(o[0:ho], wl[1], preferred_element_type=jnp.float32)
                     + jnp.dot(e[1:ho + 1], wl[2], preferred_element_type=jnp.float32)
                     + jnp.dot(o[1:ho + 1], wl[3], preferred_element_type=jnp.float32))
                y = y + bias
                y = jnp.where(y >= 0.0, y, LRELU_SLOPE * y)   # LeakyReLU(0.2)
                cur = y.astype(jnp.bfloat16)           # (ho, wo*co) lane-dense
            # final 1x1 conv, no activation
            h3, w3 = ladders[s][N_LAYER]
            wf = nxt()[...]                            # (w3*c3, w3) bf16
            bf = nxt()[...]                            # (1, w3)     f32
            outv = jnp.dot(cur, wf, preferred_element_type=jnp.float32) + bf
            out_refs[s][...] = outv.reshape(1, h3, w3)
            # AvgPool2d(3, 2, pad=1, count_include_pad=False) for the next scale
            if s + 1 < NUM_SCALES:
                pr = nxt()[...]                        # (H2, h)       bf16
                pc = nxt()[...]                        # (w*C, W2*C)   bf16
                inv = nxt()[...]                       # (H2, W2*C)    f32
                t = jnp.dot(pr, a,
                            preferred_element_type=jnp.float32).astype(jnp.bfloat16)
                ssum = jnp.dot(t, pc, preferred_element_type=jnp.float32)
                a = (ssum * inv).astype(jnp.bfloat16)

    # ---- pallas_call plumbing ----
    x_lane = x_nhwc.reshape(batch, H, W * INPUT_DIM).astype(jnp.bfloat16)

    out_shape = [jax.ShapeDtypeStruct((batch,) + ladders[s][N_LAYER], jnp.float32)
                 for s in range(NUM_SCALES)]
    in_specs = [pl.BlockSpec((1, H, W * INPUT_DIM), lambda b: (b, 0, 0))]
    for c in consts:                                   # constants: full arrays
        in_specs.append(pl.BlockSpec(c.shape, lambda b, nd=c.ndim: (0,) * nd))
    out_specs = [pl.BlockSpec((1,) + ladders[s][N_LAYER], lambda b: (b, 0, 0))
                 for s in range(NUM_SCALES)]

    outs = pl.pallas_call(
        kernel,
        grid=(batch,),
        out_shape=out_shape,
        in_specs=in_specs,
        out_specs=out_specs,
        compiler_params=pltpu.CompilerParams(
            dimension_semantics=("parallel",)),        # second TC on v7x
    )(x_lane, *consts)

    # (N, Ho, Wo) -> NHWC (N, Ho, Wo, 1)
    return [outs[s].reshape((batch,) + ladders[s][N_LAYER] + (1,))
            for s in range(NUM_SCALES)]


# ----------------------------- parameters -----------------------------
def init_params(key):
    params = []
    for _ in range(NUM_SCALES):
        layers = []
        cin, cout = INPUT_DIM, DIM
        for _ in range(N_LAYER):     # ConvBlock2D(cin, cout, 4, 2, 1) + lrelu
            key, k1, k2 = jax.random.split(key, 3)
            w = jax.random.normal(k1, (KSIZE, KSIZE, cin, cout), jnp.float32) * 0.05
            b = jax.random.normal(k2, (cout,), jnp.float32) * 0.05
            layers.append((w, b))
            cin, cout = cout, cout * 2
        key, k1, k2 = jax.random.split(key, 3)   # final nn.Conv2d(cin, 1, 1, 1, 0)
        w = jax.random.normal(k1, (1, 1, cin, 1), jnp.float32) * 0.05
        b = jax.random.normal(k2, (1,), jnp.float32) * 0.05
        layers.append((w, b))
        params.append(layers)
    return params


# ----------------------------- pure-JAX reference -----------------------------
def _conv_ref(x, w, b, stride, pad, act):
    y = jax.lax.conv_general_dilated(
        x, w, (stride, stride), [(pad, pad), (pad, pad)],
        dimension_numbers=("NHWC", "HWIO", "NHWC"),
        precision=jax.lax.Precision.HIGHEST,
    ) + b
    if act == "lrelu":
        y = jnp.where(y >= 0.0, y, LRELU_SLOPE * y)
    return y


def _pool_ref(x):
    dims, strides = (1, 3, 3, 1), (1, 2, 2, 1)
    padc = ((0, 0), (1, 1), (1, 1), (0, 0))
    s = jax.lax.reduce_window(x, 0.0, jax.lax.add, dims, strides, padc)
    c = jax.lax.reduce_window(jnp.ones_like(x), 0.0, jax.lax.add, dims, strides, padc)
    return s / c


def forward_ref(params, x):
    outs = []
    for s in range(NUM_SCALES):
        h = x
        for (w, b) in params[s][:-1]:
            h = _conv_ref(h, w, b, STRIDE, PAD, "lrelu")
        w, b = params[s][-1]
        h = _conv_ref(h, w, b, 1, 0, "none")
        outs.append(h)
        if s < NUM_SCALES - 1:
            x = _pool_ref(x)
    return outs


# ----------------------------- main -----------------------------
if __name__ == "__main__":
    key = jax.random.PRNGKey(0)
    kp, kx = jax.random.split(key)
    params = init_params(kp)

    # Module convention is NCHW; build that, transpose once to NHWC (lanes = C).
    x_nchw = jax.random.normal(kx, (2, INPUT_DIM, 16, 16), jnp.float32)
    x = jnp.transpose(x_nchw, (0, 2, 3, 1))

    fwd = jax.jit(multiscale_discriminator_forward)
    outs = fwd(x, params)
    outs = [jax.block_until_ready(o) for o in outs]

    refs = forward_ref(params, x)
    # Kernel runs bf16 MXU operands with f32 accumulation; the reference is
    # f32 / Precision.HIGHEST, so the tolerance budgets ~bf16 rounding of the
    # inputs, weights and per-layer activations.
    for o, r in zip(outs, refs):
        np.testing.assert_allclose(np.asarray(o), np.asarray(r),
                                   rtol=3e-2, atol=3e-3)

    print("KERNEL_OK")
</pallas_src>

<mosaic_0001>
module attributes {stable_mosaic.version = 11 : i64} {
  func.func @kernel(%arg0: i32, %arg1: memref<1x16x64xbf16, #tpu.memory_space<vmem>>, %arg2: memref<2x9x16xbf16, #tpu.memory_space<vmem>>, %arg3: memref<4x64x64xbf16, #tpu.memory_space<vmem>>, %arg4: memref<1x64xf32, #tpu.memory_space<vmem>>, %arg5: memref<2x5x8xbf16, #tpu.memory_space<vmem>>, %arg6: memref<4x64x64xbf16, #tpu.memory_space<vmem>>, %arg7: memref<1x64xf32, #tpu.memory_space<vmem>>, %arg8: memref<2x3x4xbf16, #tpu.memory_space<vmem>>, %arg9: memref<4x64x64xbf16, #tpu.memory_space<vmem>>, %arg10: memref<1x64xf32, #tpu.memory_space<vmem>>, %arg11: memref<64x2xbf16, #tpu.memory_space<vmem>>, %arg12: memref<1x2xf32, #tpu.memory_space<vmem>>, %arg13: memref<8x16xbf16, #tpu.memory_space<vmem>>, %arg14: memref<64x32xbf16, #tpu.memory_space<vmem>>, %arg15: memref<8x32xf32, #tpu.memory_space<vmem>>, %arg16: memref<2x5x8xbf16, #tpu.memory_space<vmem>>, %arg17: memref<4x32x32xbf16, #tpu.memory_space<vmem>>, %arg18: memref<1x32xf32, #tpu.memory_space<vmem>>, %arg19: memref<2x3x4xbf16, #tpu.memory_space<vmem>>, %arg20: memref<4x32x32xbf16, #tpu.memory_space<vmem>>, %arg21: memref<1x32xf32, #tpu.memory_space<vmem>>, %arg22: memref<2x2x2xbf16, #tpu.memory_space<vmem>>, %arg23: memref<4x32x32xbf16, #tpu.memory_space<vmem>>, %arg24: memref<1x32xf32, #tpu.memory_space<vmem>>, %arg25: memref<32x1xbf16, #tpu.memory_space<vmem>>, %arg26: memref<1x1xf32, #tpu.memory_space<vmem>>, %arg27: memref<1x2x2xf32, #tpu.memory_space<vmem>>, %arg28: memref<1x1x1xf32, #tpu.memory_space<vmem>>) attributes {dimension_semantics = [#tpu.dimension_semantics<parallel>], iteration_bounds = array<i64: 2>, scalar_prefetch = 0 : i64, scratch_operands = 0 : i64, tpu.core_type = #tpu.core_type<tc>, window_params = [{transform_indices = @transform_0, window_bounds = array<i64: 1, 16, 64>}, {pipeline_mode = #tpu.pipeline_mode<synchronous>, transform_indices = @transform_1, window_bounds = array<i64: 2, 9, 16>}, {pipeline_mode = #tpu.pipeline_mode<synchronous>, transform_indices = @transform_2, window_bounds = array<i64: 4, 64, 64>}, {pipeline_mode = #tpu.pipeline_mode<synchronous>, transform_indices = @transform_3, window_bounds = array<i64: 1, 64>}, {pipeline_mode = #tpu.pipeline_mode<synchronous>, transform_indices = @transform_4, window_bounds = array<i64: 2, 5, 8>}, {pipeline_mode = #tpu.pipeline_mode<synchronous>, transform_indices = @transform_5, window_bounds = array<i64: 4, 64, 64>}, {pipeline_mode = #tpu.pipeline_mode<synchronous>, transform_indices = @transform_6, window_bounds = array<i64: 1, 64>}, {pipeline_mode = #tpu.pipeline_mode<synchronous>, transform_indices = @transform_7, window_bounds = array<i64: 2, 3, 4>}, {pipeline_mode = #tpu.pipeline_mode<synchronous>, transform_indices = @transform_8, window_bounds = array<i64: 4, 64, 64>}, {pipeline_mode = #tpu.pipeline_mode<synchronous>, transform_indices = @transform_9, window_bounds = array<i64: 1, 64>}, {pipeline_mode = #tpu.pipeline_mode<synchronous>, transform_indices = @transform_10, window_bounds = array<i64: 64, 2>}, {pipeline_mode = #tpu.pipeline_mode<synchronous>, transform_indices = @transform_11, window_bounds = array<i64: 1, 2>}, {pipeline_mode = #tpu.pipeline_mode<synchronous>, transform_indices = @transform_12, window_bounds = array<i64: 8, 16>}, {pipeline_mode = #tpu.pipeline_mode<synchronous>, transform_indices = @transform_13, window_bounds = array<i64: 64, 32>}, {pipeline_mode = #tpu.pipeline_mode<synchronous>, transform_indices = @transform_14, window_bounds = array<i64: 8, 32>}, {pipeline_mode = #tpu.pipeline_mode<synchronous>, transform_indices = @transform_15, window_bounds = array<i64: 2, 5, 8>}, {pipeline_mode = #tpu.pipeline_mode<synchronous>, transform_indices = @transform_16, window_bounds = array<i64: 4, 32, 32>}, {pipeline_mode = #tpu.pipeline_mode<synchronous>, transform_indices = @transform_17, window_bounds = array<i64: 1, 32>}, {pipeline_mode = #tpu.pipeline_mode<synchronous>, transform_indices = @transform_18, window_bounds = array<i64: 2, 3, 4>}, {pipeline_mode = #tpu.pipeline_mode<synchronous>, transform_indices = @transform_19, window_bounds = array<i64: 4, 32, 32>}, {pipeline_mode = #tpu.pipeline_mode<synchronous>, transform_indices = @transform_20, window_bounds = array<i64: 1, 32>}, {pipeline_mode = #tpu.pipeline_mode<synchronous>, transform_indices = @transform_21, window_bounds = array<i64: 2, 2, 2>}, {pipeline_mode = #tpu.pipeline_mode<synchronous>, transform_indices = @transform_22, window_bounds = array<i64: 4, 32, 32>}, {pipeline_mode = #tpu.pipeline_mode<synchronous>, transform_indices = @transform_23, window_bounds = array<i64: 1, 32>}, {pipeline_mode = #tpu.pipeline_mode<synchronous>, transform_indices = @transform_24, window_bounds = array<i64: 32, 1>}, {pipeline_mode = #tpu.pipeline_mode<synchronous>, transform_indices = @transform_25, window_bounds = array<i64: 1, 1>}, {transform_indices = @transform_26, window_bounds = array<i64: 1, 2, 2>}, {transform_indices = @transform_27, window_bounds = array<i64: 1, 1, 1>}]} {
    %c0 = arith.constant 0 : index
    %c0_0 = arith.constant 0 : index
    %c0_1 = arith.constant 0 : index
    %0 = vector.load %arg1[%c0, %c0_0, %c0_1] : memref<1x16x64xbf16, #tpu.memory_space<vmem>>, vector<1x16x64xbf16>
    %1 = vector.shape_cast %0 : vector<1x16x64xbf16> to vector<16x64xbf16>
    %c0_2 = arith.constant 0 : index
    %c0_3 = arith.constant 0 : index
    %c0_4 = arith.constant 0 : index
    %2 = vector.load %arg2[%c0_2, %c0_3, %c0_4] : memref<2x9x16xbf16, #tpu.memory_space<vmem>>, vector<2x9x16xbf16>
    %c0_5 = arith.constant 0 : index
    %c0_6 = arith.constant 0 : index
    %c0_7 = arith.constant 0 : index
    %3 = vector.load %arg3[%c0_5, %c0_6, %c0_7] : memref<4x64x64xbf16, #tpu.memory_space<vmem>>, vector<4x64x64xbf16>
    %c0_8 = arith.constant 0 : index
    %c0_9 = arith.constant 0 : index
    %4 = vector.load %arg4[%c0_8, %c0_9] : memref<1x64xf32, #tpu.memory_space<vmem>>, vector<1x64xf32>
    %5 = vector.extract_strided_slice %2 {offsets = [0, 0, 0], sizes = [1, 9, 16], strides = [1, 1, 1]} : vector<2x9x16xbf16> to vector<1x9x16xbf16>
    %6 = vector.shape_cast %5 : vector<1x9x16xbf16> to vector<9x16xbf16>
    %cst = arith.constant dense<0.000000e+00> : vector<9x64xf32>
    %7 = tpu.matmul %6, %1, %cst {dimension_numbers = #tpu.dot_dimension_numbers<[1], [0], [0], [1], [0, 0, 1, 1], [], []>} : vector<9x16xbf16>, vector<16x64xbf16>, vector<9x64xf32> -> vector<9x64xf32>
    %8 = arith.truncf %7 : vector<9x64xf32> to vector<9x64xbf16>
    %9 = vector.extract_strided_slice %2 {offsets = [1, 0, 0], sizes = [1, 9, 16], strides = [1, 1, 1]} : vector<2x9x16xbf16> to vector<1x9x16xbf16>
    %10 = vector.shape_cast %9 : vector<1x9x16xbf16> to vector<9x16xbf16>
    %cst_10 = arith.constant dense<0.000000e+00> : vector<9x64xf32>
    %11 = tpu.matmul %10, %1, %cst_10 {dimension_numbers = #tpu.dot_dimension_numbers<[1], [0], [0], [1], [0, 0, 1, 1], [], []>} : vector<9x16xbf16>, vector<16x64xbf16>, vector<9x64xf32> -> vector<9x64xf32>
    %12 = arith.truncf %11 : vector<9x64xf32> to vector<9x64xbf16>
    %13 = vector.extract_strided_slice %8 {offsets = [0, 0], sizes = [8, 64], strides = [1, 1]} : vector<9x64xbf16> to vector<8x64xbf16>
    %14 = vector.extract_strided_slice %3 {offsets = [0, 0, 0], sizes = [1, 64, 64], strides = [1, 1, 1]} : vector<4x64x64xbf16> to vector<1x64x64xbf16>
    %15 = vector.shape_cast %14 : vector<1x64x64xbf16> to vector<64x64xbf16>
    %cst_11 = arith.constant dense<0.000000e+00> : vector<8x64xf32>
    %16 = tpu.matmul %13, %15, %cst_11 {dimension_numbers = #tpu.dot_dimension_numbers<[1], [0], [0], [1], [0, 0, 1, 1], [], []>} : vector<8x64xbf16>, vector<64x64xbf16>, vector<8x64xf32> -> vector<8x64xf32>
    %17 = vector.extract_strided_slice %12 {offsets = [0, 0], sizes = [8, 64], strides = [1, 1]} : vector<9x64xbf16> to vector<8x64xbf16>
    %18 = vector.extract_strided_slice %3 {offsets = [1, 0, 0], sizes = [1, 64, 64], strides = [1, 1, 1]} : vector<4x64x64xbf16> to vector<1x64x64xbf16>
    %19 = vector.shape_cast %18 : vector<1x64x64xbf16> to vector<64x64xbf16>
    %cst_12 = arith.constant dense<0.000000e+00> : vector<8x64xf32>
    %20 = tpu.matmul %17, %19, %cst_12 {dimension_numbers = #tpu.dot_dimension_numbers<[1], [0], [0], [1], [0, 0, 1, 1], [], []>} : vector<8x64xbf16>, vector<64x64xbf16>, vector<8x64xf32> -> vector<8x64xf32>
    %21 = arith.addf %16, %20 : vector<8x64xf32>
    %22 = vector.extract_strided_slice %8 {offsets = [1, 0], sizes = [8, 64], strides = [1, 1]} : vector<9x64xbf16> to vector<8x64xbf16>
    %23 = vector.extract_strided_slice %3 {offsets = [2, 0, 0], sizes = [1, 64, 64], strides = [1, 1, 1]} : vector<4x64x64xbf16> to vector<1x64x64xbf16>
    %24 = vector.shape_cast %23 : vector<1x64x64xbf16> to vector<64x64xbf16>
    %cst_13 = arith.constant dense<0.000000e+00> : vector<8x64xf32>
    %25 = tpu.matmul %22, %24, %cst_13 {dimension_numbers = #tpu.dot_dimension_numbers<[1], [0], [0], [1], [0, 0, 1, 1], [], []>} : vector<8x64xbf16>, vector<64x64xbf16>, vector<8x64xf32> -> vector<8x64xf32>
    %26 = arith.addf %21, %25 : vector<8x64xf32>
    %27 = vector.extract_strided_slice %12 {offsets = [1, 0], sizes = [8, 64], strides = [1, 1]} : vector<9x64xbf16> to vector<8x64xbf16>
    %28 = vector.extract_strided_slice %3 {offsets = [3, 0, 0], sizes = [1, 64, 64], strides = [1, 1, 1]} : vector<4x64x64xbf16> to vector<1x64x64xbf16>
    %29 = vector.shape_cast %28 : vector<1x64x64xbf16> to vector<64x64xbf16>
    %cst_14 = arith.constant dense<0.000000e+00> : vector<8x64xf32>
    %30 = tpu.matmul %27, %29, %cst_14 {dimension_numbers = #tpu.dot_dimension_numbers<[1], [0], [0], [1], [0, 0, 1, 1], [], []>} : vector<8x64xbf16>, vector<64x64xbf16>, vector<8x64xf32> -> vector<8x64xf32>
    %31 = arith.addf %26, %30 : vector<8x64xf32>
    %32 = vector.broadcast %4 : vector<1x64xf32> to vector<8x64xf32>
    %33 = arith.addf %31, %32 : vector<8x64xf32>
    %cst_15 = arith.constant 0.000000e+00 : f32
    %34 = vector.broadcast %cst_15 : f32 to vector<8x64xf32>
    %35 = arith.cmpf oge, %33, %34 : vector<8x64xf32>
    %cst_16 = arith.constant 2.000000e-01 : f32
    %36 = vector.broadcast %cst_16 : f32 to vector<8x64xf32>
    %37 = arith.mulf %36, %33 : vector<8x64xf32>
    %38 = arith.select %35, %33, %37 : vector<8x64xi1>, vector<8x64xf32>
    %39 = arith.truncf %38 : vector<8x64xf32> to vector<8x64xbf16>
    %c0_17 = arith.constant 0 : index
    %c0_18 = arith.constant 0 : index
    %c0_19 = arith.constant 0 : index
    %40 = vector.load %arg5[%c0_17, %c0_18, %c0_19] : memref<2x5x8xbf16, #tpu.memory_space<vmem>>, vector<2x5x8xbf16>
    %c0_20 = arith.constant 0 : index
    %c0_21 = arith.constant 0 : index
    %c0_22 = arith.constant 0 : index
    %41 = vector.load %arg6[%c0_20, %c0_21, %c0_22] : memref<4x64x64xbf16, #tpu.memory_space<vmem>>, vector<4x64x64xbf16>
    %c0_23 = arith.constant 0 : index
    %c0_24 = arith.constant 0 : index
    %42 = vector.load %arg7[%c0_23, %c0_24] : memref<1x64xf32, #tpu.memory_space<vmem>>, vector<1x64xf32>
    %43 = vector.extract_strided_slice %40 {offsets = [0, 0, 0], sizes = [1, 5, 8], strides = [1, 1, 1]} : vector<2x5x8xbf16> to vector<1x5x8xbf16>
    %44 = vector.shape_cast %43 : vector<1x5x8xbf16> to vector<5x8xbf16>
    %cst_25 = arith.constant dense<0.000000e+00> : vector<5x64xf32>
    %45 = tpu.matmul %44, %39, %cst_25 {dimension_numbers = #tpu.dot_dimension_numbers<[1], [0], [0], [1], [0, 0, 1, 1], [], []>} : vector<5x8xbf16>, vector<8x64xbf16>, vector<5x64xf32> -> vector<5x64xf32>
    %46 = arith.truncf %45 : vector<5x64xf32> to vector<5x64xbf16>
    %47 = vector.extract_strided_slice %40 {offsets = [1, 0, 0], sizes = [1, 5, 8], strides = [1, 1, 1]} : vector<2x5x8xbf16> to vector<1x5x8xbf16>
    %48 = vector.shape_cast %47 : vector<1x5x8xbf16> to vector<5x8xbf16>
    %cst_26 = arith.constant dense<0.000000e+00> : vector<5x64xf32>
    %49 = tpu.matmul %48, %39, %cst_26 {dimension_numbers = #tpu.dot_dimension_numbers<[1], [0], [0], [1], [0, 0, 1, 1], [], []>} : vector<5x8xbf16>, vector<8x64xbf16>, vector<5x64xf32> -> vector<5x64xf32>
    %50 = arith.truncf %49 : vector<5x64xf32> to vector<5x64xbf16>
    %51 = vector.extract_strided_slice %46 {offsets = [0, 0], sizes = [4, 64], strides = [1, 1]} : vector<5x64xbf16> to vector<4x64xbf16>
    %52 = vector.extract_strided_slice %41 {offsets = [0, 0, 0], sizes = [1, 64, 64], strides = [1, 1, 1]} : vector<4x64x64xbf16> to vector<1x64x64xbf16>
    %53 = vector.shape_cast %52 : vector<1x64x64xbf16> to vector<64x64xbf16>
    %cst_27 = arith.constant dense<0.000000e+00> : vector<4x64xf32>
    %54 = tpu.matmul %51, %53, %cst_27 {dimension_numbers = #tpu.dot_dimension_numbers<[1], [0], [0], [1], [0, 0, 1, 1], [], []>} : vector<4x64xbf16>, vector<64x64xbf16>, vector<4x64xf32> -> vector<4x64xf32>
    %55 = vector.extract_strided_slice %50 {offsets = [0, 0], sizes = [4, 64], strides = [1, 1]} : vector<5x64xbf16> to vector<4x64xbf16>
    %56 = vector.extract_strided_slice %41 {offsets = [1, 0, 0], sizes = [1, 64, 64], strides = [1, 1, 1]} : vector<4x64x64xbf16> to vector<1x64x64xbf16>
    %57 = vector.shape_cast %56 : vector<1x64x64xbf16> to vector<64x64xbf16>
    %cst_28 = arith.constant dense<0.000000e+00> : vector<4x64xf32>
    %58 = tpu.matmul %55, %57, %cst_28 {dimension_numbers = #tpu.dot_dimension_numbers<[1], [0], [0], [1], [0, 0, 1, 1], [], []>} : vector<4x64xbf16>, vector<64x64xbf16>, vector<4x64xf32> -> vector<4x64xf32>
    %59 = arith.addf %54, %58 : vector<4x64xf32>
    %60 = vector.extract_strided_slice %46 {offsets = [1, 0], sizes = [4, 64], strides = [1, 1]} : vector<5x64xbf16> to vector<4x64xbf16>
    %61 = vector.extract_strided_slice %41 {offsets = [2, 0, 0], sizes = [1, 64, 64], strides = [1, 1, 1]} : vector<4x64x64xbf16> to vector<1x64x64xbf16>
    %62 = vector.shape_cast %61 : vector<1x64x64xbf16> to vector<64x64xbf16>
    %cst_29 = arith.constant dense<0.000000e+00> : vector<4x64xf32>
    %63 = tpu.matmul %60, %62, %cst_29 {dimension_numbers = #tpu.dot_dimension_numbers<[1], [0], [0], [1], [0, 0, 1, 1], [], []>} : vector<4x64xbf16>, vector<64x64xbf16>, vector<4x64xf32> -> vector<4x64xf32>
    %64 = arith.addf %59, %63 : vector<4x64xf32>
    %65 = vector.extract_strided_slice %50 {offsets = [1, 0], sizes = [4, 64], strides = [1, 1]} : vector<5x64xbf16> to vector<4x64xbf16>
    %66 = vector.extract_strided_slice %41 {offsets = [3, 0, 0], sizes = [1, 64, 64], strides = [1, 1, 1]} : vector<4x64x64xbf16> to vector<1x64x64xbf16>
    %67 = vector.shape_cast %66 : vector<1x64x64xbf16> to vector<64x64xbf16>
    %cst_30 = arith.constant dense<0.000000e+00> : vector<4x64xf32>
    %68 = tpu.matmul %65, %67, %cst_30 {dimension_numbers = #tpu.dot_dimension_numbers<[1], [0], [0], [1], [0, 0, 1, 1], [], []>} : vector<4x64xbf16>, vector<64x64xbf16>, vector<4x64xf32> -> vector<4x64xf32>
    %69 = arith.addf %64, %68 : vector<4x64xf32>
    %70 = vector.broadcast %42 : vector<1x64xf32> to vector<4x64xf32>
    %71 = arith.addf %69, %70 : vector<4x64xf32>
    %cst_31 = arith.constant 0.000000e+00 : f32
    %72 = vector.broadcast %cst_31 : f32 to vector<4x64xf32>
    %73 = arith.cmpf oge, %71, %72 : vector<4x64xf32>
    %cst_32 = arith.constant 2.000000e-01 : f32
    %74 = vector.broadcast %cst_32 : f32 to vector<4x64xf32>
    %75 = arith.mulf %74, %71 : vector<4x64xf32>
    %76 = arith.select %73, %71, %75 : vector<4x64xi1>, vector<4x64xf32>
    %77 = arith.truncf %76 : vector<4x64xf32> to vector<4x64xbf16>
    %c0_33 = arith.constant 0 : index
    %c0_34 = arith.constant 0 : index
    %c0_35 = arith.constant 0 : index
    %78 = vector.load %arg8[%c0_33, %c0_34, %c0_35] : memref<2x3x4xbf16, #tpu.memory_space<vmem>>, vector<2x3x4xbf16>
    %c0_36 = arith.constant 0 : index
    %c0_37 = arith.constant 0 : index
    %c0_38 = arith.constant 0 : index
    %79 = vector.load %arg9[%c0_36, %c0_37, %c0_38] : memref<4x64x64xbf16, #tpu.memory_space<vmem>>, vector<4x64x64xbf16>
    %c0_39 = arith.constant 0 : index
    %c0_40 = arith.constant 0 : index
    %80 = vector.load %arg10[%c0_39, %c0_40] : memref<1x64xf32, #tpu.memory_space<vmem>>, vector<1x64xf32>
    %81 = vector.extract_strided_slice %78 {offsets = [0, 0, 0], sizes = [1, 3, 4], strides = [1, 1, 1]} : vector<2x3x4xbf16> to vector<1x3x4xbf16>
    %82 = vector.shape_cast %81 : vector<1x3x4xbf16> to vector<3x4xbf16>
    %cst_41 = arith.constant dense<0.000000e+00> : vector<3x64xf32>
    %83 = tpu.matmul %82, %77, %cst_41 {dimension_numbers = #tpu.dot_dimension_numbers<[1], [0], [0], [1], [0, 0, 1, 1], [], []>} : vector<3x4xbf16>, vector<4x64xbf16>, vector<3x64xf32> -> vector<3x64xf32>
    %84 = arith.truncf %83 : vector<3x64xf32> to vector<3x64xbf16>
    %85 = vector.extract_strided_slice %78 {offsets = [1, 0, 0], sizes = [1, 3, 4], strides = [1, 1, 1]} : vector<2x3x4xbf16> to vector<1x3x4xbf16>
    %86 = vector.shape_cast %85 : vector<1x3x4xbf16> to vector<3x4xbf16>
    %cst_42 = arith.constant dense<0.000000e+00> : vector<3x64xf32>
    %87 = tpu.matmul %86, %77, %cst_42 {dimension_numbers = #tpu.dot_dimension_numbers<[1], [0], [0], [1], [0, 0, 1, 1], [], []>} : vector<3x4xbf16>, vector<4x64xbf16>, vector<3x64xf32> -> vector<3x64xf32>
    %88 = arith.truncf %87 : vector<3x64xf32> to vector<3x64xbf16>
    %89 = vector.extract_strided_slice %84 {offsets = [0, 0], sizes = [2, 64], strides = [1, 1]} : vector<3x64xbf16> to vector<2x64xbf16>
    %90 = vector.extract_strided_slice %79 {offsets = [0, 0, 0], sizes = [1, 64, 64], strides = [1, 1, 1]} : vector<4x64x64xbf16> to vector<1x64x64xbf16>
    %91 = vector.shape_cast %90 : vector<1x64x64xbf16> to vector<64x64xbf16>
    %cst_43 = arith.constant dense<0.000000e+00> : vector<2x64xf32>
    %92 = tpu.matmul %89, %91, %cst_43 {dimension_numbers = #tpu.dot_dimension_numbers<[1], [0], [0], [1], [0, 0, 1, 1], [], []>} : vector<2x64xbf16>, vector<64x64xbf16>, vector<2x64xf32> -> vector<2x64xf32>
    %93 = vector.extract_strided_slice %88 {offsets = [0, 0], sizes = [2, 64], strides = [1, 1]} : vector<3x64xbf16> to vector<2x64xbf16>
    %94 = vector.extract_strided_slice %79 {offsets = [1, 0, 0], sizes = [1, 64, 64], strides = [1, 1, 1]} : vector<4x64x64xbf16> to vector<1x64x64xbf16>
    %95 = vector.shape_cast %94 : vector<1x64x64xbf16> to vector<64x64xbf16>
    %cst_44 = arith.constant dense<0.000000e+00> : vector<2x64xf32>
    %96 = tpu.matmul %93, %95, %cst_44 {dimension_numbers = #tpu.dot_dimension_numbers<[1], [0], [0], [1], [0, 0, 1, 1], [], []>} : vector<2x64xbf16>, vector<64x64xbf16>, vector<2x64xf32> -> vector<2x64xf32>
    %97 = arith.addf %92, %96 : vector<2x64xf32>
    %98 = vector.extract_strided_slice %84 {offsets = [1, 0], sizes = [2, 64], strides = [1, 1]} : vector<3x64xbf16> to vector<2x64xbf16>
    %99 = vector.extract_strided_slice %79 {offsets = [2, 0, 0], sizes = [1, 64, 64], strides = [1, 1, 1]} : vector<4x64x64xbf16> to vector<1x64x64xbf16>
    %100 = vector.shape_cast %99 : vector<1x64x64xbf16> to vector<64x64xbf16>
    %cst_45 = arith.constant dense<0.000000e+00> : vector<2x64xf32>
    %101 = tpu.matmul %98, %100, %cst_45 {dimension_numbers = #tpu.dot_dimension_numbers<[1], [0], [0], [1], [0, 0, 1, 1], [], []>} : vector<2x64xbf16>, vector<64x64xbf16>, vector<2x64xf32> -> vector<2x64xf32>
    %102 = arith.addf %97, %101 : vector<2x64xf32>
    %103 = vector.extract_strided_slice %88 {offsets = [1, 0], sizes = [2, 64], strides = [1, 1]} : vector<3x64xbf16> to vector<2x64xbf16>
    %104 = vector.extract_strided_slice %79 {offsets = [3, 0, 0], sizes = [1, 64, 64], strides = [1, 1, 1]} : vector<4x64x64xbf16> to vector<1x64x64xbf16>
    %105 = vector.shape_cast %104 : vector<1x64x64xbf16> to vector<64x64xbf16>
    %cst_46 = arith.constant dense<0.000000e+00> : vector<2x64xf32>
    %106 = tpu.matmul %103, %105, %cst_46 {dimension_numbers = #tpu.dot_dimension_numbers<[1], [0], [0], [1], [0, 0, 1, 1], [], []>} : vector<2x64xbf16>, vector<64x64xbf16>, vector<2x64xf32> -> vector<2x64xf32>
    %107 = arith.addf %102, %106 : vector<2x64xf32>
    %108 = vector.broadcast %80 : vector<1x64xf32> to vector<2x64xf32>
    %109 = arith.addf %107, %108 : vector<2x64xf32>
    %cst_47 = arith.constant 0.000000e+00 : f32
    %110 = vector.broadcast %cst_47 : f32 to vector<2x64xf32>
    %111 = arith.cmpf oge, %109, %110 : vector<2x64xf32>
    %cst_48 = arith.constant 2.000000e-01 : f32
    %112 = vector.broadcast %cst_48 : f32 to vector<2x64xf32>
    %113 = arith.mulf %112, %109 : vector<2x64xf32>
    %114 = arith.select %111, %109, %113 : vector<2x64xi1>, vector<2x64xf32>
    %115 = arith.truncf %114 : vector<2x64xf32> to vector<2x64xbf16>
    %c0_49 = arith.constant 0 : index
    %c0_50 = arith.constant 0 : index
    %116 = vector.load %arg11[%c0_49, %c0_50] : memref<64x2xbf16, #tpu.memory_space<vmem>>, vector<64x2xbf16>
    %c0_51 = arith.constant 0 : index
    %c0_52 = arith.constant 0 : index
    %117 = vector.load %arg12[%c0_51, %c0_52] : memref<1x2xf32, #tpu.memory_space<vmem>>, vector<1x2xf32>
    %cst_53 = arith.constant dense<0.000000e+00> : vector<2x2xf32>
    %118 = tpu.matmul %115, %116, %cst_53 {dimension_numbers = #tpu.dot_dimension_numbers<[1], [0], [0], [1], [0, 0, 1, 1], [], []>} : vector<2x64xbf16>, vector<64x2xbf16>, vector<2x2xf32> -> vector<2x2xf32>
    %119 = vector.broadcast %117 : vector<1x2xf32> to vector<2x2xf32>
    %120 = arith.addf %118, %119 : vector<2x2xf32>
    %121 = vector.shape_cast %120 : vector<2x2xf32> to vector<1x2x2xf32>
    %c0_54 = arith.constant 0 : index
    %c0_55 = arith.constant 0 : index
    %c0_56 = arith.constant 0 : index
    %122 = vector.load %arg27[%c0_54, %c0_55, %c0_56] : memref<1x2x2xf32, #tpu.memory_space<vmem>>, vector<1x2x2xf32>
    tpu.vector_store %arg27[%c0_54, %c0_55, %c0_56], %121 {strides = array<i32>} : memref<1x2x2xf32, #tpu.memory_space<vmem>>, vector<1x2x2xf32>,
    %c0_57 = arith.constant 0 : index
    %c0_58 = arith.constant 0 : index
    %123 = vector.load %arg13[%c0_57, %c0_58] : memref<8x16xbf16, #tpu.memory_space<vmem>>, vector<8x16xbf16>
    %c0_59 = arith.constant 0 : index
    %c0_60 = arith.constant 0 : index
    %124 = vector.load %arg14[%c0_59, %c0_60] : memref<64x32xbf16, #tpu.memory_space<vmem>>, vector<64x32xbf16>
    %c0_61 = arith.constant 0 : index
    %c0_62 = arith.constant 0 : index
    %125 = vector.load %arg15[%c0_61, %c0_62] : memref<8x32xf32, #tpu.memory_space<vmem>>, vector<8x32xf32>
    %cst_63 = arith.constant dense<0.000000e+00> : vector<8x64xf32>
    %126 = tpu.matmul %123, %1, %cst_63 {dimension_numbers = #tpu.dot_dimension_numbers<[1], [0], [0], [1], [0, 0, 1, 1], [], []>} : vector<8x16xbf16>, vector<16x64xbf16>, vector<8x64xf32> -> vector<8x64xf32>
    %127 = arith.truncf %126 : vector<8x64xf32> to vector<8x64xbf16>
    %cst_64 = arith.constant dense<0.000000e+00> : vector<8x32xf32>
    %128 = tpu.matmul %127, %124, %cst_64 {dimension_numbers = #tpu.dot_dimension_numbers<[1], [0], [0], [1], [0, 0, 1, 1], [], []>} : vector<8x64xbf16>, vector<64x32xbf16>, vector<8x32xf32> -> vector<8x32xf32>
    %129 = arith.mulf %128, %125 : vector<8x32xf32>
    %130 = arith.truncf %129 : vector<8x32xf32> to vector<8x32xbf16>
    %c0_65 = arith.constant 0 : index
    %c0_66 = arith.constant 0 : index
    %c0_67 = arith.constant 0 : index
    %131 = vector.load %arg16[%c0_65, %c0_66, %c0_67] : memref<2x5x8xbf16, #tpu.memory_space<vmem>>, vector<2x5x8xbf16>
    %c0_68 = arith.constant 0 : index
    %c0_69 = arith.constant 0 : index
    %c0_70 = arith.constant 0 : index
    %132 = vector.load %arg17[%c0_68, %c0_69, %c0_70] : memref<4x32x32xbf16, #tpu.memory_space<vmem>>, vector<4x32x32xbf16>
    %c0_71 = arith.constant 0 : index
    %c0_72 = arith.constant 0 : index
    %133 = vector.load %arg18[%c0_71, %c0_72] : memref<1x32xf32, #tpu.memory_space<vmem>>, vector<1x32xf32>
    %134 = vector.extract_strided_slice %131 {offsets = [0, 0, 0], sizes = [1, 5, 8], strides = [1, 1, 1]} : vector<2x5x8xbf16> to vector<1x5x8xbf16>
    %135 = vector.shape_cast %134 : vector<1x5x8xbf16> to vector<5x8xbf16>
    %cst_73 = arith.constant dense<0.000000e+00> : vector<5x32xf32>
    %136 = tpu.matmul %135, %130, %cst_73 {dimension_numbers = #tpu.dot_dimension_numbers<[1], [0], [0], [1], [0, 0, 1, 1], [], []>} : vector<5x8xbf16>, vector<8x32xbf16>, vector<5x32xf32> -> vector<5x32xf32>
    %137 = arith.truncf %136 : vector<5x32xf32> to vector<5x32xbf16>
    %138 = vector.extract_strided_slice %131 {offsets = [1, 0, 0], sizes = [1, 5, 8], strides = [1, 1, 1]} : vector<2x5x8xbf16> to vector<1x5x8xbf16>
    %139 = vector.shape_cast %138 : vector<1x5x8xbf16> to vector<5x8xbf16>
    %cst_74 = arith.constant dense<0.000000e+00> : vector<5x32xf32>
    %140 = tpu.matmul %139, %130, %cst_74 {dimension_numbers = #tpu.dot_dimension_numbers<[1], [0], [0], [1], [0, 0, 1, 1], [], []>} : vector<5x8xbf16>, vector<8x32xbf16>, vector<5x32xf32> -> vector<5x32xf32>
    %141 = arith.truncf %140 : vector<5x32xf32> to vector<5x32xbf16>
    %142 = vector.extract_strided_slice %137 {offsets = [0, 0], sizes = [4, 32], strides = [1, 1]} : vector<5x32xbf16> to vector<4x32xbf16>
    %143 = vector.extract_strided_slice %132 {offsets = [0, 0, 0], sizes = [1, 32, 32], strides = [1, 1, 1]} : vector<4x32x32xbf16> to vector<1x32x32xbf16>
    %144 = vector.shape_cast %143 : vector<1x32x32xbf16> to vector<32x32xbf16>
    %cst_75 = arith.constant dense<0.000000e+00> : vector<4x32xf32>
    %145 = tpu.matmul %142, %144, %cst_75 {dimension_numbers = #tpu.dot_dimension_numbers<[1], [0], [0], [1], [0, 0, 1, 1], [], []>} : vector<4x32xbf16>, vector<32x32xbf16>, vector<4x32xf32> -> vector<4x32xf32>
    %146 = vector.extract_strided_slice %141 {offsets = [0, 0], sizes = [4, 32], strides = [1, 1]} : vector<5x32xbf16> to vector<4x32xbf16>
    %147 = vector.extract_strided_slice %132 {offsets = [1, 0, 0], sizes = [1, 32, 32], strides = [1, 1, 1]} : vector<4x32x32xbf16> to vector<1x32x32xbf16>
    %148 = vector.shape_cast %147 : vector<1x32x32xbf16> to vector<32x32xbf16>
    %cst_76 = arith.constant dense<0.000000e+00> : vector<4x32xf32>
    %149 = tpu.matmul %146, %148, %cst_76 {dimension_numbers = #tpu.dot_dimension_numbers<[1], [0], [0], [1], [0, 0, 1, 1], [], []>} : vector<4x32xbf16>, vector<32x32xbf16>, vector<4x32xf32> -> vector<4x32xf32>
    %150 = arith.addf %145, %149 : vector<4x32xf32>
    %151 = vector.extract_strided_slice %137 {offsets = [1, 0], sizes = [4, 32], strides = [1, 1]} : vector<5x32xbf16> to vector<4x32xbf16>
    %152 = vector.extract_strided_slice %132 {offsets = [2, 0, 0], sizes = [1, 32, 32], strides = [1, 1, 1]} : vector<4x32x32xbf16> to vector<1x32x32xbf16>
    %153 = vector.shape_cast %152 : vector<1x32x32xbf16> to vector<32x32xbf16>
    %cst_77 = arith.constant dense<0.000000e+00> : vector<4x32xf32>
    %154 = tpu.matmul %151, %153, %cst_77 {dimension_numbers = #tpu.dot_dimension_numbers<[1], [0], [0], [1], [0, 0, 1, 1], [], []>} : vector<4x32xbf16>, vector<32x32xbf16>, vector<4x32xf32> -> vector<4x32xf32>
    %155 = arith.addf %150, %154 : vector<4x32xf32>
    %156 = vector.extract_strided_slice %141 {offsets = [1, 0], sizes = [4, 32], strides = [1, 1]} : vector<5x32xbf16> to vector<4x32xbf16>
    %157 = vector.extract_strided_slice %132 {offsets = [3, 0, 0], sizes = [1, 32, 32], strides = [1, 1, 1]} : vector<4x32x32xbf16> to vector<1x32x32xbf16>
    %158 = vector.shape_cast %157 : vector<1x32x32xbf16> to vector<32x32xbf16>
    %cst_78 = arith.constant dense<0.000000e+00> : vector<4x32xf32>
    %159 = tpu.matmul %156, %158, %cst_78 {dimension_numbers = #tpu.dot_dimension_numbers<[1], [0], [0], [1], [0, 0, 1, 1], [], []>} : vector<4x32xbf16>, vector<32x32xbf16>, vector<4x32xf32> -> vector<4x32xf32>
    %160 = arith.addf %155, %159 : vector<4x32xf32>
    %161 = vector.broadcast %133 : vector<1x32xf32> to vector<4x32xf32>
    %162 = arith.addf %160, %161 : vector<4x32xf32>
    %cst_79 = arith.constant 0.000000e+00 : f32
    %163 = vector.broadcast %cst_79 : f32 to vector<4x32xf32>
    %164 = arith.cmpf oge, %162, %163 : vector<4x32xf32>
    %cst_80 = arith.constant 2.000000e-01 : f32
    %165 = vector.broadcast %cst_80 : f32 to vector<4x32xf32>
    %166 = arith.mulf %165, %162 : vector<4x32xf32>
    %167 = arith.select %164, %162, %166 : vector<4x32xi1>, vector<4x32xf32>
    %168 = arith.truncf %167 : vector<4x32xf32> to vector<4x32xbf16>
    %c0_81 = arith.constant 0 : index
    %c0_82 = arith.constant 0 : index
    %c0_83 = arith.constant 0 : index
    %169 = vector.load %arg19[%c0_81, %c0_82, %c0_83] : memref<2x3x4xbf16, #tpu.memory_space<vmem>>, vector<2x3x4xbf16>
    %c0_84 = arith.constant 0 : index
    %c0_85 = arith.constant 0 : index
    %c0_86 = arith.constant 0 : index
    %170 = vector.load %arg20[%c0_84, %c0_85, %c0_86] : memref<4x32x32xbf16, #tpu.memory_space<vmem>>, vector<4x32x32xbf16>
    %c0_87 = arith.constant 0 : index
    %c0_88 = arith.constant 0 : index
    %171 = vector.load %arg21[%c0_87, %c0_88] : memref<1x32xf32, #tpu.memory_space<vmem>>, vector<1x32xf32>
    %172 = vector.extract_strided_slice %169 {offsets = [0, 0, 0], sizes = [1, 3, 4], strides = [1, 1, 1]} : vector<2x3x4xbf16> to vector<1x3x4xbf16>
    %173 = vector.shape_cast %172 : vector<1x3x4xbf16> to vector<3x4xbf16>
    %cst_89 = arith.constant dense<0.000000e+00> : vector<3x32xf32>
    %174 = tpu.matmul %173, %168, %cst_89 {dimension_numbers = #tpu.dot_dimension_numbers<[1], [0], [0], [1], [0, 0, 1, 1], [], []>} : vector<3x4xbf16>, vector<4x32xbf16>, vector<3x32xf32> -> vector<3x32xf32>
    %175 = arith.truncf %174 : vector<3x32xf32> to vector<3x32xbf16>
    %176 = vector.extract_strided_slice %169 {offsets = [1, 0, 0], sizes = [1, 3, 4], strides = [1, 1, 1]} : vector<2x3x4xbf16> to vector<1x3x4xbf16>
    %177 = vector.shape_cast %176 : vector<1x3x4xbf16> to vector<3x4xbf16>
    %cst_90 = arith.constant dense<0.000000e+00> : vector<3x32xf32>
    %178 = tpu.matmul %177, %168, %cst_90 {dimension_numbers = #tpu.dot_dimension_numbers<[1], [0], [0], [1], [0, 0, 1, 1], [], []>} : vector<3x4xbf16>, vector<4x32xbf16>, vector<3x32xf32> -> vector<3x32xf32>
    %179 = arith.truncf %178 : vector<3x32xf32> to vector<3x32xbf16>
    %180 = vector.extract_strided_slice %175 {offsets = [0, 0], sizes = [2, 32], strides = [1, 1]} : vector<3x32xbf16> to vector<2x32xbf16>
    %181 = vector.extract_strided_slice %170 {offsets = [0, 0, 0], sizes = [1, 32, 32], strides = [1, 1, 1]} : vector<4x32x32xbf16> to vector<1x32x32xbf16>
    %182 = vector.shape_cast %181 : vector<1x32x32xbf16> to vector<32x32xbf16>
    %cst_91 = arith.constant dense<0.000000e+00> : vector<2x32xf32>
    %183 = tpu.matmul %180, %182, %cst_91 {dimension_numbers = #tpu.dot_dimension_numbers<[1], [0], [0], [1], [0, 0, 1, 1], [], []>} : vector<2x32xbf16>, vector<32x32xbf16>, vector<2x32xf32> -> vector<2x32xf32>
    %184 = vector.extract_strided_slice %179 {offsets = [0, 0], sizes = [2, 32], strides = [1, 1]} : vector<3x32xbf16> to vector<2x32xbf16>
    %185 = vector.extract_strided_slice %170 {offsets = [1, 0, 0], sizes = [1, 32, 32], strides = [1, 1, 1]} : vector<4x32x32xbf16> to vector<1x32x32xbf16>
    %186 = vector.shape_cast %185 : vector<1x32x32xbf16> to vector<32x32xbf16>
    %cst_92 = arith.constant dense<0.000000e+00> : vector<2x32xf32>
    %187 = tpu.matmul %184, %186, %cst_92 {dimension_numbers = #tpu.dot_dimension_numbers<[1], [0], [0], [1], [0, 0, 1, 1], [], []>} : vector<2x32xbf16>, vector<32x32xbf16>, vector<2x32xf32> -> vector<2x32xf32>
    %188 = arith.addf %183, %187 : vector<2x32xf32>
    %189 = vector.extract_strided_slice %175 {offsets = [1, 0], sizes = [2, 32], strides = [1, 1]} : vector<3x32xbf16> to vector<2x32xbf16>
    %190 = vector.extract_strided_slice %170 {offsets = [2, 0, 0], sizes = [1, 32, 32], strides = [1, 1, 1]} : vector<4x32x32xbf16> to vector<1x32x32xbf16>
    %191 = vector.shape_cast %190 : vector<1x32x32xbf16> to vector<32x32xbf16>
    %cst_93 = arith.constant dense<0.000000e+00> : vector<2x32xf32>
    %192 = tpu.matmul %189, %191, %cst_93 {dimension_numbers = #tpu.dot_dimension_numbers<[1], [0], [0], [1], [0, 0, 1, 1], [], []>} : vector<2x32xbf16>, vector<32x32xbf16>, vector<2x32xf32> -> vector<2x32xf32>
    %193 = arith.addf %188, %192 : vector<2x32xf32>
    %194 = vector.extract_strided_slice %179 {offsets = [1, 0], sizes = [2, 32], strides = [1, 1]} : vector<3x32xbf16> to vector<2x32xbf16>
    %195 = vector.extract_strided_slice %170 {offsets = [3, 0, 0], sizes = [1, 32, 32], strides = [1, 1, 1]} : vector<4x32x32xbf16> to vector<1x32x32xbf16>
    %196 = vector.shape_cast %195 : vector<1x32x32xbf16> to vector<32x32xbf16>
    %cst_94 = arith.constant dense<0.000000e+00> : vector<2x32xf32>
    %197 = tpu.matmul %194, %196, %cst_94 {dimension_numbers = #tpu.dot_dimension_numbers<[1], [0], [0], [1], [0, 0, 1, 1], [], []>} : vector<2x32xbf16>, vector<32x32xbf16>, vector<2x32xf32> -> vector<2x32xf32>
    %198 = arith.addf %193, %197 : vector<2x32xf32>
    %199 = vector.broadcast %171 : vector<1x32xf32> to vector<2x32xf32>
    %200 = arith.addf %198, %199 : vector<2x32xf32>
    %cst_95 = arith.constant 0.000000e+00 : f32
    %201 = vector.broadcast %cst_95 : f32 to vector<2x32xf32>
    %202 = arith.cmpf oge, %200, %201 : vector<2x32xf32>
    %cst_96 = arith.constant 2.000000e-01 : f32
    %203 = vector.broadcast %cst_96 : f32 to vector<2x32xf32>
    %204 = arith.mulf %203, %200 : vector<2x32xf32>
    %205 = arith.select %202, %200, %204 : vector<2x32xi1>, vector<2x32xf32>
    %206 = arith.truncf %205 : vector<2x32xf32> to vector<2x32xbf16>
    %c0_97 = arith.constant 0 : index
    %c0_98 = arith.constant 0 : index
    %c0_99 = arith.constant 0 : index
    %207 = vector.load %arg22[%c0_97, %c0_98, %c0_99] : memref<2x2x2xbf16, #tpu.memory_space<vmem>>, vector<2x2x2xbf16>
    %c0_100 = arith.constant 0 : index
    %c0_101 = arith.constant 0 : index
    %c0_102 = arith.constant 0 : index
    %208 = vector.load %arg23[%c0_100, %c0_101, %c0_102] : memref<4x32x32xbf16, #tpu.memory_space<vmem>>, vector<4x32x32xbf16>
    %c0_103 = arith.constant 0 : index
    %c0_104 = arith.constant 0 : index
    %209 = vector.load %arg24[%c0_103, %c0_104] : memref<1x32xf32, #tpu.memory_space<vmem>>, vector<1x32xf32>
    %210 = vector.extract_strided_slice %207 {offsets = [0, 0, 0], sizes = [1, 2, 2], strides = [1, 1, 1]} : vector<2x2x2xbf16> to vector<1x2x2xbf16>
    %211 = vector.shape_cast %210 : vector<1x2x2xbf16> to vector<2x2xbf16>
    %cst_105 = arith.constant dense<0.000000e+00> : vector<2x32xf32>
    %212 = tpu.matmul %211, %206, %cst_105 {dimension_numbers = #tpu.dot_dimension_numbers<[1], [0], [0], [1], [0, 0, 1, 1], [], []>} : vector<2x2xbf16>, vector<2x32xbf16>, vector<2x32xf32> -> vector<2x32xf32>
    %213 = arith.truncf %212 : vector<2x32xf32> to vector<2x32xbf16>
    %214 = vector.extract_strided_slice %207 {offsets = [1, 0, 0], sizes = [1, 2, 2], strides = [1, 1, 1]} : vector<2x2x2xbf16> to vector<1x2x2xbf16>
    %215 = vector.shape_cast %214 : vector<1x2x2xbf16> to vector<2x2xbf16>
    %cst_106 = arith.constant dense<0.000000e+00> : vector<2x32xf32>
    %216 = tpu.matmul %215, %206, %cst_106 {dimension_numbers = #tpu.dot_dimension_numbers<[1], [0], [0], [1], [0, 0, 1, 1], [], []>} : vector<2x2xbf16>, vector<2x32xbf16>, vector<2x32xf32> -> vector<2x32xf32>
    %217 = arith.truncf %216 : vector<2x32xf32> to vector<2x32xbf16>
    %218 = vector.extract_strided_slice %213 {offsets = [0, 0], sizes = [1, 32], strides = [1, 1]} : vector<2x32xbf16> to vector<1x32xbf16>
    %219 = vector.extract_strided_slice %208 {offsets = [0, 0, 0], sizes = [1, 32, 32], strides = [1, 1, 1]} : vector<4x32x32xbf16> to vector<1x32x32xbf16>
    %220 = vector.shape_cast %219 : vector<1x32x32xbf16> to vector<32x32xbf16>
    %cst_107 = arith.constant dense<0.000000e+00> : vector<1x32xf32>
    %221 = tpu.matmul %218, %220, %cst_107 {dimension_numbers = #tpu.dot_dimension_numbers<[1], [0], [0], [1], [0, 0, 1, 1], [], []>} : vector<1x32xbf16>, vector<32x32xbf16>, vector<1x32xf32> -> vector<1x32xf32>
    %222 = vector.extract_strided_slice %217 {offsets = [0, 0], sizes = [1, 32], strides = [1, 1]} : vector<2x32xbf16> to vector<1x32xbf16>
    %223 = vector.extract_strided_slice %208 {offsets = [1, 0, 0], sizes = [1, 32, 32], strides = [1, 1, 1]} : vector<4x32x32xbf16> to vector<1x32x32xbf16>
    %224 = vector.shape_cast %223 : vector<1x32x32xbf16> to vector<32x32xbf16>
    %cst_108 = arith.constant dense<0.000000e+00> : vector<1x32xf32>
    %225 = tpu.matmul %222, %224, %cst_108 {dimension_numbers = #tpu.dot_dimension_numbers<[1], [0], [0], [1], [0, 0, 1, 1], [], []>} : vector<1x32xbf16>, vector<32x32xbf16>, vector<1x32xf32> -> vector<1x32xf32>
    %226 = arith.addf %221, %225 : vector<1x32xf32>
    %227 = vector.extract_strided_slice %213 {offsets = [1, 0], sizes = [1, 32], strides = [1, 1]} : vector<2x32xbf16> to vector<1x32xbf16>
    %228 = vector.extract_strided_slice %208 {offsets = [2, 0, 0], sizes = [1, 32, 32], strides = [1, 1, 1]} : vector<4x32x32xbf16> to vector<1x32x32xbf16>
    %229 = vector.shape_cast %228 : vector<1x32x32xbf16> to vector<32x32xbf16>
    %cst_109 = arith.constant dense<0.000000e+00> : vector<1x32xf32>
    %230 = tpu.matmul %227, %229, %cst_109 {dimension_numbers = #tpu.dot_dimension_numbers<[1], [0], [0], [1], [0, 0, 1, 1], [], []>} : vector<1x32xbf16>, vector<32x32xbf16>, vector<1x32xf32> -> vector<1x32xf32>
    %231 = arith.addf %226, %230 : vector<1x32xf32>
    %232 = vector.extract_strided_slice %217 {offsets = [1, 0], sizes = [1, 32], strides = [1, 1]} : vector<2x32xbf16> to vector<1x32xbf16>
    %233 = vector.extract_strided_slice %208 {offsets = [3, 0, 0], sizes = [1, 32, 32], strides = [1, 1, 1]} : vector<4x32x32xbf16> to vector<1x32x32xbf16>
    %234 = vector.shape_cast %233 : vector<1x32x32xbf16> to vector<32x32xbf16>
    %cst_110 = arith.constant dense<0.000000e+00> : vector<1x32xf32>
    %235 = tpu.matmul %232, %234, %cst_110 {dimension_numbers = #tpu.dot_dimension_numbers<[1], [0], [0], [1], [0, 0, 1, 1], [], []>} : vector<1x32xbf16>, vector<32x32xbf16>, vector<1x32xf32> -> vector<1x32xf32>
    %236 = arith.addf %231, %235 : vector<1x32xf32>
    %237 = arith.addf %236, %209 : vector<1x32xf32>
    %cst_111 = arith.constant 0.000000e+00 : f32
    %238 = vector.broadcast %cst_111 : f32 to vector<1x32xf32>
    %239 = arith.cmpf oge, %237, %238 : vector<1x32xf32>
    %cst_112 = arith.constant 2.000000e-01 : f32
    %240 = vector.broadcast %cst_112 : f32 to vector<1x32xf32>
    %241 = arith.mulf %240, %237 : vector<1x32xf32>
    %242 = arith.select %239, %237, %241 : vector<1x32xi1>, vector<1x32xf32>
    %243 = arith.truncf %242 : vector<1x32xf32> to vector<1x32xbf16>
    %c0_113 = arith.constant 0 : index
    %c0_114 = arith.constant 0 : index
    %244 = vector.load %arg25[%c0_113, %c0_114] : memref<32x1xbf16, #tpu.memory_space<vmem>>, vector<32x1xbf16>
    %c0_115 = arith.constant 0 : index
    %c0_116 = arith.constant 0 : index
    %245 = vector.load %arg26[%c0_115, %c0_116] : memref<1x1xf32, #tpu.memory_space<vmem>>, vector<1x1xf32>
    %cst_117 = arith.constant dense<0.000000e+00> : vector<1x1xf32>
    %246 = tpu.matmul %243, %244, %cst_117 {dimension_numbers = #tpu.dot_dimension_numbers<[1], [0], [0], [1], [0, 0, 1, 1], [], []>} : vector<1x32xbf16>, vector<32x1xbf16>, vector<1x1xf32> -> vector<1x1xf32>
    %247 = arith.addf %246, %245 : vector<1x1xf32>
    %248 = vector.shape_cast %247 : vector<1x1xf32> to vector<1x1x1xf32>
    %c0_118 = arith.constant 0 : index
    %c0_119 = arith.constant 0 : index
    %c0_120 = arith.constant 0 : index
    %249 = vector.load %arg28[%c0_118, %c0_119, %c0_120] : memref<1x1x1xf32, #tpu.memory_space<vmem>>, vector<1x1x1xf32>
    tpu.vector_store %arg28[%c0_118, %c0_119, %c0_120], %248 {strides = array<i32>} : memref<1x1x1xf32, #tpu.memory_space<vmem>>, vector<1x1x1xf32>,
    return
  }
  func.func @transform_0(%arg0: i32) -> (i32, i32, i32) {
    %c0_i32 = arith.constant 0 : i32
    %c0_i32_0 = arith.constant 0 : i32
    %c0_i32_1 = arith.constant 0 : i32
    return %arg0, %c0_i32, %c0_i32_0 : i32, i32, i32
  }
  func.func @transform_1(%arg0: i32) -> (i32, i32, i32) {
    %c0_i32 = arith.constant 0 : i32
    %c0_i32_0 = arith.constant 0 : i32
    %c0_i32_1 = arith.constant 0 : i32
    %c0_i32_2 = arith.constant 0 : i32
    return %c0_i32, %c0_i32_0, %c0_i32_1 : i32, i32, i32
  }
  func.func @transform_2(%arg0: i32) -> (i32, i32, i32) {
    %c0_i32 = arith.constant 0 : i32
    %c0_i32_0 = arith.constant 0 : i32
    %c0_i32_1 = arith.constant 0 : i32
    %c0_i32_2 = arith.constant 0 : i32
    return %c0_i32, %c0_i32_0, %c0_i32_1 : i32, i32, i32
  }
  func.func @transform_3(%arg0: i32) -> (i32, i32) {
    %c0_i32 = arith.constant 0 : i32
    %c0_i32_0 = arith.constant 0 : i32
    %c0_i32_1 = arith.constant 0 : i32
    return %c0_i32, %c0_i32_0 : i32, i32
  }
  func.func @transform_4(%arg0: i32) -> (i32, i32, i32) {
    %c0_i32 = arith.constant 0 : i32
    %c0_i32_0 = arith.constant 0 : i32
    %c0_i32_1 = arith.constant 0 : i32
    %c0_i32_2 = arith.constant 0 : i32
    return %c0_i32, %c0_i32_0, %c0_i32_1 : i32, i32, i32
  }
  func.func @transform_5(%arg0: i32) -> (i32, i32, i32) {
    %c0_i32 = arith.constant 0 : i32
    %c0_i32_0 = arith.constant 0 : i32
    %c0_i32_1 = arith.constant 0 : i32
    %c0_i32_2 = arith.constant 0 : i32
    return %c0_i32, %c0_i32_0, %c0_i32_1 : i32, i32, i32
  }
  func.func @transform_6(%arg0: i32) -> (i32, i32) {
    %c0_i32 = arith.constant 0 : i32
    %c0_i32_0 = arith.constant 0 : i32
    %c0_i32_1 = arith.constant 0 : i32
    return %c0_i32, %c0_i32_0 : i32, i32
  }
  func.func @transform_7(%arg0: i32) -> (i32, i32, i32) {
    %c0_i32 = arith.constant 0 : i32
    %c0_i32_0 = arith.constant 0 : i32
    %c0_i32_1 = arith.constant 0 : i32
    %c0_i32_2 = arith.constant 0 : i32
    return %c0_i32, %c0_i32_0, %c0_i32_1 : i32, i32, i32
  }
  func.func @transform_8(%arg0: i32) -> (i32, i32, i32) {
    %c0_i32 = arith.constant 0 : i32
    %c0_i32_0 = arith.constant 0 : i32
    %c0_i32_1 = arith.constant 0 : i32
    %c0_i32_2 = arith.constant 0 : i32
    return %c0_i32, %c0_i32_0, %c0_i32_1 : i32, i32, i32
  }
  func.func @transform_9(%arg0: i32) -> (i32, i32) {
    %c0_i32 = arith.constant 0 : i32
    %c0_i32_0 = arith.constant 0 : i32
    %c0_i32_1 = arith.constant 0 : i32
    return %c0_i32, %c0_i32_0 : i32, i32
  }
  func.func @transform_10(%arg0: i32) -> (i32, i32) {
    %c0_i32 = arith.constant 0 : i32
    %c0_i32_0 = arith.constant 0 : i32
    %c0_i32_1 = arith.constant 0 : i32
    return %c0_i32, %c0_i32_0 : i32, i32
  }
  func.func @transform_11(%arg0: i32) -> (i32, i32) {
    %c0_i32 = arith.constant 0 : i32
    %c0_i32_0 = arith.constant 0 : i32
    %c0_i32_1 = arith.constant 0 : i32
    return %c0_i32, %c0_i32_0 : i32, i32
  }
  func.func @transform_12(%arg0: i32) -> (i32, i32) {
    %c0_i32 = arith.constant 0 : i32
    %c0_i32_0 = arith.constant 0 : i32
    %c0_i32_1 = arith.constant 0 : i32
    return %c0_i32, %c0_i32_0 : i32, i32
  }
  func.func @transform_13(%arg0: i32) -> (i32, i32) {
    %c0_i32 = arith.constant 0 : i32
    %c0_i32_0 = arith.constant 0 : i32
    %c0_i32_1 = arith.constant 0 : i32
    return %c0_i32, %c0_i32_0 : i32, i32
  }
  func.func @transform_14(%arg0: i32) -> (i32, i32) {
    %c0_i32 = arith.constant 0 : i32
    %c0_i32_0 = arith.constant 0 : i32
    %c0_i32_1 = arith.constant 0 : i32
    return %c0_i32, %c0_i32_0 : i32, i32
  }
  func.func @transform_15(%arg0: i32) -> (i32, i32, i32) {
    %c0_i32 = arith.constant 0 : i32
    %c0_i32_0 = arith.constant 0 : i32
    %c0_i32_1 = arith.constant 0 : i32
    %c0_i32_2 = arith.constant 0 : i32
    return %c0_i32, %c0_i32_0, %c0_i32_1 : i32, i32, i32
  }
  func.func @transform_16(%arg0: i32) -> (i32, i32, i32) {
    %c0_i32 = arith.constant 0 : i32
    %c0_i32_0 = arith.constant 0 : i32
    %c0_i32_1 = arith.constant 0 : i32
    %c0_i32_2 = arith.constant 0 : i32
    return %c0_i32, %c0_i32_0, %c0_i32_1 : i32, i32, i32
  }
  func.func @transform_17(%arg0: i32) -> (i32, i32) {
    %c0_i32 = arith.constant 0 : i32
    %c0_i32_0 = arith.constant 0 : i32
    %c0_i32_1 = arith.constant 0 : i32
    return %c0_i32, %c0_i32_0 : i32, i32
  }
  func.func @transform_18(%arg0: i32) -> (i32, i32, i32) {
    %c0_i32 = arith.constant 0 : i32
    %c0_i32_0 = arith.constant 0 : i32
    %c0_i32_1 = arith.constant 0 : i32
    %c0_i32_2 = arith.constant 0 : i32
    return %c0_i32, %c0_i32_0, %c0_i32_1 : i32, i32, i32
  }
  func.func @transform_19(%arg0: i32) -> (i32, i32, i32) {
    %c0_i32 = arith.constant 0 : i32
    %c0_i32_0 = arith.constant 0 : i32
    %c0_i32_1 = arith.constant 0 : i32
    %c0_i32_2 = arith.constant 0 : i32
    return %c0_i32, %c0_i32_0, %c0_i32_1 : i32, i32, i32
  }
  func.func @transform_20(%arg0: i32) -> (i32, i32) {
    %c0_i32 = arith.constant 0 : i32
    %c0_i32_0 = arith.constant 0 : i32
    %c0_i32_1 = arith.constant 0 : i32
    return %c0_i32, %c0_i32_0 : i32, i32
  }
  func.func @transform_21(%arg0: i32) -> (i32, i32, i32) {
    %c0_i32 = arith.constant 0 : i32
    %c0_i32_0 = arith.constant 0 : i32
    %c0_i32_1 = arith.constant 0 : i32
    %c0_i32_2 = arith.constant 0 : i32
    return %c0_i32, %c0_i32_0, %c0_i32_1 : i32, i32, i32
  }
  func.func @transform_22(%arg0: i32) -> (i32, i32, i32) {
    %c0_i32 = arith.constant 0 : i32
    %c0_i32_0 = arith.constant 0 : i32
    %c0_i32_1 = arith.constant 0 : i32
    %c0_i32_2 = arith.constant 0 : i32
    return %c0_i32, %c0_i32_0, %c0_i32_1 : i32, i32, i32
  }
  func.func @transform_23(%arg0: i32) -> (i32, i32) {
    %c0_i32 = arith.constant 0 : i32
    %c0_i32_0 = arith.constant 0 : i32
    %c0_i32_1 = arith.constant 0 : i32
    return %c0_i32, %c0_i32_0 : i32, i32
  }
  func.func @transform_24(%arg0: i32) -> (i32, i32) {
    %c0_i32 = arith.constant 0 : i32
    %c0_i32_0 = arith.constant 0 : i32
    %c0_i32_1 = arith.constant 0 : i32
    return %c0_i32, %c0_i32_0 : i32, i32
  }
  func.func @transform_25(%arg0: i32) -> (i32, i32) {
    %c0_i32 = arith.constant 0 : i32
    %c0_i32_0 = arith.constant 0 : i32
    %c0_i32_1 = arith.constant 0 : i32
    return %c0_i32, %c0_i32_0 : i32, i32
  }
  func.func @transform_26(%arg0: i32) -> (i32, i32, i32) {
    %c0_i32 = arith.constant 0 : i32
    %c0_i32_0 = arith.constant 0 : i32
    %c0_i32_1 = arith.constant 0 : i32
    return %arg0, %c0_i32, %c0_i32_0 : i32, i32, i32
  }
  func.func @transform_27(%arg0: i32) -> (i32, i32, i32) {
    %c0_i32 = arith.constant 0 : i32
    %c0_i32_0 = arith.constant 0 : i32
    %c0_i32_1 = arith.constant 0 : i32
    return %arg0, %c0_i32, %c0_i32_0 : i32, i32, i32
  }
}

</mosaic_0001>

<llo_original>
// kernel: multiscale_discriminator_forward.1
$region0: #{multiscale_discriminator_forward.1}
  #allocation0 [shape = 'u32[]', space=smem, size = 0x4, offset = 0x4, fixed_abs, tag = 'smem constant byte address 0x4 - core index']
  #allocation1 [shape = 'u32[144,128]{1,0:T(1,128)}', space=vmem, size = 0x12000, scoped, tag = 'internal scratch']
  #allocation2 [shape = 'f32[1,1]{1,0:T(1,128)S(1)}', space=vmem, size = 0x200, scoped, tag = 'scoped memory for multiscale_discriminator_forward.1']
  %s0 = inlined_call_operand.vmem [shape: bf16[2,16,64], index: 0, kind: input, shape index: {}]
  %s1 = inlined_call_operand.vmem [shape: bf16[2,9,16], index: 1, kind: input, shape index: {}]
  %s2 = inlined_call_operand.vmem [shape: bf16[4,64,64], index: 2, kind: input, shape index: {}]
  %s3 = inlined_call_operand.vmem [shape: f32[1,64], index: 3, kind: input, shape index: {}]
  %s4 = inlined_call_operand.vmem [shape: bf16[2,5,8], index: 4, kind: input, shape index: {}, may-alias: {4,15}]
  %s5 = inlined_call_operand.vmem [shape: bf16[4,64,64], index: 5, kind: input, shape index: {}]
  %s6 = inlined_call_operand.vmem [shape: f32[1,64], index: 6, kind: input, shape index: {}]
  %s7 = inlined_call_operand.vmem [shape: bf16[2,3,4], index: 7, kind: input, shape index: {}, may-alias: {7,18}]
  %s8 = inlined_call_operand.vmem [shape: bf16[4,64,64], index: 8, kind: input, shape index: {}]
  %s9 = inlined_call_operand.vmem [shape: f32[1,64], index: 9, kind: input, shape index: {}]
  %s10 = inlined_call_operand.vmem [shape: bf16[64,2], index: 10, kind: input, shape index: {}]
  %s11 = inlined_call_operand.vmem [shape: f32[1,2], index: 11, kind: input, shape index: {}]
  %s12 = inlined_call_operand.vmem [shape: bf16[8,16], index: 12, kind: input, shape index: {}]
  %s13 = inlined_call_operand.vmem [shape: bf16[64,32], index: 13, kind: input, shape index: {}]
  %s14 = inlined_call_operand.vmem [shape: f32[8,32], index: 14, kind: input, shape index: {}]
  %s15 = inlined_call_operand.vmem [shape: bf16[2,5,8], index: 15, kind: input, shape index: {}, may-alias: {4,15}]
  %s16 = inlined_call_operand.vmem [shape: bf16[4,32,32], index: 16, kind: input, shape index: {}]
  %s17 = inlined_call_operand.vmem [shape: f32[1,32], index: 17, kind: input, shape index: {}]
  %s18 = inlined_call_operand.vmem [shape: bf16[2,3,4], index: 18, kind: input, shape index: {}, may-alias: {7,18}]
  %s19 = inlined_call_operand.vmem [shape: bf16[4,32,32], index: 19, kind: input, shape index: {}]
  %s20 = inlined_call_operand.vmem [shape: f32[1,32], index: 20, kind: input, shape index: {}]
  %s21 = inlined_call_operand.vmem [shape: bf16[2,2,2], index: 21, kind: input, shape index: {}]
  %s22 = inlined_call_operand.vmem [shape: bf16[4,32,32], index: 22, kind: input, shape index: {}]
  %s23 = inlined_call_operand.vmem [shape: f32[1,32], index: 23, kind: input, shape index: {}]
  %s24 = inlined_call_operand.vmem [shape: bf16[32,1], index: 24, kind: input, shape index: {}]
  %s25 = inlined_call_operand.<no memory space> [shape: f32[1,1], index: 25, kind: input, shape index: {}]
  %s26 = inlined_call_operand.hbm [shape: f32[2,2,2], index: 26, kind: output, shape index: {0}]
  %s27 = inlined_call_operand.vmem [shape: f32[2,1,1], index: 27, kind: output, shape index: {1}]
  %28 = xla_tuple %s26, %s27
  %s29 = sld [smem:[#allocation0]]
  $region145: #{multiscale_discriminator_forward.1} parent=0
    _
  %s31 = ssub.s32 1, %s29
  %s32 = scalar_select 0, %s31, %s29
  %v33 = vstv %s25
  %34 = vst [vmem:[#allocation2] sm:$0x1] %v33
  $region1: #{multiscale_discriminator_forward.1} parent=0
    #allocation3 [shape = 'u8[2048]{0}', space=vmem, size = 0x800, scoped, tag = 'output window, operand 0']
    #allocation4 [shape = 's32[2]{0}', space=sflag, size = 0x8, scoped, tag = 'scoped memory for multiscale_discriminator_forward.1']
    %35 = vsyncpa [#allocation4], 0
    %s36 = scalar_lea.sflag [#allocation4], 1
    %37 = vsyncpa %s36, 0
    loop: start=0, step=1, limit=4
    $region2: #{multiscale_discriminator_forward.1} parent=1 // loop_pre_header
      _
    $region3: #{multiscale_discriminator_forward.1} parent=1 // loop_header
      %s39 = sphi 0, %s43
      %p40 = scmp.ge.s32.totalorder %s39, 4
      %s49 = sphi 0, %s51
      %s52 = sphi 0, %s49
      %s53 = sphi 0, %s52
      %s69 = sphi 0, %s53
      %s73 = sphi 0, %s73
      %s75 = sphi 0, %s73
      %s76 = sphi 0, %s75
      %s90 = sphi 0, %s76
      %s94 = sphi 0, %s94
      %s96 = sphi 0, %s94
      %s97 = sphi 0, %s96
      %s111 = sphi 0, %s97
      %s115 = sphi 0, %s115
      %s117 = sphi 0, %s115
      %s118 = sphi 0, %s117
      %s132 = sphi 0, %s118
      %s136 = sphi 0, %s136
      %s138 = sphi 0, %s136
      %s139 = sphi 0, %s138
      %s153 = sphi 0, %s139
      %s157 = sphi 0, %s157
      %s159 = sphi 0, %s157
      %s160 = sphi 0, %s159
      %s174 = sphi 0, %s160
      %s178 = sphi 0, %s178
      %s180 = sphi 0, %s178
      %s181 = sphi 0, %s180
      %s195 = sphi 0, %s181
      %s199 = sphi 0, %s199
      %s201 = sphi 0, %s199
      %s202 = sphi 0, %s201
      %s216 = sphi 0, %s202
      %s220 = sphi 0, %s220
      %s222 = sphi 0, %s220
      %s223 = sphi 0, %s222
      %s237 = sphi 0, %s223
      %s241 = sphi 0, %s241
      %s243 = sphi 0, %s241
      %s244 = sphi 0, %s243
      %s258 = sphi 0, %s244
      %s262 = sphi 0, %s262
      %s264 = sphi 0, %s262
      %s265 = sphi 0, %s264
      %s279 = sphi 0, %s265
      %s283 = sphi 0, %s283
      %s285 = sphi 0, %s283
      %s286 = sphi 0, %s285
      %s300 = sphi 0, %s286
      %s304 = sphi 0, %s304
      %s306 = sphi 0, %s304
      %s307 = sphi 0, %s306
      %s321 = sphi 0, %s307
      %s325 = sphi 0, %s325
      %s327 = sphi 0, %s325
      %s328 = sphi 0, %s327
      %s342 = sphi 0, %s328
      %s346 = sphi 0, %s346
      %s348 = sphi 0, %s346
      %s349 = sphi 0, %s348
      %s363 = sphi 0, %s349
      %s367 = sphi 0, %s367
      %s369 = sphi 0, %s367
      %s370 = sphi 0, %s369
      %s384 = sphi 0, %s370
      %s388 = sphi 0, %s388
      %s390 = sphi 0, %s388
      %s391 = sphi 0, %s390
      %s405 = sphi 0, %s391
      %s409 = sphi 0, %s409
      %s411 = sphi 0, %s409
      %s412 = sphi 0, %s411
      %s426 = sphi 0, %s412
      %s430 = sphi 0, %s430
      %s432 = sphi 0, %s430
      %s433 = sphi 0, %s432
      %s447 = sphi 0, %s433
      %s451 = sphi 0, %s451
      %s453 = sphi 0, %s451
      %s454 = sphi 0, %s453
      %s468 = sphi 0, %s454
      %s472 = sphi 0, %s472
      %s474 = sphi 0, %s472
      %s475 = sphi 0, %s474
      %s489 = sphi 0, %s475
      %s493 = sphi 0, %s493
      %s495 = sphi 0, %s493
      %s496 = sphi 0, %s495
      %s510 = sphi 0, %s496
      %s514 = sphi 0, %s514
      %s516 = sphi 0, %s514
      %s517 = sphi 0, %s516
      %s531 = sphi 0, %s517
      %s535 = sphi 0, %s535
      %s537 = sphi 0, %s535
      %s538 = sphi 0, %s537
      %s552 = sphi 0, %s538
      %s556 = sphi 0, %s556
      %s558 = sphi 0, %s556
      %s559 = sphi 0, %s558
      %s573 = sphi 0, %s559
      %s577 = sphi 0, %s577
      %s579 = sphi 0, %s577
      %s580 = sphi 0, %s579
      %s594 = sphi 0, %s580
      %s600 = sphi 0, %s602
      %s603 = sphi 0, %s600
      %s604 = sphi 0, %s603
      %s620 = sphi 0, %s604
      %s626 = sphi 0, %s628
      %s629 = sphi 0, %s626
      %s630 = sphi 0, %s629
      %s646 = sphi 0, %s630
    $region4: #{multiscale_discriminator_forward.1} parent=1 // loop_header_branch
      %42 = sbr.rel (%p40) target = $region8
    $region5: #{multiscale_discriminator_forward.1} parent=1 // loop_body
      %s44 = ssub.s32 %s39, 1
      %s45 = ssub.s32 %s39, 2
      %s46 = sadd.s32 %s39, 1
      %s47 = ssub.s32 %s39, %s46
      %p48 = scmp.eq.s32.totalorder %s47, 0
      %s50 = sadd.s32 %s49, 1
      %s51 = scalar_select %p48, %s49, %s50
      %p54 = pneg %p48
      %p55 = scmp.eq.s32.totalorder %s39, 1
      %p56 = por %p54, %p55
      %p57 = scmp.ne.s32.totalorder %s49, %s52
      %p58 = scmp.eq.s32.totalorder %s39, 0
      %p59 = por %p57, %p58
      %p60 = scmp.ne.s32.totalorder %s49, %s52
      %p61 = scmp.eq.s32.totalorder %s44, 1
      %p62 = por %p60, %p61
      %p63 = scmp.ne.s32.totalorder %s52, %s53
      %p64 = scmp.eq.s32.totalorder %s44, 0
      %p65 = por %p63, %p64
      %p66 = scmp.ne.s32.totalorder %s52, %s53
      %p67 = scmp.eq.s32.totalorder %s45, 1
      %p68 = por %p66, %p67
      %p70 = scmp.ne.s32.totalorder %s53, %s69
      %p71 = scmp.eq.s32.totalorder %s45, 0
      %p72 = por %p70, %p71
      %s74 = sadd.s32 %s73, 1
      %p77 = scmp.eq.s32.totalorder %s39, 1
      %p78 = scmp.ne.s32.totalorder %s73, %s75
      %p79 = scmp.eq.s32.totalorder %s39, 0
      %p80 = por %p78, %p79
      %p81 = scmp.ne.s32.totalorder %s73, %s75
      %p82 = scmp.eq.s32.totalorder %s44, 1
      %p83 = por %p81, %p82
      %p84 = scmp.ne.s32.totalorder %s75, %s76
      %p85 = scmp.eq.s32.totalorder %s44, 0
      %p86 = por %p84, %p85
      %p87 = scmp.ne.s32.totalorder %s75, %s76
      %p88 = scmp.eq.s32.totalorder %s45, 1
      %p89 = por %p87, %p88
      %p91 = scmp.ne.s32.totalorder %s76, %s90
      %p92 = scmp.eq.s32.totalorder %s45, 0
      %p93 = por %p91, %p92
      %s95 = sadd.s32 %s94, 1
      %p98 = scmp.eq.s32.totalorder %s39, 1
      %p99 = scmp.ne.s32.totalorder %s94, %s96
      %p100 = scmp.eq.s32.totalorder %s39, 0
      %p101 = por %p99, %p100
      %p102 = scmp.ne.s32.totalorder %s94, %s96
      %p103 = scmp.eq.s32.totalorder %s44, 1
      %p104 = por %p102, %p103
      %p105 = scmp.ne.s32.totalorder %s96, %s97
      %p106 = scmp.eq.s32.totalorder %s44, 0
      %p107 = por %p105, %p106
      %p108 = scmp.ne.s32.totalorder %s96, %s97
      %p109 = scmp.eq.s32.totalorder %s45, 1
      %p110 = por %p108, %p109
      %p112 = scmp.ne.s32.totalorder %s97, %s111
      %p113 = scmp.eq.s32.totalorder %s45, 0
      %p114 = por %p112, %p113
      %s116 = sadd.s32 %s115, 1
      %p119 = scmp.eq.s32.totalorder %s39, 1
      %p120 = scmp.ne.s32.totalorder %s115, %s117
      %p121 = scmp.eq.s32.totalorder %s39, 0
      %p122 = por %p120, %p121
      %p123 = scmp.ne.s32.totalorder %s115, %s117
      %p124 = scmp.eq.s32.totalorder %s44, 1
      %p125 = por %p123, %p124
      %p126 = scmp.ne.s32.totalorder %s117, %s118
      %p127 = scmp.eq.s32.totalorder %s44, 0
      %p128 = por %p126, %p127
      %p129 = scmp.ne.s32.totalorder %s117, %s118
      %p130 = scmp.eq.s32.totalorder %s45, 1
      %p131 = por %p129, %p130
      %p133 = scmp.ne.s32.totalorder %s118, %s132
      %p134 = scmp.eq.s32.totalorder %s45, 0
      %p135 = por %p133, %p134
      %s137 = sadd.s32 %s136, 1
      %p140 = scmp.eq.s32.totalorder %s39, 1
      %p141 = scmp.ne.s32.totalorder %s136, %s138
      %p142 = scmp.eq.s32.totalorder %s39, 0
      %p143 = por %p141, %p142
      %p144 = scmp.ne.s32.totalorder %s136, %s138
      %p145 = scmp.eq.s32.totalorder %s44, 1
      %p146 = por %p144, %p145
      %p147 = scmp.ne.s32.totalorder %s138, %s139
      %p148 = scmp.eq.s32.totalorder %s44, 0
      %p149 = por %p147, %p148
      %p150 = scmp.ne.s32.totalorder %s138, %s139
      %p151 = scmp.eq.s32.totalorder %s45, 1
      %p152 = por %p150, %p151
      %p154 = scmp.ne.s32.totalorder %s139, %s153
      %p155 = scmp.eq.s32.totalorder %s45, 0
      %p156 = por %p154, %p155
      %s158 = sadd.s32 %s157, 1
      %p161 = scmp.eq.s32.totalorder %s39, 1
      %p162 = scmp.ne.s32.totalorder %s157, %s159
      %p163 = scmp.eq.s32.totalorder %s39, 0
      %p164 = por %p162, %p163
      %p165 = scmp.ne.s32.totalorder %s157, %s159
      %p166 = scmp.eq.s32.totalorder %s44, 1
      %p167 = por %p165, %p166
      %p168 = scmp.ne.s32.totalorder %s159, %s160
      %p169 = scmp.eq.s32.totalorder %s44, 0
      %p170 = por %p168, %p169
      %p171 = scmp.ne.s32.totalorder %s159, %s160
      %p172 = scmp.eq.s32.totalorder %s45, 1
      %p173 = por %p171, %p172
      %p175 = scmp.ne.s32.totalorder %s160, %s174
      %p176 = scmp.eq.s32.totalorder %s45, 0
      %p177 = por %p175, %p176
      %s179 = sadd.s32 %s178, 1
      %p182 = scmp.eq.s32.totalorder %s39, 1
      %p183 = scmp.ne.s32.totalorder %s178, %s180
      %p184 = scmp.eq.s32.totalorder %s39, 0
      %p185 = por %p183, %p184
      %p186 = scmp.ne.s32.totalorder %s178, %s180
      %p187 = scmp.eq.s32.totalorder %s44, 1
      %p188 = por %p186, %p187
      %p189 = scmp.ne.s32.totalorder %s180, %s181
      %p190 = scmp.eq.s32.totalorder %s44, 0
      %p191 = por %p189, %p190
      %p192 = scmp.ne.s32.totalorder %s180, %s181
      %p193 = scmp.eq.s32.totalorder %s45, 1
      %p194 = por %p192, %p193
      %p196 = scmp.ne.s32.totalorder %s181, %s195
      %p197 = scmp.eq.s32.totalorder %s45, 0
      %p198 = por %p196, %p197
      %s200 = sadd.s32 %s199, 1
      %p203 = scmp.eq.s32.totalorder %s39, 1
      %p204 = scmp.ne.s32.totalorder %s199, %s201
      %p205 = scmp.eq.s32.totalorder %s39, 0
      %p206 = por %p204, %p205
      %p207 = scmp.ne.s32.totalorder %s199, %s201
      %p208 = scmp.eq.s32.totalorder %s44, 1
      %p209 = por %p207, %p208
      %p210 = scmp.ne.s32.totalorder %s201, %s202
      %p211 = scmp.eq.s32.totalorder %s44, 0
      %p212 = por %p210, %p211
      %p213 = scmp.ne.s32.totalorder %s201, %s202
      %p214 = scmp.eq.s32.totalorder %s45, 1
      %p215 = por %p213, %p214
      %p217 = scmp.ne.s32.totalorder %s202, %s216
      %p218 = scmp.eq.s32.totalorder %s45, 0
      %p219 = por %p217, %p218
      %s221 = sadd.s32 %s220, 1
      %p224 = scmp.eq.s32.totalorder %s39, 1
      %p225 = scmp.ne.s32.totalorder %s220, %s222
      %p226 = scmp.eq.s32.totalorder %s39, 0
      %p227 = por %p225, %p226
      %p228 = scmp.ne.s32.totalorder %s220, %s222
      %p229 = scmp.eq.s32.totalorder %s44, 1
      %p230 = por %p228, %p229
      %p231 = scmp.ne.s32.totalorder %s222, %s223
      %p232 = scmp.eq.s32.totalorder %s44, 0
      %p233 = por %p231, %p232
      %p234 = scmp.ne.s32.totalorder %s222, %s223
      %p235 = scmp.eq.s32.totalorder %s45, 1
      %p236 = por %p234, %p235
      %p238 = scmp.ne.s32.totalorder %s223, %s237
      %p239 = scmp.eq.s32.totalorder %s45, 0
      %p240 = por %p238, %p239
      %s242 = sadd.s32 %s241, 1
      %p245 = scmp.eq.s32.totalorder %s39, 1
      %p246 = scmp.ne.s32.totalorder %s241, %s243
      %p247 = scmp.eq.s32.totalorder %s39, 0
      %p248 = por %p246, %p247
      %p249 = scmp.ne.s32.totalorder %s241, %s243
      %p250 = scmp.eq.s32.totalorder %s44, 1
      %p251 = por %p249, %p250
      %p252 = scmp.ne.s32.totalorder %s243, %s244
      %p253 = scmp.eq.s32.totalorder %s44, 0
      %p254 = por %p252, %p253
      %p255 = scmp.ne.s32.totalorder %s243, %s244
      %p256 = scmp.eq.s32.totalorder %s45, 1
      %p257 = por %p255, %p256
      %p259 = scmp.ne.s32.totalorder %s244, %s258
      %p260 = scmp.eq.s32.totalorder %s45, 0
      %p261 = por %p259, %p260
      %s263 = sadd.s32 %s262, 1
      %p266 = scmp.eq.s32.totalorder %s39, 1
      %p267 = scmp.ne.s32.totalorder %s262, %s264
      %p268 = scmp.eq.s32.totalorder %s39, 0
      %p269 = por %p267, %p268
      %p270 = scmp.ne.s32.totalorder %s262, %s264
      %p271 = scmp.eq.s32.totalorder %s44, 1
      %p272 = por %p270, %p271
      %p273 = scmp.ne.s32.totalorder %s264, %s265
      %p274 = scmp.eq.s32.totalorder %s44, 0
      %p275 = por %p273, %p274
      %p276 = scmp.ne.s32.totalorder %s264, %s265
      %p277 = scmp.eq.s32.totalorder %s45, 1
      %p278 = por %p276, %p277
      %p280 = scmp.ne.s32.totalorder %s265, %s279
      %p281 = scmp.eq.s32.totalorder %s45, 0
      %p282 = por %p280, %p281
      %s284 = sadd.s32 %s283, 1
      %p287 = scmp.eq.s32.totalorder %s39, 1
      %p288 = scmp.ne.s32.totalorder %s283, %s285
      %p289 = scmp.eq.s32.totalorder %s39, 0
      %p290 = por %p288, %p289
      %p291 = scmp.ne.s32.totalorder %s283, %s285
      %p292 = scmp.eq.s32.totalorder %s44, 1
      %p293 = por %p291, %p292
      %p294 = scmp.ne.s32.totalorder %s285, %s286
      %p295 = scmp.eq.s32.totalorder %s44, 0
      %p296 = por %p294, %p295
      %p297 = scmp.ne.s32.totalorder %s285, %s286
      %p298 = scmp.eq.s32.totalorder %s45, 1
      %p299 = por %p297, %p298
      %p301 = scmp.ne.s32.totalorder %s286, %s300
      %p302 = scmp.eq.s32.totalorder %s45, 0
      %p303 = por %p301, %p302
      %s305 = sadd.s32 %s304, 1
      %p308 = scmp.eq.s32.totalorder %s39, 1
      %p309 = scmp.ne.s32.totalorder %s304, %s306
      %p310 = scmp.eq.s32.totalorder %s39, 0
      %p311 = por %p309, %p310
      %p312 = scmp.ne.s32.totalorder %s304, %s306
      %p313 = scmp.eq.s32.totalorder %s44, 1
      %p314 = por %p312, %p313
      %p315 = scmp.ne.s32.totalorder %s306, %s307
      %p316 = scmp.eq.s32.totalorder %s44, 0
      %p317 = por %p315, %p316
      %p318 = scmp.ne.s32.totalorder %s306, %s307
      %p319 = scmp.eq.s32.totalorder %s45, 1
      %p320 = por %p318, %p319
      %p322 = scmp.ne.s32.totalorder %s307, %s321
      %p323 = scmp.eq.s32.totalorder %s45, 0
      %p324 = por %p322, %p323
      %s326 = sadd.s32 %s325, 1
      %p329 = scmp.eq.s32.totalorder %s39, 1
      %p330 = scmp.ne.s32.totalorder %s325, %s327
      %p331 = scmp.eq.s32.totalorder %s39, 0
      %p332 = por %p330, %p331
      %p333 = scmp.ne.s32.totalorder %s325, %s327
      %p334 = scmp.eq.s32.totalorder %s44, 1
      %p335 = por %p333, %p334
      %p336 = scmp.ne.s32.totalorder %s327, %s328
      %p337 = scmp.eq.s32.totalorder %s44, 0
      %p338 = por %p336, %p337
      %p339 = scmp.ne.s32.totalorder %s327, %s328
      %p340 = scmp.eq.s32.totalorder %s45, 1
      %p341 = por %p339, %p340
      %p343 = scmp.ne.s32.totalorder %s328, %s342
      %p344 = scmp.eq.s32.totalorder %s45, 0
      %p345 = por %p343, %p344
      %s347 = sadd.s32 %s346, 1
      %p350 = scmp.eq.s32.totalorder %s39, 1
      %p351 = scmp.ne.s32.totalorder %s346, %s348
      %p352 = scmp.eq.s32.totalorder %s39, 0
      %p353 = por %p351, %p352
      %p354 = scmp.ne.s32.totalorder %s346, %s348
      %p355 = scmp.eq.s32.totalorder %s44, 1
      %p356 = por %p354, %p355
      %p357 = scmp.ne.s32.totalorder %s348, %s349
      %p358 = scmp.eq.s32.totalorder %s44, 0
      %p359 = por %p357, %p358
      %p360 = scmp.ne.s32.totalorder %s348, %s349
      %p361 = scmp.eq.s32.totalorder %s45, 1
      %p362 = por %p360, %p361
      %p364 = scmp.ne.s32.totalorder %s349, %s363
      %p365 = scmp.eq.s32.totalorder %s45, 0
      %p366 = por %p364, %p365
      %s368 = sadd.s32 %s367, 1
      %p371 = scmp.eq.s32.totalorder %s39, 1
      %p372 = scmp.ne.s32.totalorder %s367, %s369
      %p373 = scmp.eq.s32.totalorder %s39, 0
      %p374 = por %p372, %p373
      %p375 = scmp.ne.s32.totalorder %s367, %s369
      %p376 = scmp.eq.s32.totalorder %s44, 1
      %p377 = por %p375, %p376
      %p378 = scmp.ne.s32.totalorder %s369, %s370
      %p379 = scmp.eq.s32.totalorder %s44, 0
      %p380 = por %p378, %p379
      %p381 = scmp.ne.s32.totalorder %s369, %s370
      %p382 = scmp.eq.s32.totalorder %s45, 1
      %p383 = por %p381, %p382
      %p385 = scmp.ne.s32.totalorder %s370, %s384
      %p386 = scmp.eq.s32.totalorder %s45, 0
      %p387 = por %p385, %p386
      %s389 = sadd.s32 %s388, 1
      %p392 = scmp.eq.s32.totalorder %s39, 1
      %p393 = scmp.ne.s32.totalorder %s388, %s390
      %p394 = scmp.eq.s32.totalorder %s39, 0
      %p395 = por %p393, %p394
      %p396 = scmp.ne.s32.totalorder %s388, %s390
      %p397 = scmp.eq.s32.totalorder %s44, 1
      %p398 = por %p396, %p397
      %p399 = scmp.ne.s32.totalorder %s390, %s391
      %p400 = scmp.eq.s32.totalorder %s44, 0
      %p401 = por %p399, %p400
      %p402 = scmp.ne.s32.totalorder %s390, %s391
      %p403 = scmp.eq.s32.totalorder %s45, 1
      %p404 = por %p402, %p403
      %p406 = scmp.ne.s32.totalorder %s391, %s405
      %p407 = scmp.eq.s32.totalorder %s45, 0
      %p408 = por %p406, %p407
      %s410 = sadd.s32 %s409, 1
      %p413 = scmp.eq.s32.totalorder %s39, 1
      %p414 = scmp.ne.s32.totalorder %s409, %s411
      %p415 = scmp.eq.s32.totalorder %s39, 0
      %p416 = por %p414, %p415
      %p417 = scmp.ne.s32.totalorder %s409, %s411
      %p418 = scmp.eq.s32.totalorder %s44, 1
      %p419 = por %p417, %p418
      %p420 = scmp.ne.s32.totalorder %s411, %s412
      %p421 = scmp.eq.s32.totalorder %s44, 0
      %p422 = por %p420, %p421
      %p423 = scmp.ne.s32.totalorder %s411, %s412
      %p424 = scmp.eq.s32.totalorder %s45, 1
      %p425 = por %p423, %p424
      %p427 = scmp.ne.s32.totalorder %s412, %s426
      %p428 = scmp.eq.s32.totalorder %s45, 0
      %p429 = por %p427, %p428
      %s431 = sadd.s32 %s430, 1
      %p434 = scmp.eq.s32.totalorder %s39, 1
      %p435 = scmp.ne.s32.totalorder %s430, %s432
      %p436 = scmp.eq.s32.totalorder %s39, 0
      %p437 = por %p435, %p436
      %p438 = scmp.ne.s32.totalorder %s430, %s432
      %p439 = scmp.eq.s32.totalorder %s44, 1
      %p440 = por %p438, %p439
      %p441 = scmp.ne.s32.totalorder %s432, %s433
      %p442 = scmp.eq.s32.totalorder %s44, 0
      %p443 = por %p441, %p442
      %p444 = scmp.ne.s32.totalorder %s432, %s433
      %p445 = scmp.eq.s32.totalorder %s45, 1
      %p446 = por %p444, %p445
      %p448 = scmp.ne.s32.totalorder %s433, %s447
      %p449 = scmp.eq.s32.totalorder %s45, 0
      %p450 = por %p448, %p449
      %s452 = sadd.s32 %s451, 1
      %p455 = scmp.eq.s32.totalorder %s39, 1
      %p456 = scmp.ne.s32.totalorder %s451, %s453
      %p457 = scmp.eq.s32.totalorder %s39, 0
      %p458 = por %p456, %p457
      %p459 = scmp.ne.s32.totalorder %s451, %s453
      %p460 = scmp.eq.s32.totalorder %s44, 1
      %p461 = por %p459, %p460
      %p462 = scmp.ne.s32.totalorder %s453, %s454
      %p463 = scmp.eq.s32.totalorder %s44, 0
      %p464 = por %p462, %p463
      %p465 = scmp.ne.s32.totalorder %s453, %s454
      %p466 = scmp.eq.s32.totalorder %s45, 1
      %p467 = por %p465, %p466
      %p469 = scmp.ne.s32.totalorder %s454, %s468
      %p470 = scmp.eq.s32.totalorder %s45, 0
      %p471 = por %p469, %p470
      %s473 = sadd.s32 %s472, 1
      %p476 = scmp.eq.s32.totalorder %s39, 1
      %p477 = scmp.ne.s32.totalorder %s472, %s474
      %p478 = scmp.eq.s32.totalorder %s39, 0
      %p479 = por %p477, %p478
      %p480 = scmp.ne.s32.totalorder %s472, %s474
      %p481 = scmp.eq.s32.totalorder %s44, 1
      %p482 = por %p480, %p481
      %p483 = scmp.ne.s32.totalorder %s474, %s475
      %p484 = scmp.eq.s32.totalorder %s44, 0
      %p485 = por %p483, %p484
      %p486 = scmp.ne.s32.totalorder %s474, %s475
      %p487 = scmp.eq.s32.totalorder %s45, 1
      %p488 = por %p486, %p487
      %p490 = scmp.ne.s32.totalorder %s475, %s489
      %p491 = scmp.eq.s32.totalorder %s45, 0
      %p492 = por %p490, %p491
      %s494 = sadd.s32 %s493, 1
      %p497 = scmp.eq.s32.totalorder %s39, 1
      %p498 = scmp.ne.s32.totalorder %s493, %s495
      %p499 = scmp.eq.s32.totalorder %s39, 0
      %p500 = por %p498, %p499
      %p501 = scmp.ne.s32.totalorder %s493, %s495
      %p502 = scmp.eq.s32.totalorder %s44, 1
      %p503 = por %p501, %p502
      %p504 = scmp.ne.s32.totalorder %s495, %s496
      %p505 = scmp.eq.s32.totalorder %s44, 0
      %p506 = por %p504, %p505
      %p507 = scmp.ne.s32.totalorder %s495, %s496
      %p508 = scmp.eq.s32.totalorder %s45, 1
      %p509 = por %p507, %p508
      %p511 = scmp.ne.s32.totalorder %s496, %s510
      %p512 = scmp.eq.s32.totalorder %s45, 0
      %p513 = por %p511, %p512
      %s515 = sadd.s32 %s514, 1
      %p518 = scmp.eq.s32.totalorder %s39, 1
      %p519 = scmp.ne.s32.totalorder %s514, %s516
      %p520 = scmp.eq.s32.totalorder %s39, 0
      %p521 = por %p519, %p520
      %p522 = scmp.ne.s32.totalorder %s514, %s516
      %p523 = scmp.eq.s32.totalorder %s44, 1
      %p524 = por %p522, %p523
      %p525 = scmp.ne.s32.totalorder %s516, %s517
      %p526 = scmp.eq.s32.totalorder %s44, 0
      %p527 = por %p525, %p526
      %p528 = scmp.ne.s32.totalorder %s516, %s517
      %p529 = scmp.eq.s32.totalorder %s45, 1
      %p530 = por %p528, %p529
      %p532 = scmp.ne.s32.totalorder %s517, %s531
      %p533 = scmp.eq.s32.totalorder %s45, 0
      %p534 = por %p532, %p533
      %s536 = sadd.s32 %s535, 1
      %p539 = scmp.eq.s32.totalorder %s39, 1
      %p540 = scmp.ne.s32.totalorder %s535, %s537
      %p541 = scmp.eq.s32.totalorder %s39, 0
      %p542 = por %p540, %p541
      %p543 = scmp.ne.s32.totalorder %s535, %s537
      %p544 = scmp.eq.s32.totalorder %s44, 1
      %p545 = por %p543, %p544
      %p546 = scmp.ne.s32.totalorder %s537, %s538
      %p547 = scmp.eq.s32.totalorder %s44, 0
      %p548 = por %p546, %p547
      %p549 = scmp.ne.s32.totalorder %s537, %s538
      %p550 = scmp.eq.s32.totalorder %s45, 1
      %p551 = por %p549, %p550
      %p553 = scmp.ne.s32.totalorder %s538, %s552
      %p554 = scmp.eq.s32.totalorder %s45, 0
      %p555 = por %p553, %p554
      %s557 = sadd.s32 %s556, 1
      %p560 = scmp.eq.s32.totalorder %s39, 1
      %p561 = scmp.ne.s32.totalorder %s556, %s558
      %p562 = scmp.eq.s32.totalorder %s39, 0
      %p563 = por %p561, %p562
      %p564 = scmp.ne.s32.totalorder %s556, %s558
      %p565 = scmp.eq.s32.totalorder %s44, 1
      %p566 = por %p564, %p565
      %p567 = scmp.ne.s32.totalorder %s558, %s559
      %p568 = scmp.eq.s32.totalorder %s44, 0
      %p569 = por %p567, %p568
      %p570 = scmp.ne.s32.totalorder %s558, %s559
      %p571 = scmp.eq.s32.totalorder %s45, 1
      %p572 = por %p570, %p571
      %p574 = scmp.ne.s32.totalorder %s559, %s573
      %p575 = scmp.eq.s32.totalorder %s45, 0
      %p576 = por %p574, %p575
      %s578 = sadd.s32 %s577, 1
      %p581 = scmp.eq.s32.totalorder %s39, 1
      %p582 = scmp.ne.s32.totalorder %s577, %s579
      %p583 = scmp.eq.s32.totalorder %s39, 0
      %p584 = por %p582, %p583
      %p585 = scmp.ne.s32.totalorder %s577, %s579
      %p586 = scmp.eq.s32.totalorder %s44, 1
      %p587 = por %p585, %p586
      %p588 = scmp.ne.s32.totalorder %s579, %s580
      %p589 = scmp.eq.s32.totalorder %s44, 0
      %p590 = por %p588, %p589
      %p591 = scmp.ne.s32.totalorder %s579, %s580
      %p592 = scmp.eq.s32.totalorder %s45, 1
      %p593 = por %p591, %p592
      %p595 = scmp.ne.s32.totalorder %s580, %s594
      %p596 = scmp.eq.s32.totalorder %s45, 0
      %p597 = por %p595, %p596
      %s598 = ssub.s32 %s39, %s46
      %p599 = scmp.eq.s32.totalorder %s598, 0
      %s601 = sadd.s32 %s600, 1
      %s602 = scalar_select %p599, %s600, %s601
      %p605 = pneg %p599
      %p606 = scmp.eq.s32.totalorder %s39, 1
      %p607 = por %p605, %p606
      %p608 = scmp.ne.s32.totalorder %s600, %s603
      %p609 = scmp.eq.s32.totalorder %s39, 0
      %p610 = por %p608, %p609
      %p611 = scmp.ne.s32.totalorder %s600, %s603
      %p612 = scmp.eq.s32.totalorder %s44, 1
      %p613 = por %p611, %p612
      %p614 = scmp.ne.s32.totalorder %s603, %s604
      %p615 = scmp.eq.s32.totalorder %s44, 0
      %p616 = por %p614, %p615
      %p617 = scmp.ne.s32.totalorder %s603, %s604
      %p618 = scmp.eq.s32.totalorder %s45, 1
      %p619 = por %p617, %p618
      %p621 = scmp.ne.s32.totalorder %s604, %s620
      %p622 = scmp.eq.s32.totalorder %s45, 0
      %p623 = por %p621, %p622
      %s624 = ssub.s32 %s39, %s46
      %p625 = scmp.eq.s32.totalorder %s624, 0
      %s627 = sadd.s32 %s626, 1
      %s628 = scalar_select %p625, %s626, %s627
      %p631 = pneg %p625
      %p632 = scmp.eq.s32.totalorder %s39, 1
      %p633 = por %p631, %p632
      %p634 = scmp.ne.s32.totalorder %s626, %s629
      %p635 = scmp.eq.s32.totalorder %s39, 0
      %p636 = por %p634, %p635
      %p637 = scmp.ne.s32.totalorder %s626, %s629
      %p638 = scmp.eq.s32.totalorder %s44, 1
      %p639 = por %p637, %p638
      %p640 = scmp.ne.s32.totalorder %s629, %s630
      %p641 = scmp.eq.s32.totalorder %s44, 0
      %p642 = por %p640, %p641
      %p643 = scmp.ne.s32.totalorder %s629, %s630
      %p644 = scmp.eq.s32.totalorder %s45, 1
      %p645 = por %p643, %p644
      %p647 = scmp.ne.s32.totalorder %s630, %s646
      %p648 = scmp.eq.s32.totalorder %s45, 0
      %p649 = por %p647, %p648
      %p650 = scmp.le.s32.totalorder 1, %s39
      %p651 = scmp.lt.s32.totalorder %s39, 3
      %p652 = pnand %p650, %p651
      %p653 = pneg %p652
      // Predicated region
      $region9: #{multiscale_discriminator_forward.1} parent=5 // pred_check
        _
      $region10: #{multiscale_discriminator_forward.1} parent=5 // pred_check_branch
        %655 = sbr.rel (%p652) target = $region12
      $region11: #{multiscale_discriminator_forward.1} parent=5 // pred_region
        %s656 = ssub.s32 %s39, 1
        // Predicated region
        $region13: #{multiscale_discriminator_forward.1} parent=11 // pred_check
          %p657 = pneg %p86
        $region14: #{multiscale_discriminator_forward.1} parent=11 // pred_check_branch
          %659 = sbr.rel (%p657) target = $region16
        $region15: #{multiscale_discriminator_forward.1} parent=11 // pred_region
          _
        $region16: #{multiscale_discriminator_forward.1} parent=11 // pred_fallthru
          _
        // Predicated region
        $region17: #{multiscale_discriminator_forward.1} parent=11 // pred_check
          %p660 = pneg %p107
        $region18: #{multiscale_discriminator_forward.1} parent=11 // pred_check_branch
          %662 = sbr.rel (%p660) target = $region20
        $region19: #{multiscale_discriminator_forward.1} parent=11 // pred_region
          _
        $region20: #{multiscale_discriminator_forward.1} parent=11 // pred_fallthru
          _
        // Predicated region
        $region21: #{multiscale_discriminator_forward.1} parent=11 // pred_check
          %p663 = pneg %p128
        $region22: #{multiscale_discriminator_forward.1} parent=11 // pred_check_branch
          %665 = sbr.rel (%p663) target = $region24
        $region23: #{multiscale_discriminator_forward.1} parent=11 // pred_region
          _
        $region24: #{multiscale_discriminator_forward.1} parent=11 // pred_fallthru
          _
        // Predicated region
        $region25: #{multiscale_discriminator_forward.1} parent=11 // pred_check
          %p666 = pneg %p149
        $region26: #{multiscale_discriminator_forward.1} parent=11 // pred_check_branch
          %668 = sbr.rel (%p666) target = $region28
        $region27: #{multiscale_discriminator_forward.1} parent=11 // pred_region
          _
        $region28: #{multiscale_discriminator_forward.1} parent=11 // pred_fallthru
          _
        // Predicated region
        $region29: #{multiscale_discriminator_forward.1} parent=11 // pred_check
          %p669 = pneg %p170
        $region30: #{multiscale_discriminator_forward.1} parent=11 // pred_check_branch
          %671 = sbr.rel (%p669) target = $region32
        $region31: #{multiscale_discriminator_forward.1} parent=11 // pred_region
          _
        $region32: #{multiscale_discriminator_forward.1} parent=11 // pred_fallthru
          _
        // Predicated region
        $region33: #{multiscale_discriminator_forward.1} parent=11 // pred_check
          %p672 = pneg %p191
        $region34: #{multiscale_discriminator_forward.1} parent=11 // pred_check_branch
          %674 = sbr.rel (%p672) target = $region36
        $region35: #{multiscale_discriminator_forward.1} parent=11 // pred_region
          _
        $region36: #{multiscale_discriminator_forward.1} parent=11 // pred_fallthru
          _
        // Predicated region
        $region37: #{multiscale_discriminator_forward.1} parent=11 // pred_check
          %p675 = pneg %p212
        $region38: #{multiscale_discriminator_forward.1} parent=11 // pred_check_branch
          %677 = sbr.rel (%p675) target = $region40
        $region39: #{multiscale_discriminator_forward.1} parent=11 // pred_region
          _
        $region40: #{multiscale_discriminator_forward.1} parent=11 // pred_fallthru
          _
        // Predicated region
        $region41: #{multiscale_discriminator_forward.1} parent=11 // pred_check
          %p678 = pneg %p233
        $region42: #{multiscale_discriminator_forward.1} parent=11 // pred_check_branch
          %680 = sbr.rel (%p678) target = $region44
        $region43: #{multiscale_discriminator_forward.1} parent=11 // pred_region
          _
        $region44: #{multiscale_discriminator_forward.1} parent=11 // pred_fallthru
          _
        // Predicated region
        $region45: #{multiscale_discriminator_forward.1} parent=11 // pred_check
          %p681 = pneg %p254
        $region46: #{multiscale_discriminator_forward.1} parent=11 // pred_check_branch
          %683 = sbr.rel (%p681) target = $region48
        $region47: #{multiscale_discriminator_forward.1} parent=11 // pred_region
          _
        $region48: #{multiscale_discriminator_forward.1} parent=11 // pred_fallthru
          _
        // Predicated region
        $region49: #{multiscale_discriminator_forward.1} parent=11 // pred_check
          %p684 = pneg %p275
        $region50: #{multiscale_discriminator_forward.1} parent=11 // pred_check_branch
          %686 = sbr.rel (%p684) target = $region52
        $region51: #{multiscale_discriminator_forward.1} parent=11 // pred_region
          _
        $region52: #{multiscale_discriminator_forward.1} parent=11 // pred_fallthru
          _
        // Predicated region
        $region53: #{multiscale_discriminator_forward.1} parent=11 // pred_check
          %p687 = pneg %p296
        $region54: #{multiscale_discriminator_forward.1} parent=11 // pred_check_branch
          %689 = sbr.rel (%p687) target = $region56
        $region55: #{multiscale_discriminator_forward.1} parent=11 // pred_region
          _
        $region56: #{multiscale_discriminator_forward.1} parent=11 // pred_fallthru
          _
        // Predicated region
        $region57: #{multiscale_discriminator_forward.1} parent=11 // pred_check
          %p690 = pneg %p317
        $region58: #{multiscale_discriminator_forward.1} parent=11 // pred_check_branch
          %692 = sbr.rel (%p690) target = $region60
        $region59: #{multiscale_discriminator_forward.1} parent=11 // pred_region
          _
        $region60: #{multiscale_discriminator_forward.1} parent=11 // pred_fallthru
          _
        // Predicated region
        $region61: #{multiscale_discriminator_forward.1} parent=11 // pred_check
          %p693 = pneg %p338
        $region62: #{multiscale_discriminator_forward.1} parent=11 // pred_check_branch
          %695 = sbr.rel (%p693) target = $region64
        $region63: #{multiscale_discriminator_forward.1} parent=11 // pred_region
          _
        $region64: #{multiscale_discriminator_forward.1} parent=11 // pred_fallthru
          _
        // Predicated region
        $region65: #{multiscale_discriminator_forward.1} parent=11 // pred_check
          %p696 = pneg %p359
        $region66: #{multiscale_discriminator_forward.1} parent=11 // pred_check_branch
          %698 = sbr.rel (%p696) target = $region68
        $region67: #{multiscale_discriminator_forward.1} parent=11 // pred_region
          _
        $region68: #{multiscale_discriminator_forward.1} parent=11 // pred_fallthru
          _
        // Predicated region
        $region69: #{multiscale_discriminator_forward.1} parent=11 // pred_check
          %p699 = pneg %p380
        $region70: #{multiscale_discriminator_forward.1} parent=11 // pred_check_branch
          %701 = sbr.rel (%p699) target = $region72
        $region71: #{multiscale_discriminator_forward.1} parent=11 // pred_region
          _
        $region72: #{multiscale_discriminator_forward.1} parent=11 // pred_fallthru
          _
        // Predicated region
        $region73: #{multiscale_discriminator_forward.1} parent=11 // pred_check
          %p702 = pneg %p401
        $region74: #{multiscale_discriminator_forward.1} parent=11 // pred_check_branch
          %704 = sbr.rel (%p702) target = $region76
        $region75: #{multiscale_discriminator_forward.1} parent=11 // pred_region
          _
        $region76: #{multiscale_discriminator_forward.1} parent=11 // pred_fallthru
          _
        // Predicated region
        $region77: #{multiscale_discriminator_forward.1} parent=11 // pred_check
          %p705 = pneg %p422
        $region78: #{multiscale_discriminator_forward.1} parent=11 // pred_check_branch
          %707 = sbr.rel (%p705) target = $region80
        $region79: #{multiscale_discriminator_forward.1} parent=11 // pred_region
          _
        $region80: #{multiscale_discriminator_forward.1} parent=11 // pred_fallthru
          _
        // Predicated region
        $region81: #{multiscale_discriminator_forward.1} parent=11 // pred_check
          %p708 = pneg %p443
        $region82: #{multiscale_discriminator_forward.1} parent=11 // pred_check_branch
          %710 = sbr.rel (%p708) target = $region84
        $region83: #{multiscale_discriminator_forward.1} parent=11 // pred_region
          _
        $region84: #{multiscale_discriminator_forward.1} parent=11 // pred_fallthru
          _
        // Predicated region
        $region85: #{multiscale_discriminator_forward.1} parent=11 // pred_check
          %p711 = pneg %p464
        $region86: #{multiscale_discriminator_forward.1} parent=11 // pred_check_branch
          %713 = sbr.rel (%p711) target = $region88
        $region87: #{multiscale_discriminator_forward.1} parent=11 // pred_region
          _
        $region88: #{multiscale_discriminator_forward.1} parent=11 // pred_fallthru
          _
        // Predicated region
        $region89: #{multiscale_discriminator_forward.1} parent=11 // pred_check
          %p714 = pneg %p485
        $region90: #{multiscale_discriminator_forward.1} parent=11 // pred_check_branch
          %716 = sbr.rel (%p714) target = $region92
        $region91: #{multiscale_discriminator_forward.1} parent=11 // pred_region
          _
        $region92: #{multiscale_discriminator_forward.1} parent=11 // pred_fallthru
          _
        // Predicated region
        $region93: #{multiscale_discriminator_forward.1} parent=11 // pred_check
          %p717 = pneg %p506
        $region94: #{multiscale_discriminator_forward.1} parent=11 // pred_check_branch
          %719 = sbr.rel (%p717) target = $region96
        $region95: #{multiscale_discriminator_forward.1} parent=11 // pred_region
          _
        $region96: #{multiscale_discriminator_forward.1} parent=11 // pred_fallthru
          _
        // Predicated region
        $region97: #{multiscale_discriminator_forward.1} parent=11 // pred_check
          %p720 = pneg %p527
        $region98: #{multiscale_discriminator_forward.1} parent=11 // pred_check_branch
          %722 = sbr.rel (%p720) target = $region100
        $region99: #{multiscale_discriminator_forward.1} parent=11 // pred_region
          _
        $region100: #{multiscale_discriminator_forward.1} parent=11 // pred_fallthru
          _
        // Predicated region
        $region101: #{multiscale_discriminator_forward.1} parent=11 // pred_check
          %p723 = pneg %p548
        $region102: #{multiscale_discriminator_forward.1} parent=11 // pred_check_branch
          %725 = sbr.rel (%p723) target = $region104
        $region103: #{multiscale_discriminator_forward.1} parent=11 // pred_region
          _
        $region104: #{multiscale_discriminator_forward.1} parent=11 // pred_fallthru
          _
        // Predicated region
        $region105: #{multiscale_discriminator_forward.1} parent=11 // pred_check
          %p726 = pneg %p569
        $region106: #{multiscale_discriminator_forward.1} parent=11 // pred_check_branch
          %728 = sbr.rel (%p726) target = $region108
        $region107: #{multiscale_discriminator_forward.1} parent=11 // pred_region
          _
        $region108: #{multiscale_discriminator_forward.1} parent=11 // pred_fallthru
          _
        // Predicated region
        $region109: #{multiscale_discriminator_forward.1} parent=11 // pred_check
          %p729 = pneg %p590
        $region110: #{multiscale_discriminator_forward.1} parent=11 // pred_check_branch
          %731 = sbr.rel (%p729) target = $region112
        $region111: #{multiscale_discriminator_forward.1} parent=11 // pred_region
          _
        $region112: #{multiscale_discriminator_forward.1} parent=11 // pred_fallthru
          _
      $region12: #{multiscale_discriminator_forward.1} parent=5 // pred_fallthru
        _
      %p732 = scmp.lt.s32.totalorder %s39, 2
      // Predicated region
      $region113: #{multiscale_discriminator_forward.1} parent=5 // pred_check
        %p733 = pneg %p732
      $region114: #{multiscale_discriminator_forward.1} parent=5 // pred_check_branch
        %735 = sbr.rel (%p733) target = $region116
      $region115: #{multiscale_discriminator_forward.1} parent=5 // pred_region
        // Predicated region
        $region117: #{multiscale_discriminator_forward.1} parent=115 // pred_check
          %p736 = pneg %p59
        $region118: #{multiscale_discriminator_forward.1} parent=115 // pred_check_branch
          %738 = sbr.rel (%p736) target = $region120
        $region119: #{multiscale_discriminator_forward.1} parent=115 // pred_region
          %p739 = scmp.lt.s32.totalorder %s39, 1
          %s740 = scalar_select %p739, %s39, 1
          %s741 = smul.addr %s740, 2
          %s742 = smul.addr %s741, 4
          %s743 = scalar_lea.vmem %s0, %s742
        $region120: #{multiscale_discriminator_forward.1} parent=115 // pred_fallthru
          _
      $region116: #{multiscale_discriminator_forward.1} parent=5 // pred_fallthru
        _
      %p744 = scmp.le.s32.totalorder 1, %s39
      %p745 = scmp.lt.s32.totalorder %s39, 3
      %p746 = pnand %p744, %p745
      %p747 = pneg %p746
      // Predicated region
      $region121: #{multiscale_discriminator_forward.1} parent=5 // pred_check
        _
      $region122: #{multiscale_discriminator_forward.1} parent=5 // pred_check_branch
        %749 = sbr.rel (%p746) target = $region124
      $region123: #{multiscale_discriminator_forward.1} parent=5 // pred_region
        %s750 = ssub.s32 %s39, 1
        %p751 = scmp.lt.s32.totalorder %s44, 1
        %s752 = scalar_select %p751, %s44, 1
        %s753 = smul.addr %s752, 2
        %s754 = smul.addr %s753, 4
        %s755 = scalar_lea.vmem %s0, %s754
        %p756 = pneg %p65
        %p757 = pneg %p62
        %p758 = pneg %p86
        %p759 = pneg %p83
        %p760 = pneg %p107
        %p761 = pneg %p104
        %p762 = pneg %p128
        %p763 = pneg %p125
        %p764 = pneg %p149
        %p765 = pneg %p146
        %p766 = pneg %p170
        %p767 = pneg %p167
        %p768 = pneg %p191
        %p769 = pneg %p188
        %p770 = pneg %p212
        %p771 = pneg %p209
        %p772 = pneg %p233
        %p773 = pneg %p230
        %p774 = pneg %p254
        %p775 = pneg %p251
        %p776 = pneg %p275
        %p777 = pneg %p272
        %p778 = pneg %p296
        %p779 = pneg %p293
        %p780 = pneg %p317
        %p781 = pneg %p314
        %p782 = pneg %p338
        %p783 = pneg %p335
        %p784 = pneg %p359
        %p785 = pneg %p356
        %p786 = pneg %p380
        %p787 = pneg %p377
        %p788 = pneg %p401
        %p789 = pneg %p398
        %p790 = pneg %p422
        %p791 = pneg %p419
        %p792 = pneg %p443
        %p793 = pneg %p440
        %p794 = pneg %p464
        %p795 = pneg %p461
        %p796 = pneg %p485
        %p797 = pneg %p482
        %p798 = pneg %p506
        %p799 = pneg %p503
        %p800 = pneg %p527
        %p801 = pneg %p524
        %p802 = pneg %p548
        %p803 = pneg %p545
        %p804 = pneg %p569
        %p805 = pneg %p566
        %p806 = pneg %p590
        %p807 = pneg %p587
        %p808 = pneg %p616
        %p809 = pneg %p613
        %s810 = sand.u32 %s603, 1
        %s811 = scalar_lea.sflag [#allocation4], %s810
        %s812 = sand.u32 %s603, 1
        %s813 = smul.addr %s812, 2
        %s814 = scalar_lea.vmem [#allocation3], %s813
        %p815 = pneg %p642
        %p816 = pneg %p639
        %p817 = scmp.lt.s32.totalorder %s44, 1
        %s818 = scalar_select %p817, %s44, 1
        %s819 = scalar_lea.vmem %s27, %s818
        %p820 = scmp.lt.s32.totalorder %s44, 1
        %s821 = scalar_select %p820, %s44, 1
        %s822 = smul.addr %s821, 2
        %s823 = smul.addr %s822, 4
        %s824 = scalar_lea.vmem %s0, %s823
        %p825 = scmp.lt.s32.totalorder %s44, 1
        %s826 = scalar_select %p825, %s44, 1
        %s827 = scalar_lea.vmem %s27, %s826
        %v829 = vld [vmem:[%s824] sm:$0xf]
        %v830 = vld [vmem:[%s824 + $0x4] sm:$0xf]
        %v831 = vld [vmem:[%s1] sm:$0xf]
        %v832 = vld [vmem:[%s1 + $0x4] sm:$0x1]
        %v833 = vld [vmem:[%s1 + $0x8] sm:$0xf]
        %v834 = vld [vmem:[%s1 + $0xc] sm:$0x1]
        %v835 = vld [vmem:[%s2] sm:$0xf]
        %v836 = vld [vmem:[%s2 + $0x4] sm:$0xf]
        %v837 = vld [vmem:[%s2 + $0x8] sm:$0xf]
        %v838 = vld [vmem:[%s2 + $0xc] sm:$0xf]
        %v839 = vld [vmem:[%s2 + $0x10] sm:$0xf]
        %v840 = vld [vmem:[%s2 + $0x14] sm:$0xf]
        %v841 = vld [vmem:[%s2 + $0x18] sm:$0xf]
        %v842 = vld [vmem:[%s2 + $0x1c] sm:$0xf]
        %v843 = vld [vmem:[%s2 + $0x20] sm:$0xf]
        %v844 = vld [vmem:[%s2 + $0x24] sm:$0xf]
        %v845 = vld [vmem:[%s2 + $0x28] sm:$0xf]
        %v846 = vld [vmem:[%s2 + $0x2c] sm:$0xf]
        %v847 = vld [vmem:[%s2 + $0x30] sm:$0xf]
        %v848 = vld [vmem:[%s2 + $0x34] sm:$0xf]
        %v849 = vld [vmem:[%s2 + $0x38] sm:$0xf]
        %v850 = vld [vmem:[%s2 + $0x3c] sm:$0xf]
        %v851 = vld [vmem:[%s2 + $0x40] sm:$0xf]
        %v852 = vld [vmem:[%s2 + $0x44] sm:$0xf]
        %v853 = vld [vmem:[%s2 + $0x48] sm:$0xf]
        %v854 = vld [vmem:[%s2 + $0x4c] sm:$0xf]
        %v855 = vld [vmem:[%s2 + $0x50] sm:$0xf]
        %v856 = vld [vmem:[%s2 + $0x54] sm:$0xf]
        %v857 = vld [vmem:[%s2 + $0x58] sm:$0xf]
        %v858 = vld [vmem:[%s2 + $0x5c] sm:$0xf]
        %v859 = vld [vmem:[%s2 + $0x60] sm:$0xf]
        %v860 = vld [vmem:[%s2 + $0x64] sm:$0xf]
        %v861 = vld [vmem:[%s2 + $0x68] sm:$0xf]
        %v862 = vld [vmem:[%s2 + $0x6c] sm:$0xf]
        %v863 = vld [vmem:[%s2 + $0x70] sm:$0xf]
        %v864 = vld [vmem:[%s2 + $0x74] sm:$0xf]
        %v865 = vld [vmem:[%s2 + $0x78] sm:$0xf]
        %v866 = vld [vmem:[%s2 + $0x7c] sm:$0xf]
        %v867 = vld [vmem:[%s3] sm:$0x1]
        %v870 = vunpack.c.l.b16 %v831
        %v871 = vunpack.c.l.b16 %v832
        %v872 = vpack.c.b16 %v871, %v870
        %v875 = vunpack.c.l.b16 %v829
        %v876 = vunpack.c.l.b16 %v830
        %v877 = vpack.c.b16 %v876, %v875
        %vm879 = vcmask 130048
        %v881 = vsel %vm879, %v872, 0
        %883 = vmatprep.subr.bf16.mxu0 0
        %884 = vmatpush1.bf16.msra.mxu0 %v877
        %885 = vmatprep.subr.bf16.mxu0 0
        %886 = vmatpush1.bf16.msra.mxu0 0
        %887 = vmatprep.subr.bf16.mxu0 0
        %888 = vmatpush1.bf16.msra.mxu0 0
        %889 = vmatprep.subr.bf16.mxu0 0
        %890 = vmatpush1.bf16.msra.mxu0 0
        %891 = vmatprep.subr.bf16.mxu0 0
        %892 = vmatpush1.bf16.msra.mxu0 0
        %893 = vmatprep.subr.bf16.mxu0 0
        %894 = vmatpush1.bf16.msra.mxu0 0
        %895 = vmatprep.subr.bf16.mxu0 0
        %896 = vmatpush1.bf16.msra.mxu0 0
        %897 = vmatprep.subr.bf16.mxu0 0
        %898 = vmatpush1.bf16.msra.mxu0 0
        %899 = vmatprep.subr.bf16.mxu0 0
        %900 = vmatpush1.bf16.msra.mxu0 0
        %901 = vmatprep.subr.bf16.mxu0 0
        %902 = vmatpush1.bf16.msra.mxu0 0
        %903 = vmatprep.subr.bf16.mxu0 0
        %904 = vmatpush1.bf16.msra.mxu0 0
        %905 = vmatprep.subr.bf16.mxu0 0
        %906 = vmatpush1.bf16.msra.mxu0 0
        %907 = vmatprep.subr.bf16.mxu0 0
        %908 = vmatpush1.bf16.msra.mxu0 0
        %909 = vmatprep.subr.bf16.mxu0 0
        %910 = vmatpush1.bf16.msra.mxu0 0
        %911 = vmatprep.subr.bf16.mxu0 0
        %912 = vmatpush1.bf16.msra.mxu0 0
        %913 = vmatprep.subr.bf16.mxu0 0
        %914 = vmatpush1.bf16.msra.mxu0 0
        %915 = vmatprep.mubr.bf16.mxu0 0
        %916 = vmatmul.mubr.bf16.gmra.mrb[0].mxu0 %v881
        %v917 = vpop.f32.mrb[0].mxu0
        %v918 = vadd.f32 0.0, %v917
        %v919 = vpop.f32.mrb[0].mxu0
        %v920 = vpop.f32.mrb[0].mxu0
        %v921 = vadd.f32 0.0, %v920
        %v922 = vpop.f32.mrb[0].mxu0
        %923 = vdwg.mxu0
        %v924 = vpack.c.bf16 %v921, %v918
        %v927 = vunpack.c.l.b16 %v833
        %v928 = vunpack.c.l.b16 %v834
        %v929 = vpack.c.b16 %v928, %v927
        %v931 = vsel %vm879, %v929, 0
        %933 = vmatprep.subr.bf16.mxu0 0
        %934 = vmatpush1.bf16.msra.mxu0 %v877
        %935 = vmatprep.subr.bf16.mxu0 0
        %936 = vmatpush1.bf16.msra.mxu0 0
        %937 = vmatprep.subr.bf16.mxu0 0
        %938 = vmatpush1.bf16.msra.mxu0 0
        %939 = vmatprep.subr.bf16.mxu0 0
        %940 = vmatpush1.bf16.msra.mxu0 0
        %941 = vmatprep.subr.bf16.mxu0 0
        %942 = vmatpush1.bf16.msra.mxu0 0
        %943 = vmatprep.subr.bf16.mxu0 0
        %944 = vmatpush1.bf16.msra.mxu0 0
        %945 = vmatprep.subr.bf16.mxu0 0
        %946 = vmatpush1.bf16.msra.mxu0 0
        %947 = vmatprep.subr.bf16.mxu0 0
        %948 = vmatpush1.bf16.msra.mxu0 0
        %949 = vmatprep.subr.bf16.mxu0 0
        %950 = vmatpush1.bf16.msra.mxu0 0
        %951 = vmatprep.subr.bf16.mxu0 0
        %952 = vmatpush1.bf16.msra.mxu0 0
        %953 = vmatprep.subr.bf16.mxu0 0
        %954 = vmatpush1.bf16.msra.mxu0 0
        %955 = vmatprep.subr.bf16.mxu0 0
        %956 = vmatpush1.bf16.msra.mxu0 0
        %957 = vmatprep.subr.bf16.mxu0 0
        %958 = vmatpush1.bf16.msra.mxu0 0
        %959 = vmatprep.subr.bf16.mxu0 0
        %960 = vmatpush1.bf16.msra.mxu0 0
        %961 = vmatprep.subr.bf16.mxu0 0
        %962 = vmatpush1.bf16.msra.mxu0 0
        %963 = vmatprep.subr.bf16.mxu0 0
        %964 = vmatpush1.bf16.msra.mxu0 0
        %965 = vmatprep.mubr.bf16.mxu0 0
        %966 = vmatmul.mubr.bf16.gmra.mrb[0].mxu0 %v931
        %v967 = vpop.f32.mrb[0].mxu0
        %v968 = vadd.f32 0.0, %v967
        %v969 = vpop.f32.mrb[0].mxu0
        %v970 = vpop.f32.mrb[0].mxu0
        %v971 = vadd.f32 0.0, %v970
        %v972 = vpop.f32.mrb[0].mxu0
        %973 = vdwg.mxu0
        %v974 = vpack.c.bf16 %v971, %v968
        %v983 = vunpack.c.l.b16 %v843
        %v984 = vunpack.c.l.b16 %v844
        %v985 = vunpack.c.l.b16 %v845
        %v986 = vunpack.c.l.b16 %v846
        %v987 = vunpack.c.l.b16 %v847
        %v988 = vunpack.c.l.b16 %v848
        %v989 = vunpack.c.l.b16 %v849
        %v990 = vunpack.c.l.b16 %v850
        %v991 = vpack.c.b16 %v984, %v983
        %v992 = vpack.c.b16 %v986, %v985
        %v993 = vpack.c.b16 %v988, %v987
        %v994 = vpack.c.b16 %v990, %v989
        %vm999 = vcmask 523264
        %v1001 = vsel %vm999, %v974, 0
        %1003 = vmatprep.subr.bf16.mxu0 0
        %1004 = vmatpush1.bf16.msra.mxu0 %v991
        %1005 = vmatprep.subr.bf16.mxu0 0
        %1006 = vmatpush1.bf16.msra.mxu0 %v992
        %1007 = vmatprep.subr.bf16.mxu0 0
        %1008 = vmatpush1.bf16.msra.mxu0 %v993
        %1009 = vmatprep.subr.bf16.mxu0 0
        %1010 = vmatpush1.bf16.msra.mxu0 %v994
        %1011 = vmatprep.subr.bf16.mxu0 0
        %1012 = vmatpush1.bf16.msra.mxu0 0
        %1013 = vmatprep.subr.bf16.mxu0 0
        %1014 = vmatpush1.bf16.msra.mxu0 0
        %1015 = vmatprep.subr.bf16.mxu0 0
        %1016 = vmatpush1.bf16.msra.mxu0 0
        %1017 = vmatprep.subr.bf16.mxu0 0
        %1018 = vmatpush1.bf16.msra.mxu0 0
        %1019 = vmatprep.subr.bf16.mxu0 0
        %1020 = vmatpush1.bf16.msra.mxu0 0
        %1021 = vmatprep.subr.bf16.mxu0 0
        %1022 = vmatpush1.bf16.msra.mxu0 0
        %1023 = vmatprep.subr.bf16.mxu0 0
        %1024 = vmatpush1.bf16.msra.mxu0 0
        %1025 = vmatprep.subr.bf16.mxu0 0
        %1026 = vmatpush1.bf16.msra.mxu0 0
        %1027 = vmatprep.subr.bf16.mxu0 0
        %1028 = vmatpush1.bf16.msra.mxu0 0
        %1029 = vmatprep.subr.bf16.mxu0 0
        %1030 = vmatpush1.bf16.msra.mxu0 0
        %1031 = vmatprep.subr.bf16.mxu0 0
        %1032 = vmatpush1.bf16.msra.mxu0 0
        %1033 = vmatprep.subr.bf16.mxu0 0
        %1034 = vmatpush1.bf16.msra.mxu0 0
        %1035 = vmatprep.mubr.bf16.mxu0 0
        %1036 = vmatmul.mubr.bf16.gmra.mrb[0].mxu0 %v1001
        %v1037 = vpop.f32.mrb[0].mxu0
        %v1038 = vadd.f32 0.0, %v1037
        %v1039 = vpop.f32.mrb[0].mxu0
        %v1040 = vpop.f32.mrb[0].mxu0
        %v1041 = vpop.f32.mrb[0].mxu0
        %1042 = vdwg.mxu0
        %v1051 = vunpack.c.l.b16 %v835
        %v1052 = vunpack.c.l.b16 %v836
        %v1053 = vunpack.c.l.b16 %v837
        %v1054 = vunpack.c.l.b16 %v838
        %v1055 = vunpack.c.l.b16 %v839
        %v1056 = vunpack.c.l.b16 %v840
        %v1057 = vunpack.c.l.b16 %v841
        %v1058 = vunpack.c.l.b16 %v842
        %v1059 = vpack.c.b16 %v1052, %v1051
        %v1060 = vpack.c.b16 %v1054, %v1053
        %v1061 = vpack.c.b16 %v1056, %v1055
        %v1062 = vpack.c.b16 %v1058, %v1057
        %v1068 = vsel %vm999, %v924, 0
        %1070 = vmatprep.subr.bf16.mxu0 0
        %1071 = vmatpush1.bf16.msra.mxu0 %v1059
        %1072 = vmatprep.subr.bf16.mxu0 0
        %1073 = vmatpush1.bf16.msra.mxu0 %v1060
        %1074 = vmatprep.subr.bf16.mxu0 0
        %1075 = vmatpush1.bf16.msra.mxu0 %v1061
        %1076 = vmatprep.subr.bf16.mxu0 0
        %1077 = vmatpush1.bf16.msra.mxu0 %v1062
        %1078 = vmatprep.subr.bf16.mxu0 0
        %1079 = vmatpush1.bf16.msra.mxu0 0
        %1080 = vmatprep.subr.bf16.mxu0 0
        %1081 = vmatpush1.bf16.msra.mxu0 0
        %1082 = vmatprep.subr.bf16.mxu0 0
        %1083 = vmatpush1.bf16.msra.mxu0 0
        %1084 = vmatprep.subr.bf16.mxu0 0
        %1085 = vmatpush1.bf16.msra.mxu0 0
        %1086 = vmatprep.subr.bf16.mxu0 0
        %1087 = vmatpush1.bf16.msra.mxu0 0
        %1088 = vmatprep.subr.bf16.mxu0 0
        %1089 = vmatpush1.bf16.msra.mxu0 0
        %1090 = vmatprep.subr.bf16.mxu0 0
        %1091 = vmatpush1.bf16.msra.mxu0 0
        %1092 = vmatprep.subr.bf16.mxu0 0
        %1093 = vmatpush1.bf16.msra.mxu0 0
        %1094 = vmatprep.subr.bf16.mxu0 0
        %1095 = vmatpush1.bf16.msra.mxu0 0
        %1096 = vmatprep.subr.bf16.mxu0 0
        %1097 = vmatpush1.bf16.msra.mxu0 0
        %1098 = vmatprep.subr.bf16.mxu0 0
        %1099 = vmatpush1.bf16.msra.mxu0 0
        %1100 = vmatprep.subr.bf16.mxu0 0
        %1101 = vmatpush1.bf16.msra.mxu0 0
        %1102 = vmatprep.mubr.bf16.mxu0 0
        %1103 = vmatmul.mubr.bf16.gmra.mrb[0].mxu0 %v1068
        %v1104 = vpop.f32.mrb[0].mxu0
        %v1105 = vadd.f32 %v1038, %v1104
        %v1106 = vpop.f32.mrb[0].mxu0
        %v1107 = vpop.f32.mrb[0].mxu0
        %v1108 = vpop.f32.mrb[0].mxu0
        %1109 = vdwg.mxu0
        %v1110 = vshrl.u32 %v924, 16
        %v1112 = vshll.u32 %v924, 16
        %v1114 = vrot.slane %v1112, 1
        %v1115 = vor.u32 %v1110, %v1114
        %v1124 = vunpack.c.l.b16 %v851
        %v1125 = vunpack.c.l.b16 %v852
        %v1126 = vunpack.c.l.b16 %v853
        %v1127 = vunpack.c.l.b16 %v854
        %v1128 = vunpack.c.l.b16 %v855
        %v1129 = vunpack.c.l.b16 %v856
        %v1130 = vunpack.c.l.b16 %v857
        %v1131 = vunpack.c.l.b16 %v858
        %v1132 = vpack.c.b16 %v1125, %v1124
        %v1133 = vpack.c.b16 %v1127, %v1126
        %v1134 = vpack.c.b16 %v1129, %v1128
        %v1135 = vpack.c.b16 %v1131, %v1130
        %v1141 = vsel %vm999, %v1115, 0
        %1143 = vmatprep.subr.bf16.mxu0 0
        %1144 = vmatpush1.bf16.msra.mxu0 %v1132
        %1145 = vmatprep.subr.bf16.mxu0 0
        %1146 = vmatpush1.bf16.msra.mxu0 %v1133
        %1147 = vmatprep.subr.bf16.mxu0 0
        %1148 = vmatpush1.bf16.msra.mxu0 %v1134
        %1149 = vmatprep.subr.bf16.mxu0 0
        %1150 = vmatpush1.bf16.msra.mxu0 %v1135
        %1151 = vmatprep.subr.bf16.mxu0 0
        %1152 = vmatpush1.bf16.msra.mxu0 0
        %1153 = vmatprep.subr.bf16.mxu0 0
        %1154 = vmatpush1.bf16.msra.mxu0 0
        %1155 = vmatprep.subr.bf16.mxu0 0
        %1156 = vmatpush1.bf16.msra.mxu0 0
        %1157 = vmatprep.subr.bf16.mxu0 0
        %1158 = vmatpush1.bf16.msra.mxu0 0
        %1159 = vmatprep.subr.bf16.mxu0 0
        %1160 = vmatpush1.bf16.msra.mxu0 0
        %1161 = vmatprep.subr.bf16.mxu0 0
        %1162 = vmatpush1.bf16.msra.mxu0 0
        %1163 = vmatprep.subr.bf16.mxu0 0
        %1164 = vmatpush1.bf16.msra.mxu0 0
        %1165 = vmatprep.subr.bf16.mxu0 0
        %1166 = vmatpush1.bf16.msra.mxu0 0
        %1167 = vmatprep.subr.bf16.mxu0 0
        %1168 = vmatpush1.bf16.msra.mxu0 0
        %1169 = vmatprep.subr.bf16.mxu0 0
        %1170 = vmatpush1.bf16.msra.mxu0 0
        %1171 = vmatprep.subr.bf16.mxu0 0
        %1172 = vmatpush1.bf16.msra.mxu0 0
        %1173 = vmatprep.subr.bf16.mxu0 0
        %1174 = vmatpush1.bf16.msra.mxu0 0
        %1175 = vmatprep.mubr.bf16.mxu0 0
        %1176 = vmatmul.mubr.bf16.gmra.mrb[0].mxu0 %v1141
        %v1177 = vpop.f32.mrb[0].mxu0
        %v1178 = vadd.f32 0.0, %v1177
        %v1179 = vpop.f32.mrb[0].mxu0
        %v1180 = vpop.f32.mrb[0].mxu0
        %v1181 = vpop.f32.mrb[0].mxu0
        %1182 = vdwg.mxu0
        %v1183 = vadd.f32 %v1105, %v1178
        %v1184 = vshrl.u32 %v974, 16
        %v1186 = vshll.u32 %v974, 16
        %v1188 = vrot.slane %v1186, 1
        %v1189 = vor.u32 %v1184, %v1188
        %v1198 = vunpack.c.l.b16 %v859
        %v1199 = vunpack.c.l.b16 %v860
        %v1200 = vunpack.c.l.b16 %v861
        %v1201 = vunpack.c.l.b16 %v862
        %v1202 = vunpack.c.l.b16 %v863
        %v1203 = vunpack.c.l.b16 %v864
        %v1204 = vunpack.c.l.b16 %v865
        %v1205 = vunpack.c.l.b16 %v866
        %v1206 = vpack.c.b16 %v1199, %v1198
        %v1207 = vpack.c.b16 %v1201, %v1200
        %v1208 = vpack.c.b16 %v1203, %v1202
        %v1209 = vpack.c.b16 %v1205, %v1204
        %v1215 = vsel %vm999, %v1189, 0
        %1217 = vmatprep.subr.bf16.mxu0 0
        %1218 = vmatpush1.bf16.msra.mxu0 %v1206
        %1219 = vmatprep.subr.bf16.mxu0 0
        %1220 = vmatpush1.bf16.msra.mxu0 %v1207
        %1221 = vmatprep.subr.bf16.mxu0 0
        %1222 = vmatpush1.bf16.msra.mxu0 %v1208
        %1223 = vmatprep.subr.bf16.mxu0 0
        %1224 = vmatpush1.bf16.msra.mxu0 %v1209
        %1225 = vmatprep.subr.bf16.mxu0 0
        %1226 = vmatpush1.bf16.msra.mxu0 0
        %1227 = vmatprep.subr.bf16.mxu0 0
        %1228 = vmatpush1.bf16.msra.mxu0 0
        %1229 = vmatprep.subr.bf16.mxu0 0
        %1230 = vmatpush1.bf16.msra.mxu0 0
        %1231 = vmatprep.subr.bf16.mxu0 0
        %1232 = vmatpush1.bf16.msra.mxu0 0
        %1233 = vmatprep.subr.bf16.mxu0 0
        %1234 = vmatpush1.bf16.msra.mxu0 0
        %1235 = vmatprep.subr.bf16.mxu0 0
        %1236 = vmatpush1.bf16.msra.mxu0 0
        %1237 = vmatprep.subr.bf16.mxu0 0
        %1238 = vmatpush1.bf16.msra.mxu0 0
        %1239 = vmatprep.subr.bf16.mxu0 0
        %1240 = vmatpush1.bf16.msra.mxu0 0
        %1241 = vmatprep.subr.bf16.mxu0 0
        %1242 = vmatpush1.bf16.msra.mxu0 0
        %1243 = vmatprep.subr.bf16.mxu0 0
        %1244 = vmatpush1.bf16.msra.mxu0 0
        %1245 = vmatprep.subr.bf16.mxu0 0
        %1246 = vmatpush1.bf16.msra.mxu0 0
        %1247 = vmatprep.subr.bf16.mxu0 0
        %1248 = vmatpush1.bf16.msra.mxu0 0
        %1249 = vmatprep.mubr.bf16.mxu0 0
        %1250 = vmatmul.mubr.bf16.gmra.mrb[0].mxu0 %v1215
        %v1251 = vpop.f32.mrb[0].mxu0
        %v1252 = vadd.f32 0.0, %v1251
        %v1253 = vpop.f32.mrb[0].mxu0
        %v1254 = vpop.f32.mrb[0].mxu0
        %v1255 = vpop.f32.mrb[0].mxu0
        %1256 = vdwg.mxu0
        %v1257 = vadd.f32 %v1183, %v1252
        %v1259 = vlaneseq
        %v1260 = vshrl.u32 %v1259, 7
        %v1261 = vsub.s32 0, %v1260
        %v1262 = vrot.slane %v867, %v1261
        %v1264 = vadd.f32 %v1257, %v1262
        %vm1265 = vcmp.ge.f32.partialorder %v1264, 0.0
        %v1266 = vmul.f32 %v1264, 0.2
        %v1267 = vsel %vm1265, %v1264, %v1266
        %v1268 = vpack.c.bf16 %v1267, %v1267
        %v1269 = vld [vmem:[%s4] sm:$0x7]
        %v1270 = vld [vmem:[%s4 + $0x4] sm:$0x7]
        %v1271 = vld [vmem:[%s5] sm:$0xf]
        %v1272 = vld [vmem:[%s5 + $0x4] sm:$0xf]
        %v1273 = vld [vmem:[%s5 + $0x8] sm:$0xf]
        %v1274 = vld [vmem:[%s5 + $0xc] sm:$0xf]
        %v1275 = vld [vmem:[%s5 + $0x10] sm:$0xf]
        %v1276 = vld [vmem:[%s5 + $0x14] sm:$0xf]
        %v1277 = vld [vmem:[%s5 + $0x18] sm:$0xf]
        %v1278 = vld [vmem:[%s5 + $0x1c] sm:$0xf]
        %v1279 = vld [vmem:[%s5 + $0x20] sm:$0xf]
        %v1280 = vld [vmem:[%s5 + $0x24] sm:$0xf]
        %v1281 = vld [vmem:[%s5 + $0x28] sm:$0xf]
        %v1282 = vld [vmem:[%s5 + $0x2c] sm:$0xf]
        %v1283 = vld [vmem:[%s5 + $0x30] sm:$0xf]
        %v1284 = vld [vmem:[%s5 + $0x34] sm:$0xf]
        %v1285 = vld [vmem:[%s5 + $0x38] sm:$0xf]
        %v1286 = vld [vmem:[%s5 + $0x3c] sm:$0xf]
        %v1287 = vld [vmem:[%s5 + $0x40] sm:$0xf]
        %v1288 = vld [vmem:[%s5 + $0x44] sm:$0xf]
        %v1289 = vld [vmem:[%s5 + $0x48] sm:$0xf]
        %v1290 = vld [vmem:[%s5 + $0x4c] sm:$0xf]
        %v1291 = vld [vmem:[%s5 + $0x50] sm:$0xf]
        %v1292 = vld [vmem:[%s5 + $0x54] sm:$0xf]
        %v1293 = vld [vmem:[%s5 + $0x58] sm:$0xf]
        %v1294 = vld [vmem:[%s5 + $0x5c] sm:$0xf]
        %v1295 = vld [vmem:[%s5 + $0x60] sm:$0xf]
        %v1296 = vld [vmem:[%s5 + $0x64] sm:$0xf]
        %v1297 = vld [vmem:[%s5 + $0x68] sm:$0xf]
        %v1298 = vld [vmem:[%s5 + $0x6c] sm:$0xf]
        %v1299 = vld [vmem:[%s5 + $0x70] sm:$0xf]
        %v1300 = vld [vmem:[%s5 + $0x74] sm:$0xf]
        %v1301 = vld [vmem:[%s5 + $0x78] sm:$0xf]
        %v1302 = vld [vmem:[%s5 + $0x7c] sm:$0xf]
        %v1303 = vld [vmem:[%s6] sm:$0x1]
        %vm1304 = vcmask 64512
        %v1306 = vsel %vm1304, %v1269, 0
        %vm1308 = vcmask 1043456
        %v1310 = vsel %vm1308, %v1268, 0
        %1312 = vmatprep.subr.bf16.mxu0 0
        %1313 = vmatpush1.bf16.msra.mxu0 %v1310
        %1314 = vmatprep.subr.bf16.mxu0 0
        %1315 = vmatpush1.bf16.msra.mxu0 0
        %1316 = vmatprep.subr.bf16.mxu0 0
        %1317 = vmatpush1.bf16.msra.mxu0 0
        %1318 = vmatprep.subr.bf16.mxu0 0
        %1319 = vmatpush1.bf16.msra.mxu0 0
        %1320 = vmatprep.subr.bf16.mxu0 0
        %1321 = vmatpush1.bf16.msra.mxu0 0
        %1322 = vmatprep.subr.bf16.mxu0 0
        %1323 = vmatpush1.bf16.msra.mxu0 0
        %1324 = vmatprep.subr.bf16.mxu0 0
        %1325 = vmatpush1.bf16.msra.mxu0 0
        %1326 = vmatprep.subr.bf16.mxu0 0
        %1327 = vmatpush1.bf16.msra.mxu0 0
        %1328 = vmatprep.subr.bf16.mxu0 0
        %1329 = vmatpush1.bf16.msra.mxu0 0
        %1330 = vmatprep.subr.bf16.mxu0 0
        %1331 = vmatpush1.bf16.msra.mxu0 0
        %1332 = vmatprep.subr.bf16.mxu0 0
        %1333 = vmatpush1.bf16.msra.mxu0 0
        %1334 = vmatprep.subr.bf16.mxu0 0
        %1335 = vmatpush1.bf16.msra.mxu0 0
        %1336 = vmatprep.subr.bf16.mxu0 0
        %1337 = vmatpush1.bf16.msra.mxu0 0
        %1338 = vmatprep.subr.bf16.mxu0 0
        %1339 = vmatpush1.bf16.msra.mxu0 0
        %1340 = vmatprep.subr.bf16.mxu0 0
        %1341 = vmatpush1.bf16.msra.mxu0 0
        %1342 = vmatprep.subr.bf16.mxu0 0
        %1343 = vmatpush1.bf16.msra.mxu0 0
        %1344 = vmatprep.mubr.bf16.mxu0 0
        %1345 = vmatmul.mubr.bf16.gmra.mrb[0].mxu0 %v1306
        %v1346 = vpop.f32.mrb[0].mxu0
        %v1347 = vadd.f32 0.0, %v1346
        %v1348 = vpop.f32.mrb[0].mxu0
        %v1349 = vpop.f32.mrb[0].mxu0
        %v1350 = vpop.f32.mrb[0].mxu0
        %1351 = vdwg.mxu0
        %v1352 = vpack.c.bf16 %v1347, %v1347
        %v1354 = vsel %vm1304, %v1270, 0
        %1356 = vmatprep.subr.bf16.mxu0 0
        %1357 = vmatpush1.bf16.msra.mxu0 %v1310
        %1358 = vmatprep.subr.bf16.mxu0 0
        %1359 = vmatpush1.bf16.msra.mxu0 0
        %1360 = vmatprep.subr.bf16.mxu0 0
        %1361 = vmatpush1.bf16.msra.mxu0 0
        %1362 = vmatprep.subr.bf16.mxu0 0
        %1363 = vmatpush1.bf16.msra.mxu0 0
        %1364 = vmatprep.subr.bf16.mxu0 0
        %1365 = vmatpush1.bf16.msra.mxu0 0
        %1366 = vmatprep.subr.bf16.mxu0 0
        %1367 = vmatpush1.bf16.msra.mxu0 0
        %1368 = vmatprep.subr.bf16.mxu0 0
        %1369 = vmatpush1.bf16.msra.mxu0 0
        %1370 = vmatprep.subr.bf16.mxu0 0
        %1371 = vmatpush1.bf16.msra.mxu0 0
        %1372 = vmatprep.subr.bf16.mxu0 0
        %1373 = vmatpush1.bf16.msra.mxu0 0
        %1374 = vmatprep.subr.bf16.mxu0 0
        %1375 = vmatpush1.bf16.msra.mxu0 0
        %1376 = vmatprep.subr.bf16.mxu0 0
        %1377 = vmatpush1.bf16.msra.mxu0 0
        %1378 = vmatprep.subr.bf16.mxu0 0
        %1379 = vmatpush1.bf16.msra.mxu0 0
        %1380 = vmatprep.subr.bf16.mxu0 0
        %1381 = vmatpush1.bf16.msra.mxu0 0
        %1382 = vmatprep.subr.bf16.mxu0 0
        %1383 = vmatpush1.bf16.msra.mxu0 0
        %1384 = vmatprep.subr.bf16.mxu0 0
        %1385 = vmatpush1.bf16.msra.mxu0 0
        %1386 = vmatprep.subr.bf16.mxu0 0
        %1387 = vmatpush1.bf16.msra.mxu0 0
        %1388 = vmatprep.mubr.bf16.mxu0 0
        %1389 = vmatmul.mubr.bf16.gmra.mrb[0].mxu0 %v1354
        %v1390 = vpop.f32.mrb[0].mxu0
        %v1391 = vadd.f32 0.0, %v1390
        %v1392 = vpop.f32.mrb[0].mxu0
        %v1393 = vpop.f32.mrb[0].mxu0
        %v1394 = vpop.f32.mrb[0].mxu0
        %1395 = vdwg.mxu0
        %v1396 = vpack.c.bf16 %v1391, %v1391
        %v1405 = vunpack.c.l.b16 %v1279
        %v1406 = vunpack.c.l.b16 %v1280
        %v1407 = vunpack.c.l.b16 %v1281
        %v1408 = vunpack.c.l.b16 %v1282
        %v1409 = vunpack.c.l.b16 %v1283
        %v1410 = vunpack.c.l.b16 %v1284
        %v1411 = vunpack.c.l.b16 %v1285
        %v1412 = vunpack.c.l.b16 %v1286
        %v1413 = vpack.c.b16 %v1406, %v1405
        %v1414 = vpack.c.b16 %v1408, %v1407
        %v1415 = vpack.c.b16 %v1410, %v1409
        %v1416 = vpack.c.b16 %v1412, %v1411
        %v1422 = vsel %vm999, %v1396, 0
        %1424 = vmatprep.subr.bf16.mxu0 0
        %1425 = vmatpush1.bf16.msra.mxu0 %v1413
        %1426 = vmatprep.subr.bf16.mxu0 0
        %1427 = vmatpush1.bf16.msra.mxu0 %v1414
        %1428 = vmatprep.subr.bf16.mxu0 0
        %1429 = vmatpush1.bf16.msra.mxu0 %v1415
        %1430 = vmatprep.subr.bf16.mxu0 0
        %1431 = vmatpush1.bf16.msra.mxu0 %v1416
        %1432 = vmatprep.subr.bf16.mxu0 0
        %1433 = vmatpush1.bf16.msra.mxu0 0
        %1434 = vmatprep.subr.bf16.mxu0 0
        %1435 = vmatpush1.bf16.msra.mxu0 0
        %1436 = vmatprep.subr.bf16.mxu0 0
        %1437 = vmatpush1.bf16.msra.mxu0 0
        %1438 = vmatprep.subr.bf16.mxu0 0
        %1439 = vmatpush1.bf16.msra.mxu0 0
        %1440 = vmatprep.subr.bf16.mxu0 0
        %1441 = vmatpush1.bf16.msra.mxu0 0
        %1442 = vmatprep.subr.bf16.mxu0 0
        %1443 = vmatpush1.bf16.msra.mxu0 0
        %1444 = vmatprep.subr.bf16.mxu0 0
        %1445 = vmatpush1.bf16.msra.mxu0 0
        %1446 = vmatprep.subr.bf16.mxu0 0
        %1447 = vmatpush1.bf16.msra.mxu0 0
        %1448 = vmatprep.subr.bf16.mxu0 0
        %1449 = vmatpush1.bf16.msra.mxu0 0
        %1450 = vmatprep.subr.bf16.mxu0 0
        %1451 = vmatpush1.bf16.msra.mxu0 0
        %1452 = vmatprep.subr.bf16.mxu0 0
        %1453 = vmatpush1.bf16.msra.mxu0 0
        %1454 = vmatprep.subr.bf16.mxu0 0
        %1455 = vmatpush1.bf16.msra.mxu0 0
        %1456 = vmatprep.mubr.bf16.mxu0 0
        %1457 = vmatmul.mubr.bf16.gmra.mrb[0].mxu0 %v1422
        %v1458 = vpop.f32.mrb[0].mxu0
        %v1459 = vadd.f32 0.0, %v1458
        %v1460 = vpop.f32.mrb[0].mxu0
        %v1461 = vpop.f32.mrb[0].mxu0
        %v1462 = vpop.f32.mrb[0].mxu0
        %1463 = vdwg.mxu0
        %v1472 = vunpack.c.l.b16 %v1271
        %v1473 = vunpack.c.l.b16 %v1272
        %v1474 = vunpack.c.l.b16 %v1273
        %v1475 = vunpack.c.l.b16 %v1274
        %v1476 = vunpack.c.l.b16 %v1275
        %v1477 = vunpack.c.l.b16 %v1276
        %v1478 = vunpack.c.l.b16 %v1277
        %v1479 = vunpack.c.l.b16 %v1278
        %v1480 = vpack.c.b16 %v1473, %v1472
        %v1481 = vpack.c.b16 %v1475, %v1474
        %v1482 = vpack.c.b16 %v1477, %v1476
        %v1483 = vpack.c.b16 %v1479, %v1478
        %v1489 = vsel %vm999, %v1352, 0
        %1491 = vmatprep.subr.bf16.mxu0 0
        %1492 = vmatpush1.bf16.msra.mxu0 %v1480
        %1493 = vmatprep.subr.bf16.mxu0 0
        %1494 = vmatpush1.bf16.msra.mxu0 %v1481
        %1495 = vmatprep.subr.bf16.mxu0 0
        %1496 = vmatpush1.bf16.msra.mxu0 %v1482
        %1497 = vmatprep.subr.bf16.mxu0 0
        %1498 = vmatpush1.bf16.msra.mxu0 %v1483
        %1499 = vmatprep.subr.bf16.mxu0 0
        %1500 = vmatpush1.bf16.msra.mxu0 0
        %1501 = vmatprep.subr.bf16.mxu0 0
        %1502 = vmatpush1.bf16.msra.mxu0 0
        %1503 = vmatprep.subr.bf16.mxu0 0
        %1504 = vmatpush1.bf16.msra.mxu0 0
        %1505 = vmatprep.subr.bf16.mxu0 0
        %1506 = vmatpush1.bf16.msra.mxu0 0
        %1507 = vmatprep.subr.bf16.mxu0 0
        %1508 = vmatpush1.bf16.msra.mxu0 0
        %1509 = vmatprep.subr.bf16.mxu0 0
        %1510 = vmatpush1.bf16.msra.mxu0 0
        %1511 = vmatprep.subr.bf16.mxu0 0
        %1512 = vmatpush1.bf16.msra.mxu0 0
        %1513 = vmatprep.subr.bf16.mxu0 0
        %1514 = vmatpush1.bf16.msra.mxu0 0
        %1515 = vmatprep.subr.bf16.mxu0 0
        %1516 = vmatpush1.bf16.msra.mxu0 0
        %1517 = vmatprep.subr.bf16.mxu0 0
        %1518 = vmatpush1.bf16.msra.mxu0 0
        %1519 = vmatprep.subr.bf16.mxu0 0
        %1520 = vmatpush1.bf16.msra.mxu0 0
        %1521 = vmatprep.subr.bf16.mxu0 0
        %1522 = vmatpush1.bf16.msra.mxu0 0
        %1523 = vmatprep.mubr.bf16.mxu0 0
        %1524 = vmatmul.mubr.bf16.gmra.mrb[0].mxu0 %v1489
        %v1525 = vpop.f32.mrb[0].mxu0
        %v1526 = vadd.f32 %v1459, %v1525
        %v1527 = vpop.f32.mrb[0].mxu0
        %v1528 = vpop.f32.mrb[0].mxu0
        %v1529 = vpop.f32.mrb[0].mxu0
        %1530 = vdwg.mxu0
        %v1531 = vshrl.u32 %v1352, 16
        %v1533 = vshll.u32 %v1352, 16
        %v1535 = vrot.slane %v1533, 1
        %v1536 = vor.u32 %v1531, %v1535
        %v1545 = vunpack.c.l.b16 %v1287
        %v1546 = vunpack.c.l.b16 %v1288
        %v1547 = vunpack.c.l.b16 %v1289
        %v1548 = vunpack.c.l.b16 %v1290
        %v1549 = vunpack.c.l.b16 %v1291
        %v1550 = vunpack.c.l.b16 %v1292
        %v1551 = vunpack.c.l.b16 %v1293
        %v1552 = vunpack.c.l.b16 %v1294
        %v1553 = vpack.c.b16 %v1546, %v1545
        %v1554 = vpack.c.b16 %v1548, %v1547
        %v1555 = vpack.c.b16 %v1550, %v1549
        %v1556 = vpack.c.b16 %v1552, %v1551
        %v1562 = vsel %vm999, %v1536, 0
        %1564 = vmatprep.subr.bf16.mxu0 0
        %1565 = vmatpush1.bf16.msra.mxu0 %v1553
        %1566 = vmatprep.subr.bf16.mxu0 0
        %1567 = vmatpush1.bf16.msra.mxu0 %v1554
        %1568 = vmatprep.subr.bf16.mxu0 0
        %1569 = vmatpush1.bf16.msra.mxu0 %v1555
        %1570 = vmatprep.subr.bf16.mxu0 0
        %1571 = vmatpush1.bf16.msra.mxu0 %v1556
        %1572 = vmatprep.subr.bf16.mxu0 0
        %1573 = vmatpush1.bf16.msra.mxu0 0
        %1574 = vmatprep.subr.bf16.mxu0 0
        %1575 = vmatpush1.bf16.msra.mxu0 0
        %1576 = vmatprep.subr.bf16.mxu0 0
        %1577 = vmatpush1.bf16.msra.mxu0 0
        %1578 = vmatprep.subr.bf16.mxu0 0
        %1579 = vmatpush1.bf16.msra.mxu0 0
        %1580 = vmatprep.subr.bf16.mxu0 0
        %1581 = vmatpush1.bf16.msra.mxu0 0
        %1582 = vmatprep.subr.bf16.mxu0 0
        %1583 = vmatpush1.bf16.msra.mxu0 0
        %1584 = vmatprep.subr.bf16.mxu0 0
        %1585 = vmatpush1.bf16.msra.mxu0 0
        %1586 = vmatprep.subr.bf16.mxu0 0
        %1587 = vmatpush1.bf16.msra.mxu0 0
        %1588 = vmatprep.subr.bf16.mxu0 0
        %1589 = vmatpush1.bf16.msra.mxu0 0
        %1590 = vmatprep.subr.bf16.mxu0 0
        %1591 = vmatpush1.bf16.msra.mxu0 0
        %1592 = vmatprep.subr.bf16.mxu0 0
        %1593 = vmatpush1.bf16.msra.mxu0 0
        %1594 = vmatprep.subr.bf16.mxu0 0
        %1595 = vmatpush1.bf16.msra.mxu0 0
        %1596 = vmatprep.mubr.bf16.mxu0 0
        %1597 = vmatmul.mubr.bf16.gmra.mrb[0].mxu0 %v1562
        %v1598 = vpop.f32.mrb[0].mxu0
        %v1599 = vadd.f32 0.0, %v1598
        %v1600 = vpop.f32.mrb[0].mxu0
        %v1601 = vpop.f32.mrb[0].mxu0
        %v1602 = vpop.f32.mrb[0].mxu0
        %1603 = vdwg.mxu0
        %v1604 = vadd.f32 %v1526, %v1599
        %v1605 = vshrl.u32 %v1396, 16
        %v1607 = vshll.u32 %v1396, 16
        %v1609 = vrot.slane %v1607, 1
        %v1610 = vor.u32 %v1605, %v1609
        %v1619 = vunpack.c.l.b16 %v1295
        %v1620 = vunpack.c.l.b16 %v1296
        %v1621 = vunpack.c.l.b16 %v1297
        %v1622 = vunpack.c.l.b16 %v1298
        %v1623 = vunpack.c.l.b16 %v1299
        %v1624 = vunpack.c.l.b16 %v1300
        %v1625 = vunpack.c.l.b16 %v1301
        %v1626 = vunpack.c.l.b16 %v1302
        %v1627 = vpack.c.b16 %v1620, %v1619
        %v1628 = vpack.c.b16 %v1622, %v1621
        %v1629 = vpack.c.b16 %v1624, %v1623
        %v1630 = vpack.c.b16 %v1626, %v1625
        %v1636 = vsel %vm999, %v1610, 0
        %1638 = vmatprep.subr.bf16.mxu0 0
        %1639 = vmatpush1.bf16.msra.mxu0 %v1627
        %1640 = vmatprep.subr.bf16.mxu0 0
        %1641 = vmatpush1.bf16.msra.mxu0 %v1628
        %1642 = vmatprep.subr.bf16.mxu0 0
        %1643 = vmatpush1.bf16.msra.mxu0 %v1629
        %1644 = vmatprep.subr.bf16.mxu0 0
        %1645 = vmatpush1.bf16.msra.mxu0 %v1630
        %1646 = vmatprep.subr.bf16.mxu0 0
        %1647 = vmatpush1.bf16.msra.mxu0 0
        %1648 = vmatprep.subr.bf16.mxu0 0
        %1649 = vmatpush1.bf16.msra.mxu0 0
        %1650 = vmatprep.subr.bf16.mxu0 0
        %1651 = vmatpush1.bf16.msra.mxu0 0
        %1652 = vmatprep.subr.bf16.mxu0 0
        %1653 = vmatpush1.bf16.msra.mxu0 0
        %1654 = vmatprep.subr.bf16.mxu0 0
        %1655 = vmatpush1.bf16.msra.mxu0 0
        %1656 = vmatprep.subr.bf16.mxu0 0
        %1657 = vmatpush1.bf16.msra.mxu0 0
        %1658 = vmatprep.subr.bf16.mxu0 0
        %1659 = vmatpush1.bf16.msra.mxu0 0
        %1660 = vmatprep.subr.bf16.mxu0 0
        %1661 = vmatpush1.bf16.msra.mxu0 0
        %1662 = vmatprep.subr.bf16.mxu0 0
        %1663 = vmatpush1.bf16.msra.mxu0 0
        %1664 = vmatprep.subr.bf16.mxu0 0
        %1665 = vmatpush1.bf16.msra.mxu0 0
        %1666 = vmatprep.subr.bf16.mxu0 0
        %1667 = vmatpush1.bf16.msra.mxu0 0
        %1668 = vmatprep.subr.bf16.mxu0 0
        %1669 = vmatpush1.bf16.msra.mxu0 0
        %1670 = vmatprep.mubr.bf16.mxu0 0
        %1671 = vmatmul.mubr.bf16.gmra.mrb[0].mxu0 %v1636
        %v1672 = vpop.f32.mrb[0].mxu0
        %v1673 = vadd.f32 0.0, %v1672
        %v1674 = vpop.f32.mrb[0].mxu0
        %v1675 = vpop.f32.mrb[0].mxu0
        %v1676 = vpop.f32.mrb[0].mxu0
        %1677 = vdwg.mxu0
        %v1678 = vadd.f32 %v1604, %v1673
        %v1680 = vlaneseq
        %v1681 = vshrl.u32 %v1680, 7
        %v1682 = vsub.s32 0, %v1681
        %v1683 = vrot.slane %v1303, %v1682
        %v1685 = vadd.f32 %v1678, %v1683
        %vm1686 = vcmp.ge.f32.partialorder %v1685, 0.0
        %v1687 = vmul.f32 %v1685, 0.2
        %v1688 = vsel %vm1686, %v1685, %v1687
        %v1689 = vpack.c.bf16 %v1688, %v1688
        %v1690 = vld [vmem:[%s7] sm:$0x3]
        %v1691 = vld [vmem:[%s7 + $0x2] sm:$0x3]
        %v1692 = vld [vmem:[%s8] sm:$0xf]
        %v1693 = vld [vmem:[%s8 + $0x4] sm:$0xf]
        %v1694 = vld [vmem:[%s8 + $0x8] sm:$0xf]
        %v1695 = vld [vmem:[%s8 + $0xc] sm:$0xf]
        %v1696 = vld [vmem:[%s8 + $0x10] sm:$0xf]
        %v1697 = vld [vmem:[%s8 + $0x14] sm:$0xf]
        %v1698 = vld [vmem:[%s8 + $0x18] sm:$0xf]
        %v1699 = vld [vmem:[%s8 + $0x1c] sm:$0xf]
        %v1700 = vld [vmem:[%s8 + $0x20] sm:$0xf]
        %v1701 = vld [vmem:[%s8 + $0x24] sm:$0xf]
        %v1702 = vld [vmem:[%s8 + $0x28] sm:$0xf]
        %v1703 = vld [vmem:[%s8 + $0x2c] sm:$0xf]
        %v1704 = vld [vmem:[%s8 + $0x30] sm:$0xf]
        %v1705 = vld [vmem:[%s8 + $0x34] sm:$0xf]
        %v1706 = vld [vmem:[%s8 + $0x38] sm:$0xf]
        %v1707 = vld [vmem:[%s8 + $0x3c] sm:$0xf]
        %v1708 = vld [vmem:[%s8 + $0x40] sm:$0xf]
        %v1709 = vld [vmem:[%s8 + $0x44] sm:$0xf]
        %v1710 = vld [vmem:[%s8 + $0x48] sm:$0xf]
        %v1711 = vld [vmem:[%s8 + $0x4c] sm:$0xf]
        %v1712 = vld [vmem:[%s8 + $0x50] sm:$0xf]
        %v1713 = vld [vmem:[%s8 + $0x54] sm:$0xf]
        %v1714 = vld [vmem:[%s8 + $0x58] sm:$0xf]
        %v1715 = vld [vmem:[%s8 + $0x5c] sm:$0xf]
        %v1716 = vld [vmem:[%s8 + $0x60] sm:$0xf]
        %v1717 = vld [vmem:[%s8 + $0x64] sm:$0xf]
        %v1718 = vld [vmem:[%s8 + $0x68] sm:$0xf]
        %v1719 = vld [vmem:[%s8 + $0x6c] sm:$0xf]
        %v1720 = vld [vmem:[%s8 + $0x70] sm:$0xf]
        %v1721 = vld [vmem:[%s8 + $0x74] sm:$0xf]
        %v1722 = vld [vmem:[%s8 + $0x78] sm:$0xf]
        %v1723 = vld [vmem:[%s8 + $0x7c] sm:$0xf]
        %v1724 = vld [vmem:[%s9] sm:$0x1]
        %vm1725 = vcmask 31744
        %v1727 = vsel %vm1725, %v1690, 0
        %vm1729 = vcmask 1041408
        %v1731 = vsel %vm1729, %v1689, 0
        %1733 = vmatprep.subr.bf16.mxu0 0
        %1734 = vmatpush1.bf16.msra.mxu0 %v1731
        %1735 = vmatprep.subr.bf16.mxu0 0
        %1736 = vmatpush1.bf16.msra.mxu0 0
        %1737 = vmatprep.subr.bf16.mxu0 0
        %1738 = vmatpush1.bf16.msra.mxu0 0
        %1739 = vmatprep.subr.bf16.mxu0 0
        %1740 = vmatpush1.bf16.msra.mxu0 0
        %1741 = vmatprep.subr.bf16.mxu0 0
        %1742 = vmatpush1.bf16.msra.mxu0 0
        %1743 = vmatprep.subr.bf16.mxu0 0
        %1744 = vmatpush1.bf16.msra.mxu0 0
        %1745 = vmatprep.subr.bf16.mxu0 0
        %1746 = vmatpush1.bf16.msra.mxu0 0
        %1747 = vmatprep.subr.bf16.mxu0 0
        %1748 = vmatpush1.bf16.msra.mxu0 0
        %1749 = vmatprep.subr.bf16.mxu0 0
        %1750 = vmatpush1.bf16.msra.mxu0 0
        %1751 = vmatprep.subr.bf16.mxu0 0
        %1752 = vmatpush1.bf16.msra.mxu0 0
        %1753 = vmatprep.subr.bf16.mxu0 0
        %1754 = vmatpush1.bf16.msra.mxu0 0
        %1755 = vmatprep.subr.bf16.mxu0 0
        %1756 = vmatpush1.bf16.msra.mxu0 0
        %1757 = vmatprep.subr.bf16.mxu0 0
        %1758 = vmatpush1.bf16.msra.mxu0 0
        %1759 = vmatprep.subr.bf16.mxu0 0
        %1760 = vmatpush1.bf16.msra.mxu0 0
        %1761 = vmatprep.subr.bf16.mxu0 0
        %1762 = vmatpush1.bf16.msra.mxu0 0
        %1763 = vmatprep.subr.bf16.mxu0 0
        %1764 = vmatpush1.bf16.msra.mxu0 0
        %1765 = vmatprep.mubr.bf16.mxu0 0
        %1766 = vmatmul.mubr.bf16.gmra.mrb[0].mxu0 %v1727
        %v1767 = vpop.f32.mrb[0].mxu0
        %v1768 = vadd.f32 0.0, %v1767
        %v1769 = vpop.f32.mrb[0].mxu0
        %v1770 = vpop.f32.mrb[0].mxu0
        %v1771 = vpop.f32.mrb[0].mxu0
        %1772 = vdwg.mxu0
        %v1773 = vpack.c.bf16 %v1768, %v1768
        %v1775 = vsel %vm1725, %v1691, 0
        %1777 = vmatprep.subr.bf16.mxu0 0
        %1778 = vmatpush1.bf16.msra.mxu0 %v1731
        %1779 = vmatprep.subr.bf16.mxu0 0
        %1780 = vmatpush1.bf16.msra.mxu0 0
        %1781 = vmatprep.subr.bf16.mxu0 0
        %1782 = vmatpush1.bf16.msra.mxu0 0
        %1783 = vmatprep.subr.bf16.mxu0 0
        %1784 = vmatpush1.bf16.msra.mxu0 0
        %1785 = vmatprep.subr.bf16.mxu0 0
        %1786 = vmatpush1.bf16.msra.mxu0 0
        %1787 = vmatprep.subr.bf16.mxu0 0
        %1788 = vmatpush1.bf16.msra.mxu0 0
        %1789 = vmatprep.subr.bf16.mxu0 0
        %1790 = vmatpush1.bf16.msra.mxu0 0
        %1791 = vmatprep.subr.bf16.mxu0 0
        %1792 = vmatpush1.bf16.msra.mxu0 0
        %1793 = vmatprep.subr.bf16.mxu0 0
        %1794 = vmatpush1.bf16.msra.mxu0 0
        %1795 = vmatprep.subr.bf16.mxu0 0
        %1796 = vmatpush1.bf16.msra.mxu0 0
        %1797 = vmatprep.subr.bf16.mxu0 0
        %1798 = vmatpush1.bf16.msra.mxu0 0
        %1799 = vmatprep.subr.bf16.mxu0 0
        %1800 = vmatpush1.bf16.msra.mxu0 0
        %1801 = vmatprep.subr.bf16.mxu0 0
        %1802 = vmatpush1.bf16.msra.mxu0 0
        %1803 = vmatprep.subr.bf16.mxu0 0
        %1804 = vmatpush1.bf16.msra.mxu0 0
        %1805 = vmatprep.subr.bf16.mxu0 0
        %1806 = vmatpush1.bf16.msra.mxu0 0
        %1807 = vmatprep.subr.bf16.mxu0 0
        %1808 = vmatpush1.bf16.msra.mxu0 0
        %1809 = vmatprep.mubr.bf16.mxu0 0
        %1810 = vmatmul.mubr.bf16.gmra.mrb[0].mxu0 %v1775
        %v1811 = vpop.f32.mrb[0].mxu0
        %v1812 = vadd.f32 0.0, %v1811
        %v1813 = vpop.f32.mrb[0].mxu0
        %v1814 = vpop.f32.mrb[0].mxu0
        %v1815 = vpop.f32.mrb[0].mxu0
        %1816 = vdwg.mxu0
        %v1817 = vpack.c.bf16 %v1812, %v1812
        %v1826 = vunpack.c.l.b16 %v1700
        %v1827 = vunpack.c.l.b16 %v1701
        %v1828 = vunpack.c.l.b16 %v1702
        %v1829 = vunpack.c.l.b16 %v1703
        %v1830 = vunpack.c.l.b16 %v1704
        %v1831 = vunpack.c.l.b16 %v1705
        %v1832 = vunpack.c.l.b16 %v1706
        %v1833 = vunpack.c.l.b16 %v1707
        %v1834 = vpack.c.b16 %v1827, %v1826
        %v1835 = vpack.c.b16 %v1829, %v1828
        %v1836 = vpack.c.b16 %v1831, %v1830
        %v1837 = vpack.c.b16 %v1833, %v1832
        %v1843 = vsel %vm999, %v1817, 0
        %1845 = vmatprep.subr.bf16.mxu0 0
        %1846 = vmatpush1.bf16.msra.mxu0 %v1834
        %1847 = vmatprep.subr.bf16.mxu0 0
        %1848 = vmatpush1.bf16.msra.mxu0 %v1835
        %1849 = vmatprep.subr.bf16.mxu0 0
        %1850 = vmatpush1.bf16.msra.mxu0 %v1836
        %1851 = vmatprep.subr.bf16.mxu0 0
        %1852 = vmatpush1.bf16.msra.mxu0 %v1837
        %1853 = vmatprep.subr.bf16.mxu0 0
        %1854 = vmatpush1.bf16.msra.mxu0 0
        %1855 = vmatprep.subr.bf16.mxu0 0
        %1856 = vmatpush1.bf16.msra.mxu0 0
        %1857 = vmatprep.subr.bf16.mxu0 0
        %1858 = vmatpush1.bf16.msra.mxu0 0
        %1859 = vmatprep.subr.bf16.mxu0 0
        %1860 = vmatpush1.bf16.msra.mxu0 0
        %1861 = vmatprep.subr.bf16.mxu0 0
        %1862 = vmatpush1.bf16.msra.mxu0 0
        %1863 = vmatprep.subr.bf16.mxu0 0
        %1864 = vmatpush1.bf16.msra.mxu0 0
        %1865 = vmatprep.subr.bf16.mxu0 0
        %1866 = vmatpush1.bf16.msra.mxu0 0
        %1867 = vmatprep.subr.bf16.mxu0 0
        %1868 = vmatpush1.bf16.msra.mxu0 0
        %1869 = vmatprep.subr.bf16.mxu0 0
        %1870 = vmatpush1.bf16.msra.mxu0 0
        %1871 = vmatprep.subr.bf16.mxu0 0
        %1872 = vmatpush1.bf16.msra.mxu0 0
        %1873 = vmatprep.subr.bf16.mxu0 0
        %1874 = vmatpush1.bf16.msra.mxu0 0
        %1875 = vmatprep.subr.bf16.mxu0 0
        %1876 = vmatpush1.bf16.msra.mxu0 0
        %1877 = vmatprep.mubr.bf16.mxu0 0
        %1878 = vmatmul.mubr.bf16.gmra.mrb[0].mxu0 %v1843
        %v1879 = vpop.f32.mrb[0].mxu0
        %v1880 = vadd.f32 0.0, %v1879
        %v1881 = vpop.f32.mrb[0].mxu0
        %v1882 = vpop.f32.mrb[0].mxu0
        %v1883 = vpop.f32.mrb[0].mxu0
        %1884 = vdwg.mxu0
        %v1893 = vunpack.c.l.b16 %v1692
        %v1894 = vunpack.c.l.b16 %v1693
        %v1895 = vunpack.c.l.b16 %v1694
        %v1896 = vunpack.c.l.b16 %v1695
        %v1897 = vunpack.c.l.b16 %v1696
        %v1898 = vunpack.c.l.b16 %v1697
        %v1899 = vunpack.c.l.b16 %v1698
        %v1900 = vunpack.c.l.b16 %v1699
        %v1901 = vpack.c.b16 %v1894, %v1893
        %v1902 = vpack.c.b16 %v1896, %v1895
        %v1903 = vpack.c.b16 %v1898, %v1897
        %v1904 = vpack.c.b16 %v1900, %v1899
        %v1910 = vsel %vm999, %v1773, 0
        %1912 = vmatprep.subr.bf16.mxu0 0
        %1913 = vmatpush1.bf16.msra.mxu0 %v1901
        %1914 = vmatprep.subr.bf16.mxu0 0
        %1915 = vmatpush1.bf16.msra.mxu0 %v1902
        %1916 = vmatprep.subr.bf16.mxu0 0
        %1917 = vmatpush1.bf16.msra.mxu0 %v1903
        %1918 = vmatprep.subr.bf16.mxu0 0
        %1919 = vmatpush1.bf16.msra.mxu0 %v1904
        %1920 = vmatprep.subr.bf16.mxu0 0
        %1921 = vmatpush1.bf16.msra.mxu0 0
        %1922 = vmatprep.subr.bf16.mxu0 0
        %1923 = vmatpush1.bf16.msra.mxu0 0
        %1924 = vmatprep.subr.bf16.mxu0 0
        %1925 = vmatpush1.bf16.msra.mxu0 0
        %1926 = vmatprep.subr.bf16.mxu0 0
        %1927 = vmatpush1.bf16.msra.mxu0 0
        %1928 = vmatprep.subr.bf16.mxu0 0
        %1929 = vmatpush1.bf16.msra.mxu0 0
        %1930 = vmatprep.subr.bf16.mxu0 0
        %1931 = vmatpush1.bf16.msra.mxu0 0
        %1932 = vmatprep.subr.bf16.mxu0 0
        %1933 = vmatpush1.bf16.msra.mxu0 0
        %1934 = vmatprep.subr.bf16.mxu0 0
        %1935 = vmatpush1.bf16.msra.mxu0 0
        %1936 = vmatprep.subr.bf16.mxu0 0
        %1937 = vmatpush1.bf16.msra.mxu0 0
        %1938 = vmatprep.subr.bf16.mxu0 0
        %1939 = vmatpush1.bf16.msra.mxu0 0
        %1940 = vmatprep.subr.bf16.mxu0 0
        %1941 = vmatpush1.bf16.msra.mxu0 0
        %1942 = vmatprep.subr.bf16.mxu0 0
        %1943 = vmatpush1.bf16.msra.mxu0 0
        %1944 = vmatprep.mubr.bf16.mxu0 0
        %1945 = vmatmul.mubr.bf16.gmra.mrb[0].mxu0 %v1910
        %v1946 = vpop.f32.mrb[0].mxu0
        %v1947 = vadd.f32 %v1880, %v1946
        %v1948 = vpop.f32.mrb[0].mxu0
        %v1949 = vpop.f32.mrb[0].mxu0
        %v1950 = vpop.f32.mrb[0].mxu0
        %1951 = vdwg.mxu0
        %v1952 = vshrl.u32 %v1773, 16
        %v1954 = vshll.u32 %v1773, 16
        %v1956 = vrot.slane %v1954, 1
        %v1957 = vor.u32 %v1952, %v1956
        %v1966 = vunpack.c.l.b16 %v1708
        %v1967 = vunpack.c.l.b16 %v1709
        %v1968 = vunpack.c.l.b16 %v1710
        %v1969 = vunpack.c.l.b16 %v1711
        %v1970 = vunpack.c.l.b16 %v1712
        %v1971 = vunpack.c.l.b16 %v1713
        %v1972 = vunpack.c.l.b16 %v1714
        %v1973 = vunpack.c.l.b16 %v1715
        %v1974 = vpack.c.b16 %v1967, %v1966
        %v1975 = vpack.c.b16 %v1969, %v1968
        %v1976 = vpack.c.b16 %v1971, %v1970
        %v1977 = vpack.c.b16 %v1973, %v1972
        %v1983 = vsel %vm999, %v1957, 0
        %1985 = vmatprep.subr.bf16.mxu0 0
        %1986 = vmatpush1.bf16.msra.mxu0 %v1974
        %1987 = vmatprep.subr.bf16.mxu0 0
        %1988 = vmatpush1.bf16.msra.mxu0 %v1975
        %1989 = vmatprep.subr.bf16.mxu0 0
        %1990 = vmatpush1.bf16.msra.mxu0 %v1976
        %1991 = vmatprep.subr.bf16.mxu0 0
        %1992 = vmatpush1.bf16.msra.mxu0 %v1977
        %1993 = vmatprep.subr.bf16.mxu0 0
        %1994 = vmatpush1.bf16.msra.mxu0 0
        %1995 = vmatprep.subr.bf16.mxu0 0
        %1996 = vmatpush1.bf16.msra.mxu0 0
        %1997 = vmatprep.subr.bf16.mxu0 0
        %1998 = vmatpush1.bf16.msra.mxu0 0
        %1999 = vmatprep.subr.bf16.mxu0 0
        %2000 = vmatpush1.bf16.msra.mxu0 0
        %2001 = vmatprep.subr.bf16.mxu0 0
        %2002 = vmatpush1.bf16.msra.mxu0 0
        %2003 = vmatprep.subr.bf16.mxu0 0
        %2004 = vmatpush1.bf16.msra.mxu0 0
        %2005 = vmatprep.subr.bf16.mxu0 0
        %2006 = vmatpush1.bf16.msra.mxu0 0
        %2007 = vmatprep.subr.bf16.mxu0 0
        %2008 = vmatpush1.bf16.msra.mxu0 0
        %2009 = vmatprep.subr.bf16.mxu0 0
        %2010 = vmatpush1.bf16.msra.mxu0 0
        %2011 = vmatprep.subr.bf16.mxu0 0
        %2012 = vmatpush1.bf16.msra.mxu0 0
        %2013 = vmatprep.subr.bf16.mxu0 0
        %2014 = vmatpush1.bf16.msra.mxu0 0
        %2015 = vmatprep.subr.bf16.mxu0 0
        %2016 = vmatpush1.bf16.msra.mxu0 0
        %2017 = vmatprep.mubr.bf16.mxu0 0
        %2018 = vmatmul.mubr.bf16.gmra.mrb[0].mxu0 %v1983
        %v2019 = vpop.f32.mrb[0].mxu0
        %v2020 = vadd.f32 0.0, %v2019
        %v2021 = vpop.f32.mrb[0].mxu0
        %v2022 = vpop.f32.mrb[0].mxu0
        %v2023 = vpop.f32.mrb[0].mxu0
        %2024 = vdwg.mxu0
        %v2025 = vadd.f32 %v1947, %v2020
        %v2026 = vshrl.u32 %v1817, 16
        %v2028 = vshll.u32 %v1817, 16
        %v2030 = vrot.slane %v2028, 1
        %v2031 = vor.u32 %v2026, %v2030
        %v2040 = vunpack.c.l.b16 %v1716
        %v2041 = vunpack.c.l.b16 %v1717
        %v2042 = vunpack.c.l.b16 %v1718
        %v2043 = vunpack.c.l.b16 %v1719
        %v2044 = vunpack.c.l.b16 %v1720
        %v2045 = vunpack.c.l.b16 %v1721
        %v2046 = vunpack.c.l.b16 %v1722
        %v2047 = vunpack.c.l.b16 %v1723
        %v2048 = vpack.c.b16 %v2041, %v2040
        %v2049 = vpack.c.b16 %v2043, %v2042
        %v2050 = vpack.c.b16 %v2045, %v2044
        %v2051 = vpack.c.b16 %v2047, %v2046
        %v2057 = vsel %vm999, %v2031, 0
        %2059 = vmatprep.subr.bf16.mxu0 0
        %2060 = vmatpush1.bf16.msra.mxu0 %v2048
        %2061 = vmatprep.subr.bf16.mxu0 0
        %2062 = vmatpush1.bf16.msra.mxu0 %v2049
        %2063 = vmatprep.subr.bf16.mxu0 0
        %2064 = vmatpush1.bf16.msra.mxu0 %v2050
        %2065 = vmatprep.subr.bf16.mxu0 0
        %2066 = vmatpush1.bf16.msra.mxu0 %v2051
        %2067 = vmatprep.subr.bf16.mxu0 0
        %2068 = vmatpush1.bf16.msra.mxu0 0
        %2069 = vmatprep.subr.bf16.mxu0 0
        %2070 = vmatpush1.bf16.msra.mxu0 0
        %2071 = vmatprep.subr.bf16.mxu0 0
        %2072 = vmatpush1.bf16.msra.mxu0 0
        %2073 = vmatprep.subr.bf16.mxu0 0
        %2074 = vmatpush1.bf16.msra.mxu0 0
        %2075 = vmatprep.subr.bf16.mxu0 0
        %2076 = vmatpush1.bf16.msra.mxu0 0
        %2077 = vmatprep.subr.bf16.mxu0 0
        %2078 = vmatpush1.bf16.msra.mxu0 0
        %2079 = vmatprep.subr.bf16.mxu0 0
        %2080 = vmatpush1.bf16.msra.mxu0 0
        %2081 = vmatprep.subr.bf16.mxu0 0
        %2082 = vmatpush1.bf16.msra.mxu0 0
        %2083 = vmatprep.subr.bf16.mxu0 0
        %2084 = vmatpush1.bf16.msra.mxu0 0
        %2085 = vmatprep.subr.bf16.mxu0 0
        %2086 = vmatpush1.bf16.msra.mxu0 0
        %2087 = vmatprep.subr.bf16.mxu0 0
        %2088 = vmatpush1.bf16.msra.mxu0 0
        %2089 = vmatprep.subr.bf16.mxu0 0
        %2090 = vmatpush1.bf16.msra.mxu0 0
        %2091 = vmatprep.mubr.bf16.mxu0 0
        %2092 = vmatmul.mubr.bf16.gmra.mrb[0].mxu0 %v2057
        %v2093 = vpop.f32.mrb[0].mxu0
        %v2094 = vadd.f32 0.0, %v2093
        %v2095 = vpop.f32.mrb[0].mxu0
        %v2096 = vpop.f32.mrb[0].mxu0
        %v2097 = vpop.f32.mrb[0].mxu0
        %2098 = vdwg.mxu0
        %v2099 = vadd.f32 %v2025, %v2094
        %v2101 = vlaneseq
        %v2102 = vshrl.u32 %v2101, 7
        %v2103 = vsub.s32 0, %v2102
        %v2104 = vrot.slane %v1724, %v2103
        %v2106 = vadd.f32 %v2099, %v2104
        %vm2107 = vcmp.ge.f32.partialorder %v2106, 0.0
        %v2108 = vmul.f32 %v2106, 0.2
        %v2109 = vsel %vm2107, %v2106, %v2108
        %v2110 = vpack.c.bf16 %v2109, %v2109
        %v2111 = vld [vmem:[%s10] sm:$0xf]
        %v2112 = vld [vmem:[%s10 + $0x4] sm:$0xf]
        %v2113 = vld [vmem:[%s10 + $0x8] sm:$0xf]
        %v2114 = vld [vmem:[%s10 + $0xc] sm:$0xf]
        %v2115 = vld [vmem:[%s10 + $0x10] sm:$0xf]
        %v2116 = vld [vmem:[%s10 + $0x14] sm:$0xf]
        %v2117 = vld [vmem:[%s10 + $0x18] sm:$0xf]
        %v2118 = vld [vmem:[%s10 + $0x1c] sm:$0xf]
        %v2119 = vld [vmem:[%s11] sm:$0x1]
        %v2121 = vlaneseq
        %v2122 = vshrl.u32 %v2121, 7
        %v2123 = vsub.s32 0, %v2122
        %v2124 = vrot.slane %v2119, %v2123
        %v2134 = vunpack.c.l.b16 %v2111
        %v2135 = vunpack.c.l.b16 %v2112
        %v2136 = vunpack.c.l.b16 %v2113
        %v2137 = vunpack.c.l.b16 %v2114
        %v2138 = vunpack.c.l.b16 %v2115
        %v2139 = vunpack.c.l.b16 %v2116
        %v2140 = vunpack.c.l.b16 %v2117
        %v2141 = vunpack.c.l.b16 %v2118
        %v2142 = vpack.c.b16 %v2135, %v2134
        %v2143 = vpack.c.b16 %v2137, %v2136
        %v2144 = vpack.c.b16 %v2139, %v2138
        %v2145 = vpack.c.b16 %v2141, %v2140
        %v2151 = vsel %vm999, %v2110, 0
        %2153 = vmatprep.subr.bf16.mxu0 0
        %2154 = vmatpush1.bf16.msra.mxu0 %v2142
        %2155 = vmatprep.subr.bf16.mxu0 0
        %2156 = vmatpush1.bf16.msra.mxu0 %v2143
        %2157 = vmatprep.subr.bf16.mxu0 0
        %2158 = vmatpush1.bf16.msra.mxu0 %v2144
        %2159 = vmatprep.subr.bf16.mxu0 0
        %2160 = vmatpush1.bf16.msra.mxu0 %v2145
        %2161 = vmatprep.subr.bf16.mxu0 0
        %2162 = vmatpush1.bf16.msra.mxu0 0
        %2163 = vmatprep.subr.bf16.mxu0 0
        %2164 = vmatpush1.bf16.msra.mxu0 0
        %2165 = vmatprep.subr.bf16.mxu0 0
        %2166 = vmatpush1.bf16.msra.mxu0 0
        %2167 = vmatprep.subr.bf16.mxu0 0
        %2168 = vmatpush1.bf16.msra.mxu0 0
        %2169 = vmatprep.subr.bf16.mxu0 0
        %2170 = vmatpush1.bf16.msra.mxu0 0
        %2171 = vmatprep.subr.bf16.mxu0 0
        %2172 = vmatpush1.bf16.msra.mxu0 0
        %2173 = vmatprep.subr.bf16.mxu0 0
        %2174 = vmatpush1.bf16.msra.mxu0 0
        %2175 = vmatprep.subr.bf16.mxu0 0
        %2176 = vmatpush1.bf16.msra.mxu0 0
        %2177 = vmatprep.subr.bf16.mxu0 0
        %2178 = vmatpush1.bf16.msra.mxu0 0
        %2179 = vmatprep.subr.bf16.mxu0 0
        %2180 = vmatpush1.bf16.msra.mxu0 0
        %2181 = vmatprep.subr.bf16.mxu0 0
        %2182 = vmatpush1.bf16.msra.mxu0 0
        %2183 = vmatprep.subr.bf16.mxu0 0
        %2184 = vmatpush1.bf16.msra.mxu0 0
        %2185 = vmatprep.mubr.bf16.mxu0 0
        %2186 = vmatmul.mubr.bf16.gmra.mrb[0].mxu0 %v2151
        %v2187 = vpop.f32.mrb[0].mxu0
        %v2188 = vadd.f32 %v2124, %v2187
        %v2189 = vpop.f32.mrb[0].mxu0
        %v2190 = vpop.f32.mrb[0].mxu0
        %v2191 = vpop.f32.mrb[0].mxu0
        %2192 = vdwg.mxu0
        %vm2193 = vcmask 9216
        %2194 = vst.msk [vmem:[%s814] sm:$0x3] %vm2193, %v2188
        %v2195 = vld [vmem:[%s12] sm:$0xf]
        %v2196 = vld [vmem:[%s13] sm:$0xf]
        %v2197 = vld [vmem:[%s13 + $0x4] sm:$0xf]
        %v2198 = vld [vmem:[%s13 + $0x8] sm:$0xf]
        %v2199 = vld [vmem:[%s13 + $0xc] sm:$0xf]
        %v2200 = vld [vmem:[%s13 + $0x10] sm:$0xf]
        %v2201 = vld [vmem:[%s13 + $0x14] sm:$0xf]
        %v2202 = vld [vmem:[%s13 + $0x18] sm:$0xf]
        %v2203 = vld [vmem:[%s13 + $0x1c] sm:$0xf]
        %v2204 = vld [vmem:[%s14] sm:$0xff]
        %v2206 = vsel %vm879, %v2195, 0
        %2208 = vmatprep.subr.bf16.mxu0 0
        %2209 = vmatpush1.bf16.msra.mxu0 %v877
        %2210 = vmatprep.subr.bf16.mxu0 0
        %2211 = vmatpush1.bf16.msra.mxu0 0
        %2212 = vmatprep.subr.bf16.mxu0 0
        %2213 = vmatpush1.bf16.msra.mxu0 0
        %2214 = vmatprep.subr.bf16.mxu0 0
        %2215 = vmatpush1.bf16.msra.mxu0 0
        %2216 = vmatprep.subr.bf16.mxu0 0
        %2217 = vmatpush1.bf16.msra.mxu0 0
        %2218 = vmatprep.subr.bf16.mxu0 0
        %2219 = vmatpush1.bf16.msra.mxu0 0
        %2220 = vmatprep.subr.bf16.mxu0 0
        %2221 = vmatpush1.bf16.msra.mxu0 0
        %2222 = vmatprep.subr.bf16.mxu0 0
        %2223 = vmatpush1.bf16.msra.mxu0 0
        %2224 = vmatprep.subr.bf16.mxu0 0
        %2225 = vmatpush1.bf16.msra.mxu0 0
        %2226 = vmatprep.subr.bf16.mxu0 0
        %2227 = vmatpush1.bf16.msra.mxu0 0
        %2228 = vmatprep.subr.bf16.mxu0 0
        %2229 = vmatpush1.bf16.msra.mxu0 0
        %2230 = vmatprep.subr.bf16.mxu0 0
        %2231 = vmatpush1.bf16.msra.mxu0 0
        %2232 = vmatprep.subr.bf16.mxu0 0
        %2233 = vmatpush1.bf16.msra.mxu0 0
        %2234 = vmatprep.subr.bf16.mxu0 0
        %2235 = vmatpush1.bf16.msra.mxu0 0
        %2236 = vmatprep.subr.bf16.mxu0 0
        %2237 = vmatpush1.bf16.msra.mxu0 0
        %2238 = vmatprep.subr.bf16.mxu0 0
        %2239 = vmatpush1.bf16.msra.mxu0 0
        %2240 = vmatprep.mubr.bf16.mxu0 0
        %2241 = vmatmul.mubr.bf16.gmra.mrb[0].mxu0 %v2206
        %v2242 = vpop.f32.mrb[0].mxu0
        %v2243 = vadd.f32 0.0, %v2242
        %v2244 = vpop.f32.mrb[0].mxu0
        %v2245 = vpop.f32.mrb[0].mxu0
        %v2246 = vpop.f32.mrb[0].mxu0
        %2247 = vdwg.mxu0
        %v2248 = vpack.c.bf16 %v2243, %v2243
        %v2257 = vunpack.c.l.b16 %v2196
        %v2258 = vunpack.c.l.b16 %v2197
        %v2259 = vunpack.c.l.b16 %v2198
        %v2260 = vunpack.c.l.b16 %v2199
        %v2261 = vunpack.c.l.b16 %v2200
        %v2262 = vunpack.c.l.b16 %v2201
        %v2263 = vunpack.c.l.b16 %v2202
        %v2264 = vunpack.c.l.b16 %v2203
        %v2265 = vpack.c.b16 %v2258, %v2257
        %v2266 = vpack.c.b16 %v2260, %v2259
        %v2267 = vpack.c.b16 %v2262, %v2261
        %v2268 = vpack.c.b16 %v2264, %v2263
        %v2274 = vsel %vm999, %v2248, 0
        %2276 = vmatprep.subr.bf16.mxu0 0
        %2277 = vmatpush1.bf16.msra.mxu0 %v2265
        %2278 = vmatprep.subr.bf16.mxu0 0
        %2279 = vmatpush1.bf16.msra.mxu0 %v2266
        %2280 = vmatprep.subr.bf16.mxu0 0
        %2281 = vmatpush1.bf16.msra.mxu0 %v2267
        %2282 = vmatprep.subr.bf16.mxu0 0
        %2283 = vmatpush1.bf16.msra.mxu0 %v2268
        %2284 = vmatprep.subr.bf16.mxu0 0
        %2285 = vmatpush1.bf16.msra.mxu0 0
        %2286 = vmatprep.subr.bf16.mxu0 0
        %2287 = vmatpush1.bf16.msra.mxu0 0
        %2288 = vmatprep.subr.bf16.mxu0 0
        %2289 = vmatpush1.bf16.msra.mxu0 0
        %2290 = vmatprep.subr.bf16.mxu0 0
        %2291 = vmatpush1.bf16.msra.mxu0 0
        %2292 = vmatprep.subr.bf16.mxu0 0
        %2293 = vmatpush1.bf16.msra.mxu0 0
        %2294 = vmatprep.subr.bf16.mxu0 0
        %2295 = vmatpush1.bf16.msra.mxu0 0
        %2296 = vmatprep.subr.bf16.mxu0 0
        %2297 = vmatpush1.bf16.msra.mxu0 0
        %2298 = vmatprep.subr.bf16.mxu0 0
        %2299 = vmatpush1.bf16.msra.mxu0 0
        %2300 = vmatprep.subr.bf16.mxu0 0
        %2301 = vmatpush1.bf16.msra.mxu0 0
        %2302 = vmatprep.subr.bf16.mxu0 0
        %2303 = vmatpush1.bf16.msra.mxu0 0
        %2304 = vmatprep.subr.bf16.mxu0 0
        %2305 = vmatpush1.bf16.msra.mxu0 0
        %2306 = vmatprep.subr.bf16.mxu0 0
        %2307 = vmatpush1.bf16.msra.mxu0 0
        %2308 = vmatprep.mubr.bf16.mxu0 0
        %2309 = vmatmul.mubr.bf16.gmra.mrb[0].mxu0 %v2274
        %v2310 = vpop.f32.mrb[0].mxu0
        %v2311 = vadd.f32 0.0, %v2310
        %v2312 = vpop.f32.mrb[0].mxu0
        %v2313 = vpop.f32.mrb[0].mxu0
        %v2314 = vpop.f32.mrb[0].mxu0
        %2315 = vdwg.mxu0
        %v2316 = vmul.f32 %v2311, %v2204
        %v2317 = vpack.c.bf16 %v2316, %v2316
        %v2318 = vld [vmem:[%s15] sm:$0x7]
        %v2319 = vld [vmem:[%s15 + $0x4] sm:$0x7]
        %v2320 = vld [vmem:[%s16] sm:$0xf]
        %v2321 = vld [vmem:[%s16 + $0x4] sm:$0xf]
        %v2322 = vld [vmem:[%s16 + $0x8] sm:$0xf]
        %v2323 = vld [vmem:[%s16 + $0xc] sm:$0xf]
        %v2324 = vld [vmem:[%s16 + $0x10] sm:$0xf]
        %v2325 = vld [vmem:[%s16 + $0x14] sm:$0xf]
        %v2326 = vld [vmem:[%s16 + $0x18] sm:$0xf]
        %v2327 = vld [vmem:[%s16 + $0x1c] sm:$0xf]
        %v2328 = vld [vmem:[%s16 + $0x20] sm:$0xf]
        %v2329 = vld [vmem:[%s16 + $0x24] sm:$0xf]
        %v2330 = vld [vmem:[%s16 + $0x28] sm:$0xf]
        %v2331 = vld [vmem:[%s16 + $0x2c] sm:$0xf]
        %v2332 = vld [vmem:[%s16 + $0x30] sm:$0xf]
        %v2333 = vld [vmem:[%s16 + $0x34] sm:$0xf]
        %v2334 = vld [vmem:[%s16 + $0x38] sm:$0xf]
        %v2335 = vld [vmem:[%s16 + $0x3c] sm:$0xf]
        %v2336 = vld [vmem:[%s17] sm:$0x1]
        %v2338 = vsel %vm1304, %v2318, 0
        %v2341 = vsel %vm1308, %v2317, 0
        %2343 = vmatprep.subr.bf16.mxu0 0
        %2344 = vmatpush1.bf16.msra.mxu0 %v2341
        %2345 = vmatprep.subr.bf16.mxu0 0
        %2346 = vmatpush1.bf16.msra.mxu0 0
        %2347 = vmatprep.subr.bf16.mxu0 0
        %2348 = vmatpush1.bf16.msra.mxu0 0
        %2349 = vmatprep.subr.bf16.mxu0 0
        %2350 = vmatpush1.bf16.msra.mxu0 0
        %2351 = vmatprep.subr.bf16.mxu0 0
        %2352 = vmatpush1.bf16.msra.mxu0 0
        %2353 = vmatprep.subr.bf16.mxu0 0
        %2354 = vmatpush1.bf16.msra.mxu0 0
        %2355 = vmatprep.subr.bf16.mxu0 0
        %2356 = vmatpush1.bf16.msra.mxu0 0
        %2357 = vmatprep.subr.bf16.mxu0 0
        %2358 = vmatpush1.bf16.msra.mxu0 0
        %2359 = vmatprep.subr.bf16.mxu0 0
        %2360 = vmatpush1.bf16.msra.mxu0 0
        %2361 = vmatprep.subr.bf16.mxu0 0
        %2362 = vmatpush1.bf16.msra.mxu0 0
        %2363 = vmatprep.subr.bf16.mxu0 0
        %2364 = vmatpush1.bf16.msra.mxu0 0
        %2365 = vmatprep.subr.bf16.mxu0 0
        %2366 = vmatpush1.bf16.msra.mxu0 0
        %2367 = vmatprep.subr.bf16.mxu0 0
        %2368 = vmatpush1.bf16.msra.mxu0 0
        %2369 = vmatprep.subr.bf16.mxu0 0
        %2370 = vmatpush1.bf16.msra.mxu0 0
        %2371 = vmatprep.subr.bf16.mxu0 0
        %2372 = vmatpush1.bf16.msra.mxu0 0
        %2373 = vmatprep.subr.bf16.mxu0 0
        %2374 = vmatpush1.bf16.msra.mxu0 0
        %2375 = vmatprep.mubr.bf16.mxu0 0
        %2376 = vmatmul.mubr.bf16.gmra.mrb[0].mxu0 %v2338
        %v2377 = vpop.f32.mrb[0].mxu0
        %v2378 = vadd.f32 0.0, %v2377
        %v2379 = vpop.f32.mrb[0].mxu0
        %v2380 = vpop.f32.mrb[0].mxu0
        %v2381 = vpop.f32.mrb[0].mxu0
        %2382 = vdwg.mxu0
        %v2383 = vpack.c.bf16 %v2378, %v2378
        %v2385 = vsel %vm1304, %v2319, 0
        %2387 = vmatprep.subr.bf16.mxu0 0
        %2388 = vmatpush1.bf16.msra.mxu0 %v2341
        %2389 = vmatprep.subr.bf16.mxu0 0
        %2390 = vmatpush1.bf16.msra.mxu0 0
        %2391 = vmatprep.subr.bf16.mxu0 0
        %2392 = vmatpush1.bf16.msra.mxu0 0
        %2393 = vmatprep.subr.bf16.mxu0 0
        %2394 = vmatpush1.bf16.msra.mxu0 0
        %2395 = vmatprep.subr.bf16.mxu0 0
        %2396 = vmatpush1.bf16.msra.mxu0 0
        %2397 = vmatprep.subr.bf16.mxu0 0
        %2398 = vmatpush1.bf16.msra.mxu0 0
        %2399 = vmatprep.subr.bf16.mxu0 0
        %2400 = vmatpush1.bf16.msra.mxu0 0
        %2401 = vmatprep.subr.bf16.mxu0 0
        %2402 = vmatpush1.bf16.msra.mxu0 0
        %2403 = vmatprep.subr.bf16.mxu0 0
        %2404 = vmatpush1.bf16.msra.mxu0 0
        %2405 = vmatprep.subr.bf16.mxu0 0
        %2406 = vmatpush1.bf16.msra.mxu0 0
        %2407 = vmatprep.subr.bf16.mxu0 0
        %2408 = vmatpush1.bf16.msra.mxu0 0
        %2409 = vmatprep.subr.bf16.mxu0 0
        %2410 = vmatpush1.bf16.msra.mxu0 0
        %2411 = vmatprep.subr.bf16.mxu0 0
        %2412 = vmatpush1.bf16.msra.mxu0 0
        %2413 = vmatprep.subr.bf16.mxu0 0
        %2414 = vmatpush1.bf16.msra.mxu0 0
        %2415 = vmatprep.subr.bf16.mxu0 0
        %2416 = vmatpush1.bf16.msra.mxu0 0
        %2417 = vmatprep.subr.bf16.mxu0 0
        %2418 = vmatpush1.bf16.msra.mxu0 0
        %2419 = vmatprep.mubr.bf16.mxu0 0
        %2420 = vmatmul.mubr.bf16.gmra.mrb[0].mxu0 %v2385
        %v2421 = vpop.f32.mrb[0].mxu0
        %v2422 = vadd.f32 0.0, %v2421
        %v2423 = vpop.f32.mrb[0].mxu0
        %v2424 = vpop.f32.mrb[0].mxu0
        %v2425 = vpop.f32.mrb[0].mxu0
        %2426 = vdwg.mxu0
        %v2427 = vpack.c.bf16 %v2422, %v2422
        %v2432 = vunpack.c.l.b16 %v2324
        %v2433 = vunpack.c.l.b16 %v2325
        %v2434 = vunpack.c.l.b16 %v2326
        %v2435 = vunpack.c.l.b16 %v2327
        %v2436 = vpack.c.b16 %v2433, %v2432
        %v2437 = vpack.c.b16 %v2435, %v2434
        %vm2440 = vcmask 261120
        %v2442 = vsel %vm2440, %v2427, 0
        %2444 = vmatprep.subr.bf16.mxu0 0
        %2445 = vmatpush1.bf16.msra.mxu0 %v2436
        %2446 = vmatprep.subr.bf16.mxu0 0
        %2447 = vmatpush1.bf16.msra.mxu0 %v2437
        %2448 = vmatprep.subr.bf16.mxu0 0
        %2449 = vmatpush1.bf16.msra.mxu0 0
        %2450 = vmatprep.subr.bf16.mxu0 0
        %2451 = vmatpush1.bf16.msra.mxu0 0
        %2452 = vmatprep.subr.bf16.mxu0 0
        %2453 = vmatpush1.bf16.msra.mxu0 0
        %2454 = vmatprep.subr.bf16.mxu0 0
        %2455 = vmatpush1.bf16.msra.mxu0 0
        %2456 = vmatprep.subr.bf16.mxu0 0
        %2457 = vmatpush1.bf16.msra.mxu0 0
        %2458 = vmatprep.subr.bf16.mxu0 0
        %2459 = vmatpush1.bf16.msra.mxu0 0
        %2460 = vmatprep.subr.bf16.mxu0 0
        %2461 = vmatpush1.bf16.msra.mxu0 0
        %2462 = vmatprep.subr.bf16.mxu0 0
        %2463 = vmatpush1.bf16.msra.mxu0 0
        %2464 = vmatprep.subr.bf16.mxu0 0
        %2465 = vmatpush1.bf16.msra.mxu0 0
        %2466 = vmatprep.subr.bf16.mxu0 0
        %2467 = vmatpush1.bf16.msra.mxu0 0
        %2468 = vmatprep.subr.bf16.mxu0 0
        %2469 = vmatpush1.bf16.msra.mxu0 0
        %2470 = vmatprep.subr.bf16.mxu0 0
        %2471 = vmatpush1.bf16.msra.mxu0 0
        %2472 = vmatprep.subr.bf16.mxu0 0
        %2473 = vmatpush1.bf16.msra.mxu0 0
        %2474 = vmatprep.subr.bf16.mxu0 0
        %2475 = vmatpush1.bf16.msra.mxu0 0
        %2476 = vmatprep.mubr.bf16.mxu0 0
        %2477 = vmatmul.mubr.bf16.gmra.mrb[0].mxu0 %v2442
        %v2478 = vpop.f32.mrb[0].mxu0
        %v2479 = vadd.f32 0.0, %v2478
        %v2480 = vpop.f32.mrb[0].mxu0
        %v2481 = vpop.f32.mrb[0].mxu0
        %v2482 = vpop.f32.mrb[0].mxu0
        %2483 = vdwg.mxu0
        %v2488 = vunpack.c.l.b16 %v2320
        %v2489 = vunpack.c.l.b16 %v2321
        %v2490 = vunpack.c.l.b16 %v2322
        %v2491 = vunpack.c.l.b16 %v2323
        %v2492 = vpack.c.b16 %v2489, %v2488
        %v2493 = vpack.c.b16 %v2491, %v2490
        %v2497 = vsel %vm2440, %v2383, 0
        %2499 = vmatprep.subr.bf16.mxu0 0
        %2500 = vmatpush1.bf16.msra.mxu0 %v2492
        %2501 = vmatprep.subr.bf16.mxu0 0
        %2502 = vmatpush1.bf16.msra.mxu0 %v2493
        %2503 = vmatprep.subr.bf16.mxu0 0
        %2504 = vmatpush1.bf16.msra.mxu0 0
        %2505 = vmatprep.subr.bf16.mxu0 0
        %2506 = vmatpush1.bf16.msra.mxu0 0
        %2507 = vmatprep.subr.bf16.mxu0 0
        %2508 = vmatpush1.bf16.msra.mxu0 0
        %2509 = vmatprep.subr.bf16.mxu0 0
        %2510 = vmatpush1.bf16.msra.mxu0 0
        %2511 = vmatprep.subr.bf16.mxu0 0
        %2512 = vmatpush1.bf16.msra.mxu0 0
        %2513 = vmatprep.subr.bf16.mxu0 0
        %2514 = vmatpush1.bf16.msra.mxu0 0
        %2515 = vmatprep.subr.bf16.mxu0 0
        %2516 = vmatpush1.bf16.msra.mxu0 0
        %2517 = vmatprep.subr.bf16.mxu0 0
        %2518 = vmatpush1.bf16.msra.mxu0 0
        %2519 = vmatprep.subr.bf16.mxu0 0
        %2520 = vmatpush1.bf16.msra.mxu0 0
        %2521 = vmatprep.subr.bf16.mxu0 0
        %2522 = vmatpush1.bf16.msra.mxu0 0
        %2523 = vmatprep.subr.bf16.mxu0 0
        %2524 = vmatpush1.bf16.msra.mxu0 0
        %2525 = vmatprep.subr.bf16.mxu0 0
        %2526 = vmatpush1.bf16.msra.mxu0 0
        %2527 = vmatprep.subr.bf16.mxu0 0
        %2528 = vmatpush1.bf16.msra.mxu0 0
        %2529 = vmatprep.subr.bf16.mxu0 0
        %2530 = vmatpush1.bf16.msra.mxu0 0
        %2531 = vmatprep.mubr.bf16.mxu0 0
        %2532 = vmatmul.mubr.bf16.gmra.mrb[0].mxu0 %v2497
        %v2533 = vpop.f32.mrb[0].mxu0
        %v2534 = vadd.f32 %v2479, %v2533
        %v2535 = vpop.f32.mrb[0].mxu0
        %v2536 = vpop.f32.mrb[0].mxu0
        %v2537 = vpop.f32.mrb[0].mxu0
        %2538 = vdwg.mxu0
        %v2539 = vshrl.u32 %v2383, 16
        %v2541 = vshll.u32 %v2383, 16
        %v2543 = vrot.slane %v2541, 1
        %v2544 = vor.u32 %v2539, %v2543
        %v2549 = vunpack.c.l.b16 %v2328
        %v2550 = vunpack.c.l.b16 %v2329
        %v2551 = vunpack.c.l.b16 %v2330
        %v2552 = vunpack.c.l.b16 %v2331
        %v2553 = vpack.c.b16 %v2550, %v2549
        %v2554 = vpack.c.b16 %v2552, %v2551
        %v2558 = vsel %vm2440, %v2544, 0
        %2560 = vmatprep.subr.bf16.mxu0 0
        %2561 = vmatpush1.bf16.msra.mxu0 %v2553
        %2562 = vmatprep.subr.bf16.mxu0 0
        %2563 = vmatpush1.bf16.msra.mxu0 %v2554
        %2564 = vmatprep.subr.bf16.mxu0 0
        %2565 = vmatpush1.bf16.msra.mxu0 0
        %2566 = vmatprep.subr.bf16.mxu0 0
        %2567 = vmatpush1.bf16.msra.mxu0 0
        %2568 = vmatprep.subr.bf16.mxu0 0
        %2569 = vmatpush1.bf16.msra.mxu0 0
        %2570 = vmatprep.subr.bf16.mxu0 0
        %2571 = vmatpush1.bf16.msra.mxu0 0
        %2572 = vmatprep.subr.bf16.mxu0 0
        %2573 = vmatpush1.bf16.msra.mxu0 0
        %2574 = vmatprep.subr.bf16.mxu0 0
        %2575 = vmatpush1.bf16.msra.mxu0 0
        %2576 = vmatprep.subr.bf16.mxu0 0
        %2577 = vmatpush1.bf16.msra.mxu0 0
        %2578 = vmatprep.subr.bf16.mxu0 0
        %2579 = vmatpush1.bf16.msra.mxu0 0
        %2580 = vmatprep.subr.bf16.mxu0 0
        %2581 = vmatpush1.bf16.msra.mxu0 0
        %2582 = vmatprep.subr.bf16.mxu0 0
        %2583 = vmatpush1.bf16.msra.mxu0 0
        %2584 = vmatprep.subr.bf16.mxu0 0
        %2585 = vmatpush1.bf16.msra.mxu0 0
        %2586 = vmatprep.subr.bf16.mxu0 0
        %2587 = vmatpush1.bf16.msra.mxu0 0
        %2588 = vmatprep.subr.bf16.mxu0 0
        %2589 = vmatpush1.bf16.msra.mxu0 0
        %2590 = vmatprep.subr.bf16.mxu0 0
        %2591 = vmatpush1.bf16.msra.mxu0 0
        %2592 = vmatprep.mubr.bf16.mxu0 0
        %2593 = vmatmul.mubr.bf16.gmra.mrb[0].mxu0 %v2558
        %v2594 = vpop.f32.mrb[0].mxu0
        %v2595 = vadd.f32 0.0, %v2594
        %v2596 = vpop.f32.mrb[0].mxu0
        %v2597 = vpop.f32.mrb[0].mxu0
        %v2598 = vpop.f32.mrb[0].mxu0
        %2599 = vdwg.mxu0
        %v2600 = vadd.f32 %v2534, %v2595
        %v2601 = vshrl.u32 %v2427, 16
        %v2603 = vshll.u32 %v2427, 16
        %v2605 = vrot.slane %v2603, 1
        %v2606 = vor.u32 %v2601, %v2605
        %v2611 = vunpack.c.l.b16 %v2332
        %v2612 = vunpack.c.l.b16 %v2333
        %v2613 = vunpack.c.l.b16 %v2334
        %v2614 = vunpack.c.l.b16 %v2335
        %v2615 = vpack.c.b16 %v2612, %v2611
        %v2616 = vpack.c.b16 %v2614, %v2613
        %v2620 = vsel %vm2440, %v2606, 0
        %2622 = vmatprep.subr.bf16.mxu0 0
        %2623 = vmatpush1.bf16.msra.mxu0 %v2615
        %2624 = vmatprep.subr.bf16.mxu0 0
        %2625 = vmatpush1.bf16.msra.mxu0 %v2616
        %2626 = vmatprep.subr.bf16.mxu0 0
        %2627 = vmatpush1.bf16.msra.mxu0 0
        %2628 = vmatprep.subr.bf16.mxu0 0
        %2629 = vmatpush1.bf16.msra.mxu0 0
        %2630 = vmatprep.subr.bf16.mxu0 0
        %2631 = vmatpush1.bf16.msra.mxu0 0
        %2632 = vmatprep.subr.bf16.mxu0 0
        %2633 = vmatpush1.bf16.msra.mxu0 0
        %2634 = vmatprep.subr.bf16.mxu0 0
        %2635 = vmatpush1.bf16.msra.mxu0 0
        %2636 = vmatprep.subr.bf16.mxu0 0
        %2637 = vmatpush1.bf16.msra.mxu0 0
        %2638 = vmatprep.subr.bf16.mxu0 0
        %2639 = vmatpush1.bf16.msra.mxu0 0
        %2640 = vmatprep.subr.bf16.mxu0 0
        %2641 = vmatpush1.bf16.msra.mxu0 0
        %2642 = vmatprep.subr.bf16.mxu0 0
        %2643 = vmatpush1.bf16.msra.mxu0 0
        %2644 = vmatprep.subr.bf16.mxu0 0
        %2645 = vmatpush1.bf16.msra.mxu0 0
        %2646 = vmatprep.subr.bf16.mxu0 0
        %2647 = vmatpush1.bf16.msra.mxu0 0
        %2648 = vmatprep.subr.bf16.mxu0 0
        %2649 = vmatpush1.bf16.msra.mxu0 0
        %2650 = vmatprep.subr.bf16.mxu0 0
        %2651 = vmatpush1.bf16.msra.mxu0 0
        %2652 = vmatprep.subr.bf16.mxu0 0
        %2653 = vmatpush1.bf16.msra.mxu0 0
        %2654 = vmatprep.mubr.bf16.mxu0 0
        %2655 = vmatmul.mubr.bf16.gmra.mrb[0].mxu0 %v2620
        %v2656 = vpop.f32.mrb[0].mxu0
        %v2657 = vadd.f32 0.0, %v2656
        %v2658 = vpop.f32.mrb[0].mxu0
        %v2659 = vpop.f32.mrb[0].mxu0
        %v2660 = vpop.f32.mrb[0].mxu0
        %2661 = vdwg.mxu0
        %v2662 = vadd.f32 %v2600, %v2657
        %v2664 = vlaneseq
        %v2665 = vshrl.u32 %v2664, 7
        %v2666 = vsub.s32 0, %v2665
        %v2667 = vrot.slane %v2336, %v2666
        %v2669 = vadd.f32 %v2662, %v2667
        %vm2670 = vcmp.ge.f32.partialorder %v2669, 0.0
        %v2671 = vmul.f32 %v2669, 0.2
        %v2672 = vsel %vm2670, %v2669, %v2671
        %v2673 = vpack.c.bf16 %v2672, %v2672
        %v2674 = vld [vmem:[%s18] sm:$0x3]
        %v2675 = vld [vmem:[%s18 + $0x2] sm:$0x3]
        %v2676 = vld [vmem:[%s19] sm:$0xf]
        %v2677 = vld [vmem:[%s19 + $0x4] sm:$0xf]
        %v2678 = vld [vmem:[%s19 + $0x8] sm:$0xf]
        %v2679 = vld [vmem:[%s19 + $0xc] sm:$0xf]
        %v2680 = vld [vmem:[%s19 + $0x10] sm:$0xf]
        %v2681 = vld [vmem:[%s19 + $0x14] sm:$0xf]
        %v2682 = vld [vmem:[%s19 + $0x18] sm:$0xf]
        %v2683 = vld [vmem:[%s19 + $0x1c] sm:$0xf]
        %v2684 = vld [vmem:[%s19 + $0x20] sm:$0xf]
        %v2685 = vld [vmem:[%s19 + $0x24] sm:$0xf]
        %v2686 = vld [vmem:[%s19 + $0x28] sm:$0xf]
        %v2687 = vld [vmem:[%s19 + $0x2c] sm:$0xf]
        %v2688 = vld [vmem:[%s19 + $0x30] sm:$0xf]
        %v2689 = vld [vmem:[%s19 + $0x34] sm:$0xf]
        %v2690 = vld [vmem:[%s19 + $0x38] sm:$0xf]
        %v2691 = vld [vmem:[%s19 + $0x3c] sm:$0xf]
        %v2692 = vld [vmem:[%s20] sm:$0x1]
        %v2694 = vsel %vm1725, %v2674, 0
        %v2697 = vsel %vm1729, %v2673, 0
        %2699 = vmatprep.subr.bf16.mxu0 0
        %2700 = vmatpush1.bf16.msra.mxu0 %v2697
        %2701 = vmatprep.subr.bf16.mxu0 0
        %2702 = vmatpush1.bf16.msra.mxu0 0
        %2703 = vmatprep.subr.bf16.mxu0 0
        %2704 = vmatpush1.bf16.msra.mxu0 0
        %2705 = vmatprep.subr.bf16.mxu0 0
        %2706 = vmatpush1.bf16.msra.mxu0 0
        %2707 = vmatprep.subr.bf16.mxu0 0
        %2708 = vmatpush1.bf16.msra.mxu0 0
        %2709 = vmatprep.subr.bf16.mxu0 0
        %2710 = vmatpush1.bf16.msra.mxu0 0
        %2711 = vmatprep.subr.bf16.mxu0 0
        %2712 = vmatpush1.bf16.msra.mxu0 0
        %2713 = vmatprep.subr.bf16.mxu0 0
        %2714 = vmatpush1.bf16.msra.mxu0 0
        %2715 = vmatprep.subr.bf16.mxu0 0
        %2716 = vmatpush1.bf16.msra.mxu0 0
        %2717 = vmatprep.subr.bf16.mxu0 0
        %2718 = vmatpush1.bf16.msra.mxu0 0
        %2719 = vmatprep.subr.bf16.mxu0 0
        %2720 = vmatpush1.bf16.msra.mxu0 0
        %2721 = vmatprep.subr.bf16.mxu0 0
        %2722 = vmatpush1.bf16.msra.mxu0 0
        %2723 = vmatprep.subr.bf16.mxu0 0
        %2724 = vmatpush1.bf16.msra.mxu0 0
        %2725 = vmatprep.subr.bf16.mxu0 0
        %2726 = vmatpush1.bf16.msra.mxu0 0
        %2727 = vmatprep.subr.bf16.mxu0 0
        %2728 = vmatpush1.bf16.msra.mxu0 0
        %2729 = vmatprep.subr.bf16.mxu0 0
        %2730 = vmatpush1.bf16.msra.mxu0 0
        %2731 = vmatprep.mubr.bf16.mxu0 0
        %2732 = vmatmul.mubr.bf16.gmra.mrb[0].mxu0 %v2694
        %v2733 = vpop.f32.mrb[0].mxu0
        %v2734 = vadd.f32 0.0, %v2733
        %v2735 = vpop.f32.mrb[0].mxu0
        %v2736 = vpop.f32.mrb[0].mxu0
        %v2737 = vpop.f32.mrb[0].mxu0
        %2738 = vdwg.mxu0
        %v2739 = vpack.c.bf16 %v2734, %v2734
        %v2741 = vsel %vm1725, %v2675, 0
        %2743 = vmatprep.subr.bf16.mxu0 0
        %2744 = vmatpush1.bf16.msra.mxu0 %v2697
        %2745 = vmatprep.subr.bf16.mxu0 0
        %2746 = vmatpush1.bf16.msra.mxu0 0
        %2747 = vmatprep.subr.bf16.mxu0 0
        %2748 = vmatpush1.bf16.msra.mxu0 0
        %2749 = vmatprep.subr.bf16.mxu0 0
        %2750 = vmatpush1.bf16.msra.mxu0 0
        %2751 = vmatprep.subr.bf16.mxu0 0
        %2752 = vmatpush1.bf16.msra.mxu0 0
        %2753 = vmatprep.subr.bf16.mxu0 0
        %2754 = vmatpush1.bf16.msra.mxu0 0
        %2755 = vmatprep.subr.bf16.mxu0 0
        %2756 = vmatpush1.bf16.msra.mxu0 0
        %2757 = vmatprep.subr.bf16.mxu0 0
        %2758 = vmatpush1.bf16.msra.mxu0 0
        %2759 = vmatprep.subr.bf16.mxu0 0
        %2760 = vmatpush1.bf16.msra.mxu0 0
        %2761 = vmatprep.subr.bf16.mxu0 0
        %2762 = vmatpush1.bf16.msra.mxu0 0
        %2763 = vmatprep.subr.bf16.mxu0 0
        %2764 = vmatpush1.bf16.msra.mxu0 0
        %2765 = vmatprep.subr.bf16.mxu0 0
        %2766 = vmatpush1.bf16.msra.mxu0 0
        %2767 = vmatprep.subr.bf16.mxu0 0
        %2768 = vmatpush1.bf16.msra.mxu0 0
        %2769 = vmatprep.subr.bf16.mxu0 0
        %2770 = vmatpush1.bf16.msra.mxu0 0
        %2771 = vmatprep.subr.bf16.mxu0 0
        %2772 = vmatpush1.bf16.msra.mxu0 0
        %2773 = vmatprep.subr.bf16.mxu0 0
        %2774 = vmatpush1.bf16.msra.mxu0 0
        %2775 = vmatprep.mubr.bf16.mxu0 0
        %2776 = vmatmul.mubr.bf16.gmra.mrb[0].mxu0 %v2741
        %v2777 = vpop.f32.mrb[0].mxu0
        %v2778 = vadd.f32 0.0, %v2777
        %v2779 = vpop.f32.mrb[0].mxu0
        %v2780 = vpop.f32.mrb[0].mxu0
        %v2781 = vpop.f32.mrb[0].mxu0
        %2782 = vdwg.mxu0
        %v2783 = vpack.c.bf16 %v2778, %v2778
        %v2788 = vunpack.c.l.b16 %v2680
        %v2789 = vunpack.c.l.b16 %v2681
        %v2790 = vunpack.c.l.b16 %v2682
        %v2791 = vunpack.c.l.b16 %v2683
        %v2792 = vpack.c.b16 %v2789, %v2788
        %v2793 = vpack.c.b16 %v2791, %v2790
        %v2797 = vsel %vm2440, %v2783, 0
        %2799 = vmatprep.subr.bf16.mxu0 0
        %2800 = vmatpush1.bf16.msra.mxu0 %v2792
        %2801 = vmatprep.subr.bf16.mxu0 0
        %2802 = vmatpush1.bf16.msra.mxu0 %v2793
        %2803 = vmatprep.subr.bf16.mxu0 0
        %2804 = vmatpush1.bf16.msra.mxu0 0
        %2805 = vmatprep.subr.bf16.mxu0 0
        %2806 = vmatpush1.bf16.msra.mxu0 0
        %2807 = vmatprep.subr.bf16.mxu0 0
        %2808 = vmatpush1.bf16.msra.mxu0 0
        %2809 = vmatprep.subr.bf16.mxu0 0
        %2810 = vmatpush1.bf16.msra.mxu0 0
        %2811 = vmatprep.subr.bf16.mxu0 0
        %2812 = vmatpush1.bf16.msra.mxu0 0
        %2813 = vmatprep.subr.bf16.mxu0 0
        %2814 = vmatpush1.bf16.msra.mxu0 0
        %2815 = vmatprep.subr.bf16.mxu0 0
        %2816 = vmatpush1.bf16.msra.mxu0 0
        %2817 = vmatprep.subr.bf16.mxu0 0
        %2818 = vmatpush1.bf16.msra.mxu0 0
        %2819 = vmatprep.subr.bf16.mxu0 0
        %2820 = vmatpush1.bf16.msra.mxu0 0
        %2821 = vmatprep.subr.bf16.mxu0 0
        %2822 = vmatpush1.bf16.msra.mxu0 0
        %2823 = vmatprep.subr.bf16.mxu0 0
        %2824 = vmatpush1.bf16.msra.mxu0 0
        %2825 = vmatprep.subr.bf16.mxu0 0
        %2826 = vmatpush1.bf16.msra.mxu0 0
        %2827 = vmatprep.subr.bf16.mxu0 0
        %2828 = vmatpush1.bf16.msra.mxu0 0
        %2829 = vmatprep.subr.bf16.mxu0 0
        %2830 = vmatpush1.bf16.msra.mxu0 0
        %2831 = vmatprep.mubr.bf16.mxu0 0
        %2832 = vmatmul.mubr.bf16.gmra.mrb[0].mxu0 %v2797
        %v2833 = vpop.f32.mrb[0].mxu0
        %v2834 = vadd.f32 0.0, %v2833
        %v2835 = vpop.f32.mrb[0].mxu0
        %v2836 = vpop.f32.mrb[0].mxu0
        %v2837 = vpop.f32.mrb[0].mxu0
        %2838 = vdwg.mxu0
        %v2843 = vunpack.c.l.b16 %v2676
        %v2844 = vunpack.c.l.b16 %v2677
        %v2845 = vunpack.c.l.b16 %v2678
        %v2846 = vunpack.c.l.b16 %v2679
        %v2847 = vpack.c.b16 %v2844, %v2843
        %v2848 = vpack.c.b16 %v2846, %v2845
        %v2852 = vsel %vm2440, %v2739, 0
        %2854 = vmatprep.subr.bf16.mxu0 0
        %2855 = vmatpush1.bf16.msra.mxu0 %v2847
        %2856 = vmatprep.subr.bf16.mxu0 0
        %2857 = vmatpush1.bf16.msra.mxu0 %v2848
        %2858 = vmatprep.subr.bf16.mxu0 0
        %2859 = vmatpush1.bf16.msra.mxu0 0
        %2860 = vmatprep.subr.bf16.mxu0 0
        %2861 = vmatpush1.bf16.msra.mxu0 0
        %2862 = vmatprep.subr.bf16.mxu0 0
        %2863 = vmatpush1.bf16.msra.mxu0 0
        %2864 = vmatprep.subr.bf16.mxu0 0
        %2865 = vmatpush1.bf16.msra.mxu0 0
        %2866 = vmatprep.subr.bf16.mxu0 0
        %2867 = vmatpush1.bf16.msra.mxu0 0
        %2868 = vmatprep.subr.bf16.mxu0 0
        %2869 = vmatpush1.bf16.msra.mxu0 0
        %2870 = vmatprep.subr.bf16.mxu0 0
        %2871 = vmatpush1.bf16.msra.mxu0 0
        %2872 = vmatprep.subr.bf16.mxu0 0
        %2873 = vmatpush1.bf16.msra.mxu0 0
        %2874 = vmatprep.subr.bf16.mxu0 0
        %2875 = vmatpush1.bf16.msra.mxu0 0
        %2876 = vmatprep.subr.bf16.mxu0 0
        %2877 = vmatpush1.bf16.msra.mxu0 0
        %2878 = vmatprep.subr.bf16.mxu0 0
        %2879 = vmatpush1.bf16.msra.mxu0 0
        %2880 = vmatprep.subr.bf16.mxu0 0
        %2881 = vmatpush1.bf16.msra.mxu0 0
        %2882 = vmatprep.subr.bf16.mxu0 0
        %2883 = vmatpush1.bf16.msra.mxu0 0
        %2884 = vmatprep.subr.bf16.mxu0 0
        %2885 = vmatpush1.bf16.msra.mxu0 0
        %2886 = vmatprep.mubr.bf16.mxu0 0
        %2887 = vmatmul.mubr.bf16.gmra.mrb[0].mxu0 %v2852
        %v2888 = vpop.f32.mrb[0].mxu0
        %v2889 = vadd.f32 %v2834, %v2888
        %v2890 = vpop.f32.mrb[0].mxu0
        %v2891 = vpop.f32.mrb[0].mxu0
        %v2892 = vpop.f32.mrb[0].mxu0
        %2893 = vdwg.mxu0
        %v2894 = vshrl.u32 %v2739, 16
        %v2896 = vshll.u32 %v2739, 16
        %v2898 = vrot.slane %v2896, 1
        %v2899 = vor.u32 %v2894, %v2898
        %v2904 = vunpack.c.l.b16 %v2684
        %v2905 = vunpack.c.l.b16 %v2685
        %v2906 = vunpack.c.l.b16 %v2686
        %v2907 = vunpack.c.l.b16 %v2687
        %v2908 = vpack.c.b16 %v2905, %v2904
        %v2909 = vpack.c.b16 %v2907, %v2906
        %v2913 = vsel %vm2440, %v2899, 0
        %2915 = vmatprep.subr.bf16.mxu0 0
        %2916 = vmatpush1.bf16.msra.mxu0 %v2908
        %2917 = vmatprep.subr.bf16.mxu0 0
        %2918 = vmatpush1.bf16.msra.mxu0 %v2909
        %2919 = vmatprep.subr.bf16.mxu0 0
        %2920 = vmatpush1.bf16.msra.mxu0 0
        %2921 = vmatprep.subr.bf16.mxu0 0
        %2922 = vmatpush1.bf16.msra.mxu0 0
        %2923 = vmatprep.subr.bf16.mxu0 0
        %2924 = vmatpush1.bf16.msra.mxu0 0
        %2925 = vmatprep.subr.bf16.mxu0 0
        %2926 = vmatpush1.bf16.msra.mxu0 0
        %2927 = vmatprep.subr.bf16.mxu0 0
        %2928 = vmatpush1.bf16.msra.mxu0 0
        %2929 = vmatprep.subr.bf16.mxu0 0
        %2930 = vmatpush1.bf16.msra.mxu0 0
        %2931 = vmatprep.subr.bf16.mxu0 0
        %2932 = vmatpush1.bf16.msra.mxu0 0
        %2933 = vmatprep.subr.bf16.mxu0 0
        %2934 = vmatpush1.bf16.msra.mxu0 0
        %2935 = vmatprep.subr.bf16.mxu0 0
        %2936 = vmatpush1.bf16.msra.mxu0 0
        %2937 = vmatprep.subr.bf16.mxu0 0
        %2938 = vmatpush1.bf16.msra.mxu0 0
        %2939 = vmatprep.subr.bf16.mxu0 0
        %2940 = vmatpush1.bf16.msra.mxu0 0
        %2941 = vmatprep.subr.bf16.mxu0 0
        %2942 = vmatpush1.bf16.msra.mxu0 0
        %2943 = vmatprep.subr.bf16.mxu0 0
        %2944 = vmatpush1.bf16.msra.mxu0 0
        %2945 = vmatprep.subr.bf16.mxu0 0
        %2946 = vmatpush1.bf16.msra.mxu0 0
        %2947 = vmatprep.mubr.bf16.mxu0 0
        %2948 = vmatmul.mubr.bf16.gmra.mrb[0].mxu0 %v2913
        %v2949 = vpop.f32.mrb[0].mxu0
        %v2950 = vadd.f32 0.0, %v2949
        %v2951 = vpop.f32.mrb[0].mxu0
        %v2952 = vpop.f32.mrb[0].mxu0
        %v2953 = vpop.f32.mrb[0].mxu0
        %2954 = vdwg.mxu0
        %v2955 = vadd.f32 %v2889, %v2950
        %v2956 = vshrl.u32 %v2783, 16
        %v2958 = vshll.u32 %v2783, 16
        %v2960 = vrot.slane %v2958, 1
        %v2961 = vor.u32 %v2956, %v2960
        %v2966 = vunpack.c.l.b16 %v2688
        %v2967 = vunpack.c.l.b16 %v2689
        %v2968 = vunpack.c.l.b16 %v2690
        %v2969 = vunpack.c.l.b16 %v2691
        %v2970 = vpack.c.b16 %v2967, %v2966
        %v2971 = vpack.c.b16 %v2969, %v2968
        %v2975 = vsel %vm2440, %v2961, 0
        %2977 = vmatprep.subr.bf16.mxu0 0
        %2978 = vmatpush1.bf16.msra.mxu0 %v2970
        %2979 = vmatprep.subr.bf16.mxu0 0
        %2980 = vmatpush1.bf16.msra.mxu0 %v2971
        %2981 = vmatprep.subr.bf16.mxu0 0
        %2982 = vmatpush1.bf16.msra.mxu0 0
        %2983 = vmatprep.subr.bf16.mxu0 0
        %2984 = vmatpush1.bf16.msra.mxu0 0
        %2985 = vmatprep.subr.bf16.mxu0 0
        %2986 = vmatpush1.bf16.msra.mxu0 0
        %2987 = vmatprep.subr.bf16.mxu0 0
        %2988 = vmatpush1.bf16.msra.mxu0 0
        %2989 = vmatprep.subr.bf16.mxu0 0
        %2990 = vmatpush1.bf16.msra.mxu0 0
        %2991 = vmatprep.subr.bf16.mxu0 0
        %2992 = vmatpush1.bf16.msra.mxu0 0
        %2993 = vmatprep.subr.bf16.mxu0 0
        %2994 = vmatpush1.bf16.msra.mxu0 0
        %2995 = vmatprep.subr.bf16.mxu0 0
        %2996 = vmatpush1.bf16.msra.mxu0 0
        %2997 = vmatprep.subr.bf16.mxu0 0
        %2998 = vmatpush1.bf16.msra.mxu0 0
        %2999 = vmatprep.subr.bf16.mxu0 0
        %3000 = vmatpush1.bf16.msra.mxu0 0
        %3001 = vmatprep.subr.bf16.mxu0 0
        %3002 = vmatpush1.bf16.msra.mxu0 0
        %3003 = vmatprep.subr.bf16.mxu0 0
        %3004 = vmatpush1.bf16.msra.mxu0 0
        %3005 = vmatprep.subr.bf16.mxu0 0
        %3006 = vmatpush1.bf16.msra.mxu0 0
        %3007 = vmatprep.subr.bf16.mxu0 0
        %3008 = vmatpush1.bf16.msra.mxu0 0
        %3009 = vmatprep.mubr.bf16.mxu0 0
        %3010 = vmatmul.mubr.bf16.gmra.mrb[0].mxu0 %v2975
        %v3011 = vpop.f32.mrb[0].mxu0
        %v3012 = vadd.f32 0.0, %v3011
        %v3013 = vpop.f32.mrb[0].mxu0
        %v3014 = vpop.f32.mrb[0].mxu0
        %v3015 = vpop.f32.mrb[0].mxu0
        %3016 = vdwg.mxu0
        %v3017 = vadd.f32 %v2955, %v3012
        %v3019 = vlaneseq
        %v3020 = vshrl.u32 %v3019, 7
        %v3021 = vsub.s32 0, %v3020
        %v3022 = vrot.slane %v2692, %v3021
        %v3024 = vadd.f32 %v3017, %v3022
        %vm3025 = vcmp.ge.f32.partialorder %v3024, 0.0
        %v3026 = vmul.f32 %v3024, 0.2
        %v3027 = vsel %vm3025, %v3024, %v3026
        %v3028 = vpack.c.bf16 %v3027, %v3027
        %v3029 = vld [vmem:[%s21] sm:$0x1]
        %v3030 = vld [vmem:[%s21 + $0x1] sm:$0x1]
        %v3031 = vld [vmem:[%s22] sm:$0xf]
        %v3032 = vld [vmem:[%s22 + $0x4] sm:$0xf]
        %v3033 = vld [vmem:[%s22 + $0x8] sm:$0xf]
        %v3034 = vld [vmem:[%s22 + $0xc] sm:$0xf]
        %v3035 = vld [vmem:[%s22 + $0x10] sm:$0xf]
        %v3036 = vld [vmem:[%s22 + $0x14] sm:$0xf]
        %v3037 = vld [vmem:[%s22 + $0x18] sm:$0xf]
        %v3038 = vld [vmem:[%s22 + $0x1c] sm:$0xf]
        %v3039 = vld [vmem:[%s22 + $0x20] sm:$0xf]
        %v3040 = vld [vmem:[%s22 + $0x24] sm:$0xf]
        %v3041 = vld [vmem:[%s22 + $0x28] sm:$0xf]
        %v3042 = vld [vmem:[%s22 + $0x2c] sm:$0xf]
        %v3043 = vld [vmem:[%s22 + $0x30] sm:$0xf]
        %v3044 = vld [vmem:[%s22 + $0x34] sm:$0xf]
        %v3045 = vld [vmem:[%s22 + $0x38] sm:$0xf]
        %v3046 = vld [vmem:[%s22 + $0x3c] sm:$0xf]
        %v3047 = vld [vmem:[%s23] sm:$0x1]
        %vm3048 = vcmask 15360
        %v3050 = vsel %vm3048, %v3029, 0
        %vm3052 = vcmask 1040384
        %v3054 = vsel %vm3052, %v3028, 0
        %3056 = vmatprep.subr.bf16.mxu0 0
        %3057 = vmatpush1.bf16.msra.mxu0 %v3054
        %3058 = vmatprep.subr.bf16.mxu0 0
        %3059 = vmatpush1.bf16.msra.mxu0 0
        %3060 = vmatprep.subr.bf16.mxu0 0
        %3061 = vmatpush1.bf16.msra.mxu0 0
        %3062 = vmatprep.subr.bf16.mxu0 0
        %3063 = vmatpush1.bf16.msra.mxu0 0
        %3064 = vmatprep.subr.bf16.mxu0 0
        %3065 = vmatpush1.bf16.msra.mxu0 0
        %3066 = vmatprep.subr.bf16.mxu0 0
        %3067 = vmatpush1.bf16.msra.mxu0 0
        %3068 = vmatprep.subr.bf16.mxu0 0
        %3069 = vmatpush1.bf16.msra.mxu0 0
        %3070 = vmatprep.subr.bf16.mxu0 0
        %3071 = vmatpush1.bf16.msra.mxu0 0
        %3072 = vmatprep.subr.bf16.mxu0 0
        %3073 = vmatpush1.bf16.msra.mxu0 0
        %3074 = vmatprep.subr.bf16.mxu0 0
        %3075 = vmatpush1.bf16.msra.mxu0 0
        %3076 = vmatprep.subr.bf16.mxu0 0
        %3077 = vmatpush1.bf16.msra.mxu0 0
        %3078 = vmatprep.subr.bf16.mxu0 0
        %3079 = vmatpush1.bf16.msra.mxu0 0
        %3080 = vmatprep.subr.bf16.mxu0 0
        %3081 = vmatpush1.bf16.msra.mxu0 0
        %3082 = vmatprep.subr.bf16.mxu0 0
        %3083 = vmatpush1.bf16.msra.mxu0 0
        %3084 = vmatprep.subr.bf16.mxu0 0
        %3085 = vmatpush1.bf16.msra.mxu0 0
        %3086 = vmatprep.subr.bf16.mxu0 0
        %3087 = vmatpush1.bf16.msra.mxu0 0
        %3088 = vmatprep.mubr.bf16.mxu0 0
        %3089 = vmatmul.mubr.bf16.gmra.mrb[0].mxu0 %v3050
        %v3090 = vpop.f32.mrb[0].mxu0
        %v3091 = vadd.f32 0.0, %v3090
        %v3092 = vpop.f32.mrb[0].mxu0
        %v3093 = vpop.f32.mrb[0].mxu0
        %v3094 = vpop.f32.mrb[0].mxu0
        %3095 = vdwg.mxu0
        %v3096 = vpack.c.bf16 %v3091, %v3091
        %v3098 = vsel %vm3048, %v3030, 0
        %3100 = vmatprep.subr.bf16.mxu0 0
        %3101 = vmatpush1.bf16.msra.mxu0 %v3054
        %3102 = vmatprep.subr.bf16.mxu0 0
        %3103 = vmatpush1.bf16.msra.mxu0 0
        %3104 = vmatprep.subr.bf16.mxu0 0
        %3105 = vmatpush1.bf16.msra.mxu0 0
        %3106 = vmatprep.subr.bf16.mxu0 0
        %3107 = vmatpush1.bf16.msra.mxu0 0
        %3108 = vmatprep.subr.bf16.mxu0 0
        %3109 = vmatpush1.bf16.msra.mxu0 0
        %3110 = vmatprep.subr.bf16.mxu0 0
        %3111 = vmatpush1.bf16.msra.mxu0 0
        %3112 = vmatprep.subr.bf16.mxu0 0
        %3113 = vmatpush1.bf16.msra.mxu0 0
        %3114 = vmatprep.subr.bf16.mxu0 0
        %3115 = vmatpush1.bf16.msra.mxu0 0
        %3116 = vmatprep.subr.bf16.mxu0 0
        %3117 = vmatpush1.bf16.msra.mxu0 0
        %3118 = vmatprep.subr.bf16.mxu0 0
        %3119 = vmatpush1.bf16.msra.mxu0 0
        %3120 = vmatprep.subr.bf16.mxu0 0
        %3121 = vmatpush1.bf16.msra.mxu0 0
        %3122 = vmatprep.subr.bf16.mxu0 0
        %3123 = vmatpush1.bf16.msra.mxu0 0
        %3124 = vmatprep.subr.bf16.mxu0 0
        %3125 = vmatpush1.bf16.msra.mxu0 0
        %3126 = vmatprep.subr.bf16.mxu0 0
        %3127 = vmatpush1.bf16.msra.mxu0 0
        %3128 = vmatprep.subr.bf16.mxu0 0
        %3129 = vmatpush1.bf16.msra.mxu0 0
        %3130 = vmatprep.subr.bf16.mxu0 0
        %3131 = vmatpush1.bf16.msra.mxu0 0
        %3132 = vmatprep.mubr.bf16.mxu0 0
        %3133 = vmatmul.mubr.bf16.gmra.mrb[0].mxu0 %v3098
        %v3134 = vpop.f32.mrb[0].mxu0
        %v3135 = vadd.f32 0.0, %v3134
        %v3136 = vpop.f32.mrb[0].mxu0
        %v3137 = vpop.f32.mrb[0].mxu0
        %v3138 = vpop.f32.mrb[0].mxu0
        %3139 = vdwg.mxu0
        %v3140 = vpack.c.bf16 %v3135, %v3135
        %v3145 = vunpack.c.l.b16 %v3035
        %v3146 = vunpack.c.l.b16 %v3036
        %v3147 = vunpack.c.l.b16 %v3037
        %v3148 = vunpack.c.l.b16 %v3038
        %v3149 = vpack.c.b16 %v3146, %v3145
        %v3150 = vpack.c.b16 %v3148, %v3147
        %v3154 = vsel %vm2440, %v3140, 0
        %3156 = vmatprep.subr.bf16.mxu0 0
        %3157 = vmatpush1.bf16.msra.mxu0 %v3149
        %3158 = vmatprep.subr.bf16.mxu0 0
        %3159 = vmatpush1.bf16.msra.mxu0 %v3150
        %3160 = vmatprep.subr.bf16.mxu0 0
        %3161 = vmatpush1.bf16.msra.mxu0 0
        %3162 = vmatprep.subr.bf16.mxu0 0
        %3163 = vmatpush1.bf16.msra.mxu0 0
        %3164 = vmatprep.subr.bf16.mxu0 0
        %3165 = vmatpush1.bf16.msra.mxu0 0
        %3166 = vmatprep.subr.bf16.mxu0 0
        %3167 = vmatpush1.bf16.msra.mxu0 0
        %3168 = vmatprep.subr.bf16.mxu0 0
        %3169 = vmatpush1.bf16.msra.mxu0 0
        %3170 = vmatprep.subr.bf16.mxu0 0
        %3171 = vmatpush1.bf16.msra.mxu0 0
        %3172 = vmatprep.subr.bf16.mxu0 0
        %3173 = vmatpush1.bf16.msra.mxu0 0
        %3174 = vmatprep.subr.bf16.mxu0 0
        %3175 = vmatpush1.bf16.msra.mxu0 0
        %3176 = vmatprep.subr.bf16.mxu0 0
        %3177 = vmatpush1.bf16.msra.mxu0 0
        %3178 = vmatprep.subr.bf16.mxu0 0
        %3179 = vmatpush1.bf16.msra.mxu0 0
        %3180 = vmatprep.subr.bf16.mxu0 0
        %3181 = vmatpush1.bf16.msra.mxu0 0
        %3182 = vmatprep.subr.bf16.mxu0 0
        %3183 = vmatpush1.bf16.msra.mxu0 0
        %3184 = vmatprep.subr.bf16.mxu0 0
        %3185 = vmatpush1.bf16.msra.mxu0 0
        %3186 = vmatprep.subr.bf16.mxu0 0
        %3187 = vmatpush1.bf16.msra.mxu0 0
        %3188 = vmatprep.mubr.bf16.mxu0 0
        %3189 = vmatmul.mubr.bf16.gmra.mrb[0].mxu0 %v3154
        %v3190 = vpop.f32.mrb[0].mxu0
        %v3191 = vadd.f32 0.0, %v3190
        %v3192 = vpop.f32.mrb[0].mxu0
        %v3193 = vpop.f32.mrb[0].mxu0
        %v3194 = vpop.f32.mrb[0].mxu0
        %3195 = vdwg.mxu0
        %v3200 = vunpack.c.l.b16 %v3031
        %v3201 = vunpack.c.l.b16 %v3032
        %v3202 = vunpack.c.l.b16 %v3033
        %v3203 = vunpack.c.l.b16 %v3034
        %v3204 = vpack.c.b16 %v3201, %v3200
        %v3205 = vpack.c.b16 %v3203, %v3202
        %v3209 = vsel %vm2440, %v3096, 0
        %3211 = vmatprep.subr.bf16.mxu0 0
        %3212 = vmatpush1.bf16.msra.mxu0 %v3204
        %3213 = vmatprep.subr.bf16.mxu0 0
        %3214 = vmatpush1.bf16.msra.mxu0 %v3205
        %3215 = vmatprep.subr.bf16.mxu0 0
        %3216 = vmatpush1.bf16.msra.mxu0 0
        %3217 = vmatprep.subr.bf16.mxu0 0
        %3218 = vmatpush1.bf16.msra.mxu0 0
        %3219 = vmatprep.subr.bf16.mxu0 0
        %3220 = vmatpush1.bf16.msra.mxu0 0
        %3221 = vmatprep.subr.bf16.mxu0 0
        %3222 = vmatpush1.bf16.msra.mxu0 0
        %3223 = vmatprep.subr.bf16.mxu0 0
        %3224 = vmatpush1.bf16.msra.mxu0 0
        %3225 = vmatprep.subr.bf16.mxu0 0
        %3226 = vmatpush1.bf16.msra.mxu0 0
        %3227 = vmatprep.subr.bf16.mxu0 0
        %3228 = vmatpush1.bf16.msra.mxu0 0
        %3229 = vmatprep.subr.bf16.mxu0 0
        %3230 = vmatpush1.bf16.msra.mxu0 0
        %3231 = vmatprep.subr.bf16.mxu0 0
        %3232 = vmatpush1.bf16.msra.mxu0 0
        %3233 = vmatprep.subr.bf16.mxu0 0
        %3234 = vmatpush1.bf16.msra.mxu0 0
        %3235 = vmatprep.subr.bf16.mxu0 0
        %3236 = vmatpush1.bf16.msra.mxu0 0
        %3237 = vmatprep.subr.bf16.mxu0 0
        %3238 = vmatpush1.bf16.msra.mxu0 0
        %3239 = vmatprep.subr.bf16.mxu0 0
        %3240 = vmatpush1.bf16.msra.mxu0 0
        %3241 = vmatprep.subr.bf16.mxu0 0
        %3242 = vmatpush1.bf16.msra.mxu0 0
        %3243 = vmatprep.mubr.bf16.mxu0 0
        %3244 = vmatmul.mubr.bf16.gmra.mrb[0].mxu0 %v3209
        %v3245 = vpop.f32.mrb[0].mxu0
        %v3246 = vadd.f32 %v3191, %v3245
        %v3247 = vpop.f32.mrb[0].mxu0
        %v3248 = vpop.f32.mrb[0].mxu0
        %v3249 = vpop.f32.mrb[0].mxu0
        %3250 = vdwg.mxu0
        %v3251 = vshrl.u32 %v3096, 16
        %v3257 = vunpack.c.l.b16 %v3039
        %v3258 = vunpack.c.l.b16 %v3040
        %v3259 = vunpack.c.l.b16 %v3041
        %v3260 = vunpack.c.l.b16 %v3042
        %v3261 = vpack.c.b16 %v3258, %v3257
        %v3262 = vpack.c.b16 %v3260, %v3259
        %v3266 = vsel %vm2440, %v3251, 0
        %3268 = vmatprep.subr.bf16.mxu0 0
        %3269 = vmatpush1.bf16.msra.mxu0 %v3261
        %3270 = vmatprep.subr.bf16.mxu0 0
        %3271 = vmatpush1.bf16.msra.mxu0 %v3262
        %3272 = vmatprep.subr.bf16.mxu0 0
        %3273 = vmatpush1.bf16.msra.mxu0 0
        %3274 = vmatprep.subr.bf16.mxu0 0
        %3275 = vmatpush1.bf16.msra.mxu0 0
        %3276 = vmatprep.subr.bf16.mxu0 0
        %3277 = vmatpush1.bf16.msra.mxu0 0
        %3278 = vmatprep.subr.bf16.mxu0 0
        %3279 = vmatpush1.bf16.msra.mxu0 0
        %3280 = vmatprep.subr.bf16.mxu0 0
        %3281 = vmatpush1.bf16.msra.mxu0 0
        %3282 = vmatprep.subr.bf16.mxu0 0
        %3283 = vmatpush1.bf16.msra.mxu0 0
        %3284 = vmatprep.subr.bf16.mxu0 0
        %3285 = vmatpush1.bf16.msra.mxu0 0
        %3286 = vmatprep.subr.bf16.mxu0 0
        %3287 = vmatpush1.bf16.msra.mxu0 0
        %3288 = vmatprep.subr.bf16.mxu0 0
        %3289 = vmatpush1.bf16.msra.mxu0 0
        %3290 = vmatprep.subr.bf16.mxu0 0
        %3291 = vmatpush1.bf16.msra.mxu0 0
        %3292 = vmatprep.subr.bf16.mxu0 0
        %3293 = vmatpush1.bf16.msra.mxu0 0
        %3294 = vmatprep.subr.bf16.mxu0 0
        %3295 = vmatpush1.bf16.msra.mxu0 0
        %3296 = vmatprep.subr.bf16.mxu0 0
        %3297 = vmatpush1.bf16.msra.mxu0 0
        %3298 = vmatprep.subr.bf16.mxu0 0
        %3299 = vmatpush1.bf16.msra.mxu0 0
        %3300 = vmatprep.mubr.bf16.mxu0 0
        %3301 = vmatmul.mubr.bf16.gmra.mrb[0].mxu0 %v3266
        %v3302 = vpop.f32.mrb[0].mxu0
        %v3303 = vadd.f32 0.0, %v3302
        %v3304 = vpop.f32.mrb[0].mxu0
        %v3305 = vpop.f32.mrb[0].mxu0
        %v3306 = vpop.f32.mrb[0].mxu0
        %3307 = vdwg.mxu0
        %v3308 = vadd.f32 %v3246, %v3303
        %v3309 = vshrl.u32 %v3140, 16
        %v3315 = vunpack.c.l.b16 %v3043
        %v3316 = vunpack.c.l.b16 %v3044
        %v3317 = vunpack.c.l.b16 %v3045
        %v3318 = vunpack.c.l.b16 %v3046
        %v3319 = vpack.c.b16 %v3316, %v3315
        %v3320 = vpack.c.b16 %v3318, %v3317
        %v3324 = vsel %vm2440, %v3309, 0
        %3326 = vmatprep.subr.bf16.mxu0 0
        %3327 = vmatpush1.bf16.msra.mxu0 %v3319
        %3328 = vmatprep.subr.bf16.mxu0 0
        %3329 = vmatpush1.bf16.msra.mxu0 %v3320
        %3330 = vmatprep.subr.bf16.mxu0 0
        %3331 = vmatpush1.bf16.msra.mxu0 0
        %3332 = vmatprep.subr.bf16.mxu0 0
        %3333 = vmatpush1.bf16.msra.mxu0 0
        %3334 = vmatprep.subr.bf16.mxu0 0
        %3335 = vmatpush1.bf16.msra.mxu0 0
        %3336 = vmatprep.subr.bf16.mxu0 0
        %3337 = vmatpush1.bf16.msra.mxu0 0
        %3338 = vmatprep.subr.bf16.mxu0 0
        %3339 = vmatpush1.bf16.msra.mxu0 0
        %3340 = vmatprep.subr.bf16.mxu0 0
        %3341 = vmatpush1.bf16.msra.mxu0 0
        %3342 = vmatprep.subr.bf16.mxu0 0
        %3343 = vmatpush1.bf16.msra.mxu0 0
        %3344 = vmatprep.subr.bf16.mxu0 0
        %3345 = vmatpush1.bf16.msra.mxu0 0
        %3346 = vmatprep.subr.bf16.mxu0 0
        %3347 = vmatpush1.bf16.msra.mxu0 0
        %3348 = vmatprep.subr.bf16.mxu0 0
        %3349 = vmatpush1.bf16.msra.mxu0 0
        %3350 = vmatprep.subr.bf16.mxu0 0
        %3351 = vmatpush1.bf16.msra.mxu0 0
        %3352 = vmatprep.subr.bf16.mxu0 0
        %3353 = vmatpush1.bf16.msra.mxu0 0
        %3354 = vmatprep.subr.bf16.mxu0 0
        %3355 = vmatpush1.bf16.msra.mxu0 0
        %3356 = vmatprep.subr.bf16.mxu0 0
        %3357 = vmatpush1.bf16.msra.mxu0 0
        %3358 = vmatprep.mubr.bf16.mxu0 0
        %3359 = vmatmul.mubr.bf16.gmra.mrb[0].mxu0 %v3324
        %v3360 = vpop.f32.mrb[0].mxu0
        %v3361 = vadd.f32 0.0, %v3360
        %v3362 = vpop.f32.mrb[0].mxu0
        %v3363 = vpop.f32.mrb[0].mxu0
        %v3364 = vpop.f32.mrb[0].mxu0
        %3365 = vdwg.mxu0
        %v3366 = vadd.f32 %v3308, %v3361
        %v3367 = vadd.f32 %v3366, %v3047
        %vm3368 = vcmp.ge.f32.partialorder %v3367, 0.0
        %v3369 = vmul.f32 %v3367, 0.2
        %v3370 = vsel %vm3368, %v3367, %v3369
        %v3371 = vpack.c.bf16 %v3370, %v3370
        %v3372 = vld [vmem:[%s24] sm:$0xf]
        %v3373 = vld [vmem:[%s24 + $0x4] sm:$0xf]
        %v3374 = vld [vmem:[%s24 + $0x8] sm:$0xf]
        %v3375 = vld [vmem:[%s24 + $0xc] sm:$0xf]
        %v3376 = vld [vmem:[#allocation2] sm:$0x1]
        %v3381 = vunpack.c.l.b16 %v3372
        %v3382 = vunpack.c.l.b16 %v3373
        %v3383 = vunpack.c.l.b16 %v3374
        %v3384 = vunpack.c.l.b16 %v3375
        %v3385 = vpack.c.b16 %v3382, %v3381
        %v3386 = vpack.c.b16 %v3384, %v3383
        %v3390 = vsel %vm2440, %v3371, 0
        %3392 = vmatprep.subr.bf16.mxu0 0
        %3393 = vmatpush1.bf16.msra.mxu0 %v3385
        %3394 = vmatprep.subr.bf16.mxu0 0
        %3395 = vmatpush1.bf16.msra.mxu0 %v3386
        %3396 = vmatprep.subr.bf16.mxu0 0
        %3397 = vmatpush1.bf16.msra.mxu0 0
        %3398 = vmatprep.subr.bf16.mxu0 0
        %3399 = vmatpush1.bf16.msra.mxu0 0
        %3400 = vmatprep.subr.bf16.mxu0 0
        %3401 = vmatpush1.bf16.msra.mxu0 0
        %3402 = vmatprep.subr.bf16.mxu0 0
        %3403 = vmatpush1.bf16.msra.mxu0 0
        %3404 = vmatprep.subr.bf16.mxu0 0
        %3405 = vmatpush1.bf16.msra.mxu0 0
        %3406 = vmatprep.subr.bf16.mxu0 0
        %3407 = vmatpush1.bf16.msra.mxu0 0
        %3408 = vmatprep.subr.bf16.mxu0 0
        %3409 = vmatpush1.bf16.msra.mxu0 0
        %3410 = vmatprep.subr.bf16.mxu0 0
        %3411 = vmatpush1.bf16.msra.mxu0 0
        %3412 = vmatprep.subr.bf16.mxu0 0
        %3413 = vmatpush1.bf16.msra.mxu0 0
        %3414 = vmatprep.subr.bf16.mxu0 0
        %3415 = vmatpush1.bf16.msra.mxu0 0
        %3416 = vmatprep.subr.bf16.mxu0 0
        %3417 = vmatpush1.bf16.msra.mxu0 0
        %3418 = vmatprep.subr.bf16.mxu0 0
        %3419 = vmatpush1.bf16.msra.mxu0 0
        %3420 = vmatprep.subr.bf16.mxu0 0
        %3421 = vmatpush1.bf16.msra.mxu0 0
        %3422 = vmatprep.subr.bf16.mxu0 0
        %3423 = vmatpush1.bf16.msra.mxu0 0
        %3424 = vmatprep.mubr.bf16.mxu0 0
        %3425 = vmatmul.mubr.bf16.gmra.mrb[0].mxu0 %v3390
        %v3426 = vpop.f32.mrb[0].mxu0
        %v3427 = vadd.f32 %v3376, %v3426
        %v3428 = vpop.f32.mrb[0].mxu0
        %v3429 = vpop.f32.mrb[0].mxu0
        %v3430 = vpop.f32.mrb[0].mxu0
        %3431 = vdwg.mxu0
        %vm3432 = vcmask 0
        %3433 = vst.msk [vmem:[%s827] sm:$0x1] %vm3432, %v3427
        %s3434 = sand.u32 %s603, 1
        %s3435 = scalar_lea.sflag [#allocation4], %s3434
        %s3436 = sand.u32 %s603, 1
        %s3437 = smul.addr %s3436, 2
        %s3438 = scalar_lea.vmem [#allocation3], %s3437
        %p3439 = scmp.lt.s32.totalorder %s44, 1
        %s3440 = scalar_select %p3439, %s44, 1
        %s3441 = scalar_lea.vmem %s27, %s3440
        // Predicated region
        $region125: #{multiscale_discriminator_forward.1} parent=123 // pred_check
          %p3442 = pneg %p613
        $region126: #{multiscale_discriminator_forward.1} parent=123 // pred_check_branch
          %3444 = sbr.rel (%p3442) target = $region128
        $region127: #{multiscale_discriminator_forward.1} parent=123 // pred_region
          %s3446 = ssub.s32 32, 32
          %3447 = vsyncadd %s3435, %s3446
          %s3448 = smul.addr %s44, 32
          %s3449 = scalar_lea.hbm %s26, %s3448
          %s3451 = sshll.u32 %s3438, 4
          %s3452 = int_to_ptr.vmem [resolvable:$true] %s3451
          %3454 = dma.vmem_to_hbm [thread:$0]  %s3452, 32, %s3449, %s3435
        $region128: #{multiscale_discriminator_forward.1} parent=123 // pred_fallthru
          _
        // Predicated region
        $region129: #{multiscale_discriminator_forward.1} parent=123 // pred_check
          %p3455 = pneg %p639
        $region130: #{multiscale_discriminator_forward.1} parent=123 // pred_check_branch
          %3457 = sbr.rel (%p3455) target = $region132
        $region131: #{multiscale_discriminator_forward.1} parent=123 // pred_region
          _
        $region132: #{multiscale_discriminator_forward.1} parent=123 // pred_fallthru
          _
      $region124: #{multiscale_discriminator_forward.1} parent=5 // pred_fallthru
        _
      %p3458 = scmp.le.s32.totalorder 2, %s39
      // Predicated region
      $region133: #{multiscale_discriminator_forward.1} parent=5 // pred_check
        %p3459 = pneg %p3458
      $region134: #{multiscale_discriminator_forward.1} parent=5 // pred_check_branch
        %3461 = sbr.rel (%p3459) target = $region136
      $region135: #{multiscale_discriminator_forward.1} parent=5 // pred_region
        %s3462 = ssub.s32 %s39, 2
        // Predicated region
        $region137: #{multiscale_discriminator_forward.1} parent=135 // pred_check
          %p3463 = pneg %p619
        $region138: #{multiscale_discriminator_forward.1} parent=135 // pred_check_branch
          %3465 = sbr.rel (%p3463) target = $region140
        $region139: #{multiscale_discriminator_forward.1} parent=135 // pred_region
          %s3466 = sand.u32 %s604, 1
          %s3467 = scalar_lea.sflag [#allocation4], %s3466
          %s3468 = sand.u32 %s604, 1
          %s3469 = smul.addr %s3468, 2
          %s3470 = scalar_lea.vmem [#allocation3], %s3469
          %3471 = dma.done %s3467, 32
        $region140: #{multiscale_discriminator_forward.1} parent=135 // pred_fallthru
          _
        // Predicated region
        $region141: #{multiscale_discriminator_forward.1} parent=135 // pred_check
          %p3472 = pneg %p645
        $region142: #{multiscale_discriminator_forward.1} parent=135 // pred_check_branch
          %3474 = sbr.rel (%p3472) target = $region144
        $region143: #{multiscale_discriminator_forward.1} parent=135 // pred_region
          %p3475 = scmp.lt.s32.totalorder %s45, 1
          %s3476 = scalar_select %p3475, %s45, 1
          %s3477 = scalar_lea.vmem %s27, %s3476
        $region144: #{multiscale_discriminator_forward.1} parent=135 // pred_fallthru
          _
      $region136: #{multiscale_discriminator_forward.1} parent=5 // pred_fallthru
        _
    $region6: #{multiscale_discriminator_forward.1} parent=1 // loop_footer
      %s43 = sadd.s32 1, %s39
    $region7: #{multiscale_discriminator_forward.1} parent=1 // loop_footer_branch
      %38 = sbr.rel target = $region3
    $region8: #{multiscale_discriminator_forward.1} parent=1 // loop_exit
      _
    %3478 = vsyncpa [#allocation4], 1
    %s3479 = scalar_lea.sflag [#allocation4], 1
    %3480 = vsyncpa %s3479, 1

</llo_original>
